<compile_context>
chip_gen: v7x
topology: tpu7x:2x2x1
jax: 0.10.0
libtpu: 0.0.40
codegen_flags: <defaults>
</compile_context>

<pallas_src>
import functools

import jax
import jax.numpy as jnp
from jax.experimental import pallas as pl
from jax.experimental.pallas import tpu as pltpu

F32 = jnp.float32
_NEG_BIG = -0.7 * float(jnp.finfo(jnp.float32).max)  # mask value for padded keys


def _round_up(n, m):
    return ((n + m - 1) // m) * m


# ---------------------------------------------------------------------------
# Kernel 1: fused Q/K/V 1x1-conv projections (one pass over x).
#   Q and K share a single (C, 2*C8) matmul (halves the lane-sparse pushes).
# ---------------------------------------------------------------------------

def _qkv_projection_kernel(x_ref, wqk_ref, wv_ref, bqk_ref, bv_ref,
                           q_ref, k_ref, v_ref, *, c8):
    cdt = q_ref.dtype
    xt = x_ref[0].astype(cdt)                                          # (TP, C)
    qk = (jnp.dot(xt, wqk_ref[...], preferred_element_type=jnp.float32)
          + bqk_ref[...])                                              # (TP, 2*C8)
    q_ref[0] = qk[:, :c8].astype(cdt)
    k_ref[0] = qk[:, c8:].astype(cdt)
    v_ref[0] = (jnp.dot(xt, wv_ref[...], preferred_element_type=jnp.float32)
                + bv_ref[...]).astype(cdt)


# ---------------------------------------------------------------------------
# Kernel 2: flash-style attention over precomputed Q/K/V + residual add.
#   Grid = (B, HW_pad/TQ, HW_pad/TK); axis 2 (KV tiles) is the reduction axis.
# ---------------------------------------------------------------------------

def _flash_attention_kernel(x_ref, q_ref, k_ref, v_ref, o_ref,
                            m_scr, l_scr, acc_scr, *,
                            hw, tk, need_mask, exp_dtype, approx_recip):
    ki = pl.program_id(2)
    cdt = q_ref.dtype

    @pl.when(ki == 0)
    def _init():
        m_scr[...] = jnp.full_like(m_scr, -jnp.inf)
        l_scr[...] = jnp.zeros_like(l_scr)
        acc_scr[...] = jnp.zeros_like(acc_scr)

    q = q_ref[0]                                                       # (TQ, C8)
    k = k_ref[0]                                                       # (TK, C8)
    v = v_ref[0]                                                       # (TK, C)

    # energy[i, j] = <q_i, k_j>  (the PyTorch module applies no scaling)
    s = jax.lax.dot_general(q, k, (((1,), (1,)), ((), ())),
                            preferred_element_type=jnp.float32)        # (TQ, TK)
    if need_mask:                                                      # padded keys
        col = jax.lax.broadcasted_iota(jnp.int32, s.shape, 1) + ki * tk
        s = jnp.where(col < hw, s, _NEG_BIG)

    m_prev = m_scr[...]
    m_new = jnp.maximum(m_prev, jnp.max(s, axis=-1, keepdims=True))
    alpha = jnp.exp(m_prev - m_new)                                    # (TQ, 1) f32
    # exp in exp_dtype (bf16 on v6e/v7x -> 2x EUP throughput); accumulation f32.
    p = jnp.exp((s - m_new).astype(exp_dtype))                         # (TQ, TK)
    l_scr[...] = alpha * l_scr[...] + jnp.sum(p.astype(jnp.float32),
                                              axis=-1, keepdims=True)
    acc_scr[...] = alpha * acc_scr[...] + jnp.dot(
        p.astype(cdt), v, preferred_element_type=jnp.float32)
    m_scr[...] = m_new

    @pl.when(ki == pl.num_programs(2) - 1)
    def _finalize():
        inv_l = pl.reciprocal(l_scr[...], approx=approx_recip)         # EUP slot
        out = acc_scr[...] * inv_l + x_ref[0].astype(jnp.float32)      # residual (orig dtype x)
        o_ref[0] = out.astype(o_ref.dtype)


# ---------------------------------------------------------------------------
# Wrapper
# ---------------------------------------------------------------------------

def attention_module_forward(x_nchw, params, *, tq=128, tk=512,
                             compute_dtype=jnp.bfloat16, exp_dtype=None,
                             out_dtype=None, approx_recip=True):
    """Fused AttentionModule forward.  On v5e pass exp_dtype=jnp.float32."""
    b, c, h, w = x_nchw.shape
    hw = h * w
    c8 = params["wq"].shape[1]
    assert params["wq"].shape == (c, c8) and params["wk"].shape == (c, c8)
    assert params["wv"].shape == (c, c)

    out_dtype = x_nchw.dtype if out_dtype is None else out_dtype
    exp_dtype = compute_dtype if exp_dtype is None else exp_dtype
    cd_size = jnp.dtype(compute_dtype).itemsize

    # --- lane-dense tiling: tk multiple of 128 (>=256 fills v6e/v7x MXU),
    #     tq multiple of 16; pad HW if it is not a multiple of tk. ----------
    tk = max(128, min(tk, _round_up(hw, 128)))
    tk = _round_up(tk, 128)
    tq = max(16, min(tq, tk))
    tq = _round_up(tq, 16)
    if tk % tq != 0:
        tq = 128 if tk % 128 == 0 else tk
    hw_pad = _round_up(hw, tk)            # tq | tk | hw_pad
    need_mask = hw_pad != hw

    # channels-last, pixel-major layout: lane axis = channels.
    xf = x_nchw.transpose(0, 2, 3, 1).reshape(b, hw, c)
    if need_mask:
        xf = jnp.pad(xf, ((0, 0), (0, hw_pad - hw), (0, 0)))

    # Fused Q|K projection weight + V weight.
    wqk = jnp.concatenate([params["wq"], params["wk"]], axis=1).astype(compute_dtype)
    wv = params["wv"].astype(compute_dtype)
    bqk = jnp.concatenate([params["bq"], params["bk"]]).reshape(1, 2 * c8).astype(F32)
    bv = params["bv"].reshape(1, c).astype(F32)

    # ---------------- pre-pass: project Q, K, V once per batch ------------
    tp = tk
    proj_cost = pl.CostEstimate(
        flops=2 * b * hw_pad * c * (2 * c8 + c),
        transcendentals=0,
        bytes_accessed=int(b * hw_pad * c * xf.dtype.itemsize
                           + b * hw_pad * (2 * c8 + c) * cd_size
                           + c * (2 * c8 + c) * cd_size),
    )
    q_all, k_all, v_all = pl.pallas_call(
        functools.partial(_qkv_projection_kernel, c8=c8),
        out_shape=(
            jax.ShapeDtypeStruct((b, hw_pad, c8), compute_dtype),
            jax.ShapeDtypeStruct((b, hw_pad, c8), compute_dtype),
            jax.ShapeDtypeStruct((b, hw_pad, c), compute_dtype),
        ),
        grid_spec=pltpu.PrefetchScalarGridSpec(
            num_scalar_prefetch=0,
            grid=(b, hw_pad // tp),
            in_specs=[
                pl.BlockSpec((1, tp, c), lambda bi, pi: (bi, pi, 0)),       # x
                pl.BlockSpec((c, 2 * c8), lambda bi, pi: (0, 0)),           # [Wq|Wk]
                pl.BlockSpec((c, c), lambda bi, pi: (0, 0)),                # Wv
                pl.BlockSpec((1, 2 * c8), lambda bi, pi: (0, 0)),           # [bq|bk]
                pl.BlockSpec((1, c), lambda bi, pi: (0, 0)),                # bv
            ],
            out_specs=(
                pl.BlockSpec((1, tp, c8), lambda bi, pi: (bi, pi, 0)),      # Q
                pl.BlockSpec((1, tp, c8), lambda bi, pi: (bi, pi, 0)),      # K
                pl.BlockSpec((1, tp, c), lambda bi, pi: (bi, pi, 0)),       # V
            ),
        ),
        compiler_params=pltpu.CompilerParams(
            dimension_semantics=("parallel", "parallel")),
        cost_estimate=proj_cost,
    )(xf, wqk, wv, bqk, bv)

    # ---------------- main pass: flash attention + residual ---------------
    nq = hw_pad // tq
    nk = hw_pad // tk
    attn_cost = pl.CostEstimate(
        flops=2 * b * hw_pad * hw_pad * (c8 + c),
        transcendentals=b * hw_pad * hw_pad,
        bytes_accessed=int(b * hw_pad * c * xf.dtype.itemsize
                           + b * hw_pad * c8 * cd_size
                           + b * nq * hw_pad * (c8 + c) * cd_size
                           + b * hw_pad * c * jnp.dtype(out_dtype).itemsize),
    )
    out_flat = pl.pallas_call(
        functools.partial(_flash_attention_kernel, hw=hw, tk=tk,
                          need_mask=need_mask, exp_dtype=exp_dtype,
                          approx_recip=approx_recip),
        out_shape=jax.ShapeDtypeStruct((b, hw_pad, c), out_dtype),
        grid_spec=pltpu.PrefetchScalarGridSpec(
            num_scalar_prefetch=0,
            grid=(b, nq, nk),
            in_specs=[
                pl.BlockSpec((1, tq, c), lambda bi, qi, ki: (bi, qi, 0)),   # x (residual)
                pl.BlockSpec((1, tq, c8), lambda bi, qi, ki: (bi, qi, 0)),  # Q rows
                pl.BlockSpec((1, tk, c8), lambda bi, qi, ki: (bi, ki, 0)),  # K rows
                pl.BlockSpec((1, tk, c), lambda bi, qi, ki: (bi, ki, 0)),   # V rows
            ],
            out_specs=pl.BlockSpec((1, tq, c), lambda bi, qi, ki: (bi, qi, 0)),
            scratch_shapes=[
                pltpu.VMEM((tq, 1), F32),     # running max m
                pltpu.VMEM((tq, 1), F32),     # running denominator l
                pltpu.VMEM((tq, c), F32),     # output accumulator
            ],
        ),
        compiler_params=pltpu.CompilerParams(
            dimension_semantics=("parallel", "parallel", "arbitrary")),
        cost_estimate=attn_cost,
    )(xf, q_all, k_all, v_all)

    if need_mask:
        out_flat = out_flat[:, :hw, :]
    return out_flat.reshape(b, h, w, c).transpose(0, 3, 1, 2)


# ---------------------------------------------------------------------------
# Plain-JAX reference + synthetic parameters
# ---------------------------------------------------------------------------

def attention_module_ref(x_nchw, params):
    b, c, h, w = x_nchw.shape
    hw = h * w
    hp = jax.lax.Precision.HIGHEST
    xf = x_nchw.transpose(0, 2, 3, 1).reshape(b, hw, c)
    q = jnp.einsum("bic,cd->bid", xf, params["wq"], precision=hp) + params["bq"]
    k = jnp.einsum("bic,cd->bid", xf, params["wk"], precision=hp) + params["bk"]
    v = jnp.einsum("bic,cd->bid", xf, params["wv"], precision=hp) + params["bv"]
    energy = jnp.einsum("bid,bjd->bij", q, k, precision=hp)
    attn = jax.nn.softmax(energy, axis=-1)
    out = jnp.einsum("bij,bjc->bic", attn, v, precision=hp) + xf
    return out.reshape(b, h, w, c).transpose(0, 3, 1, 2)


def init_params(key, c):
    """Synthetic AttentionModule params in kernel layout (C_in, C_out).

    PyTorch conv weights (C_out, C_in, 1, 1) map to these via
    w.reshape(C_out, C_in).T (and biases unchanged).
    """
    c8 = c // 8
    k1, k2, k3, k4, k5, k6 = jax.random.split(key, 6)
    s = 0.05
    return {
        "wq": s * jax.random.normal(k1, (c, c8), F32),   # conv1
        "wk": s * jax.random.normal(k2, (c, c8), F32),   # conv2
        "wv": s * jax.random.normal(k3, (c, c), F32),    # conv3
        "bq": s * jax.random.normal(k4, (c8,), F32),
        "bk": s * jax.random.normal(k5, (c8,), F32),
        "bv": s * jax.random.normal(k6, (c,), F32),
    }


if __name__ == "__main__":
    B, C, H, W = 2, 128, 16, 16          # in_channels must be divisible by 8
    key = jax.random.PRNGKey(0)
    kx, kp = jax.random.split(key)
    x = jax.random.normal(kx, (B, C, H, W), F32)
    params = init_params(kp, C)

    ref = attention_module_ref(x, params)

    # 1) f32 MXU path: tight check of projection / online-softmax / tiling logic.
    fwd_f32 = jax.jit(functools.partial(attention_module_forward,
                                        compute_dtype=jnp.float32))
    out_f32 = fwd_f32(x, params)
    jax.block_until_ready(out_f32)
    assert out_f32.shape == (B, C, H, W)
    assert bool(jnp.all(jnp.isfinite(out_f32)))
    err32 = float(jnp.max(jnp.abs(out_f32 - ref)))
    assert err32 < 2e-2, f"f32 path max abs err {err32}"

    # 2) Default fast path: bf16 MXU operands + bf16 exp, f32 accumulation.
    fwd_bf16 = jax.jit(attention_module_forward)
    out_bf16 = fwd_bf16(x, params)
    jax.block_until_ready(out_bf16)
    assert out_bf16.shape == (B, C, H, W)
    assert bool(jnp.all(jnp.isfinite(out_bf16)))
    errbf = float(jnp.max(jnp.abs(out_bf16 - ref)))
    assert errbf < 0.25, f"bf16 path max abs err {errbf}"

    # 3) Odd spatial size: exercises HW padding + in-kernel key masking.
    B2, C2, H2, W2 = 1, 64, 10, 10
    x2 = jax.random.normal(jax.random.PRNGKey(1), (B2, C2, H2, W2), F32)
    params2 = init_params(jax.random.PRNGKey(2), C2)
    ref2 = attention_module_ref(x2, params2)
    out2 = jax.jit(functools.partial(attention_module_forward,
                                     compute_dtype=jnp.float32))(x2, params2)
    jax.block_until_ready(out2)
    assert out2.shape == (B2, C2, H2, W2)
    err2 = float(jnp.max(jnp.abs(out2 - ref2)))
    assert err2 < 2e-2, f"padded path max abs err {err2}"

    print("KERNEL_OK")
</pallas_src>

<mosaic_0001>
module attributes {stable_mosaic.version = 11 : i64} {
  func.func @_qkv_projection_kernel(%arg0: i32, %arg1: i32, %arg2: memref<1x256x128xf32, #tpu.memory_space<vmem>>, %arg3: memref<128x32xf32, #tpu.memory_space<vmem>>, %arg4: memref<128x128xf32, #tpu.memory_space<vmem>>, %arg5: memref<1x32xf32, #tpu.memory_space<vmem>>, %arg6: memref<1x128xf32, #tpu.memory_space<vmem>>, %arg7: memref<1x256x16xf32, #tpu.memory_space<vmem>>, %arg8: memref<1x256x16xf32, #tpu.memory_space<vmem>>, %arg9: memref<1x256x128xf32, #tpu.memory_space<vmem>>) attributes {dimension_semantics = [#tpu.dimension_semantics<parallel>, #tpu.dimension_semantics<parallel>], iteration_bounds = array<i64: 2, 1>, scalar_prefetch = 0 : i64, scratch_operands = 0 : i64, tpu.core_type = #tpu.core_type<tc>, window_params = [{transform_indices = @transform_0, window_bounds = array<i64: 1, 256, 128>}, {pipeline_mode = #tpu.pipeline_mode<synchronous>, transform_indices = @transform_1, window_bounds = array<i64: 128, 32>}, {pipeline_mode = #tpu.pipeline_mode<synchronous>, transform_indices = @transform_2, window_bounds = array<i64: 128, 128>}, {pipeline_mode = #tpu.pipeline_mode<synchronous>, transform_indices = @transform_3, window_bounds = array<i64: 1, 32>}, {pipeline_mode = #tpu.pipeline_mode<synchronous>, transform_indices = @transform_4, window_bounds = array<i64: 1, 128>}, {transform_indices = @transform_5, window_bounds = array<i64: 1, 256, 16>}, {transform_indices = @transform_6, window_bounds = array<i64: 1, 256, 16>}, {transform_indices = @transform_7, window_bounds = array<i64: 1, 256, 128>}]} {
    %c0 = arith.constant 0 : index
    %c0_0 = arith.constant 0 : index
    %c0_1 = arith.constant 0 : index
    %0 = vector.load %arg2[%c0, %c0_0, %c0_1] : memref<1x256x128xf32, #tpu.memory_space<vmem>>, vector<1x256x128xf32>
    %1 = vector.shape_cast %0 : vector<1x256x128xf32> to vector<256x128xf32>
    %c0_2 = arith.constant 0 : index
    %c0_3 = arith.constant 0 : index
    %2 = vector.load %arg3[%c0_2, %c0_3] : memref<128x32xf32, #tpu.memory_space<vmem>>, vector<128x32xf32>
    %cst = arith.constant dense<0.000000e+00> : vector<256x32xf32>
    %3 = tpu.matmul %1, %2, %cst {dimension_numbers = #tpu.dot_dimension_numbers<[1], [0], [0], [1], [0, 0, 1, 1], [], []>} : vector<256x128xf32>, vector<128x32xf32>, vector<256x32xf32> -> vector<256x32xf32>
    %c0_4 = arith.constant 0 : index
    %c0_5 = arith.constant 0 : index
    %4 = vector.load %arg5[%c0_4, %c0_5] : memref<1x32xf32, #tpu.memory_space<vmem>>, vector<1x32xf32>
    %5 = vector.broadcast %4 : vector<1x32xf32> to vector<256x32xf32>
    %6 = arith.addf %3, %5 : vector<256x32xf32>
    %7 = vector.extract_strided_slice %6 {offsets = [0, 0], sizes = [256, 16], strides = [1, 1]} : vector<256x32xf32> to vector<256x16xf32>
    %c0_6 = arith.constant 0 : index
    %c0_7 = arith.constant 0 : index
    %c0_8 = arith.constant 0 : index
    %8 = vector.load %arg7[%c0_6, %c0_7, %c0_8] : memref<1x256x16xf32, #tpu.memory_space<vmem>>, vector<1x256x16xf32>
    %9 = vector.shape_cast %8 : vector<1x256x16xf32> to vector<256x16xf32>
    %10 = vector.shape_cast %7 : vector<256x16xf32> to vector<1x256x16xf32>
    tpu.vector_store %arg7[%c0_6, %c0_7, %c0_8], %10 {strides = array<i32>} : memref<1x256x16xf32, #tpu.memory_space<vmem>>, vector<1x256x16xf32>,
    %11 = vector.extract_strided_slice %6 {offsets = [0, 16], sizes = [256, 16], strides = [1, 1]} : vector<256x32xf32> to vector<256x16xf32>
    %c0_9 = arith.constant 0 : index
    %c0_10 = arith.constant 0 : index
    %c0_11 = arith.constant 0 : index
    %12 = vector.load %arg8[%c0_9, %c0_10, %c0_11] : memref<1x256x16xf32, #tpu.memory_space<vmem>>, vector<1x256x16xf32>
    %13 = vector.shape_cast %12 : vector<1x256x16xf32> to vector<256x16xf32>
    %14 = vector.shape_cast %11 : vector<256x16xf32> to vector<1x256x16xf32>
    tpu.vector_store %arg8[%c0_9, %c0_10, %c0_11], %14 {strides = array<i32>} : memref<1x256x16xf32, #tpu.memory_space<vmem>>, vector<1x256x16xf32>,
    %c0_12 = arith.constant 0 : index
    %c0_13 = arith.constant 0 : index
    %15 = vector.load %arg4[%c0_12, %c0_13] : memref<128x128xf32, #tpu.memory_space<vmem>>, vector<128x128xf32>
    %cst_14 = arith.constant dense<0.000000e+00> : vector<256x128xf32>
    %16 = tpu.matmul %1, %15, %cst_14 {dimension_numbers = #tpu.dot_dimension_numbers<[1], [0], [0], [1], [0, 0, 1, 1], [], []>} : vector<256x128xf32>, vector<128x128xf32>, vector<256x128xf32> -> vector<256x128xf32>
    %c0_15 = arith.constant 0 : index
    %c0_16 = arith.constant 0 : index
    %17 = vector.load %arg6[%c0_15, %c0_16] : memref<1x128xf32, #tpu.memory_space<vmem>>, vector<1x128xf32>
    %18 = vector.broadcast %17 : vector<1x128xf32> to vector<256x128xf32>
    %19 = arith.addf %16, %18 : vector<256x128xf32>
    %c0_17 = arith.constant 0 : index
    %c0_18 = arith.constant 0 : index
    %c0_19 = arith.constant 0 : index
    %20 = vector.load %arg9[%c0_17, %c0_18, %c0_19] : memref<1x256x128xf32, #tpu.memory_space<vmem>>, vector<1x256x128xf32>
    %21 = vector.shape_cast %20 : vector<1x256x128xf32> to vector<256x128xf32>
    %22 = vector.shape_cast %19 : vector<256x128xf32> to vector<1x256x128xf32>
    tpu.vector_store %arg9[%c0_17, %c0_18, %c0_19], %22 {strides = array<i32>} : memref<1x256x128xf32, #tpu.memory_space<vmem>>, vector<1x256x128xf32>,
    return
  }
  func.func @transform_0(%arg0: i32, %arg1: i32) -> (i32, i32, i32) {
    %c0_i32 = arith.constant 0 : i32
    %c0_i32_0 = arith.constant 0 : i32
    return %arg0, %arg1, %c0_i32 : i32, i32, i32
  }
  func.func @transform_1(%arg0: i32, %arg1: i32) -> (i32, i32) {
    %c0_i32 = arith.constant 0 : i32
    %c0_i32_0 = arith.constant 0 : i32
    %c0_i32_1 = arith.constant 0 : i32
    return %c0_i32, %c0_i32_0 : i32, i32
  }
  func.func @transform_2(%arg0: i32, %arg1: i32) -> (i32, i32) {
    %c0_i32 = arith.constant 0 : i32
    %c0_i32_0 = arith.constant 0 : i32
    %c0_i32_1 = arith.constant 0 : i32
    return %c0_i32, %c0_i32_0 : i32, i32
  }
  func.func @transform_3(%arg0: i32, %arg1: i32) -> (i32, i32) {
    %c0_i32 = arith.constant 0 : i32
    %c0_i32_0 = arith.constant 0 : i32
    %c0_i32_1 = arith.constant 0 : i32
    return %c0_i32, %c0_i32_0 : i32, i32
  }
  func.func @transform_4(%arg0: i32, %arg1: i32) -> (i32, i32) {
    %c0_i32 = arith.constant 0 : i32
    %c0_i32_0 = arith.constant 0 : i32
    %c0_i32_1 = arith.constant 0 : i32
    return %c0_i32, %c0_i32_0 : i32, i32
  }
  func.func @transform_5(%arg0: i32, %arg1: i32) -> (i32, i32, i32) {
    %c0_i32 = arith.constant 0 : i32
    %c0_i32_0 = arith.constant 0 : i32
    return %arg0, %arg1, %c0_i32 : i32, i32, i32
  }
  func.func @transform_6(%arg0: i32, %arg1: i32) -> (i32, i32, i32) {
    %c0_i32 = arith.constant 0 : i32
    %c0_i32_0 = arith.constant 0 : i32
    return %arg0, %arg1, %c0_i32 : i32, i32, i32
  }
  func.func @transform_7(%arg0: i32, %arg1: i32) -> (i32, i32, i32) {
    %c0_i32 = arith.constant 0 : i32
    %c0_i32_0 = arith.constant 0 : i32
    return %arg0, %arg1, %c0_i32 : i32, i32, i32
  }
}

module attributes {stable_mosaic.version = 11 : i64} {
  func.func @_flash_attention_kernel(%arg0: i32, %arg1: i32, %arg2: i32, %arg3: memref<1x128x128xf32, #tpu.memory_space<vmem>>, %arg4: memref<1x128x16xf32, #tpu.memory_space<vmem>>, %arg5: memref<1x256x16xf32, #tpu.memory_space<vmem>>, %arg6: memref<1x256x128xf32, #tpu.memory_space<vmem>>, %arg7: memref<1x128x128xf32, #tpu.memory_space<vmem>>, %arg8: memref<128x1xf32, #tpu.memory_space<vmem>>, %arg9: memref<128x1xf32, #tpu.memory_space<vmem>>, %arg10: memref<128x128xf32, #tpu.memory_space<vmem>>) attributes {dimension_semantics = [#tpu.dimension_semantics<parallel>, #tpu.dimension_semantics<parallel>, #tpu.dimension_semantics<arbitrary>], iteration_bounds = array<i64: 2, 2, 1>, scalar_prefetch = 0 : i64, scratch_operands = 3 : i64, tpu.core_type = #tpu.core_type<tc>, window_params = [{transform_indices = @transform_0, window_bounds = array<i64: 1, 128, 128>}, {transform_indices = @transform_1, window_bounds = array<i64: 1, 128, 16>}, {transform_indices = @transform_2, window_bounds = array<i64: 1, 256, 16>}, {transform_indices = @transform_3, window_bounds = array<i64: 1, 256, 128>}, {transform_indices = @transform_4, window_bounds = array<i64: 1, 128, 128>}]} {
    %c0_i32 = arith.constant 0 : i32
    %0 = arith.cmpi eq, %arg2, %c0_i32 : i32
    %1 = arith.extui %0 : i1 to i32
    %c0_i32_0 = arith.constant 0 : i32
    %2 = arith.cmpi ne, %1, %c0_i32_0 : i32
    scf.if %2 {
      %cst_26 = arith.constant 0xFF800000 : f32
      %35 = vector.broadcast %cst_26 : f32 to vector<128x1xf32>
      %c0_27 = arith.constant 0 : index
      %c0_28 = arith.constant 0 : index
      %36 = vector.load %arg8[%c0_27, %c0_28] : memref<128x1xf32, #tpu.memory_space<vmem>>, vector<128x1xf32>
      tpu.vector_store %arg8[%c0_27, %c0_28], %35 {strides = array<i32>} : memref<128x1xf32, #tpu.memory_space<vmem>>, vector<128x1xf32>,
      %cst_29 = arith.constant 0.000000e+00 : f32
      %37 = vector.broadcast %cst_29 : f32 to vector<128x1xf32>
      %c0_30 = arith.constant 0 : index
      %c0_31 = arith.constant 0 : index
      %38 = vector.load %arg9[%c0_30, %c0_31] : memref<128x1xf32, #tpu.memory_space<vmem>>, vector<128x1xf32>
      tpu.vector_store %arg9[%c0_30, %c0_31], %37 {strides = array<i32>} : memref<128x1xf32, #tpu.memory_space<vmem>>, vector<128x1xf32>,
      %cst_32 = arith.constant 0.000000e+00 : f32
      %39 = vector.broadcast %cst_32 : f32 to vector<128x128xf32>
      %c0_33 = arith.constant 0 : index
      %c0_34 = arith.constant 0 : index
      %40 = vector.load %arg10[%c0_33, %c0_34] : memref<128x128xf32, #tpu.memory_space<vmem>>, vector<128x128xf32>
      tpu.vector_store %arg10[%c0_33, %c0_34], %39 {strides = array<i32>} : memref<128x128xf32, #tpu.memory_space<vmem>>, vector<128x128xf32>,
    } else {
    }
    %c0 = arith.constant 0 : index
    %c0_1 = arith.constant 0 : index
    %c0_2 = arith.constant 0 : index
    %3 = vector.load %arg4[%c0, %c0_1, %c0_2] : memref<1x128x16xf32, #tpu.memory_space<vmem>>, vector<1x128x16xf32>
    %4 = vector.shape_cast %3 : vector<1x128x16xf32> to vector<128x16xf32>
    %c0_3 = arith.constant 0 : index
    %c0_4 = arith.constant 0 : index
    %c0_5 = arith.constant 0 : index
    %5 = vector.load %arg5[%c0_3, %c0_4, %c0_5] : memref<1x256x16xf32, #tpu.memory_space<vmem>>, vector<1x256x16xf32>
    %6 = vector.shape_cast %5 : vector<1x256x16xf32> to vector<256x16xf32>
    %c0_6 = arith.constant 0 : index
    %c0_7 = arith.constant 0 : index
    %c0_8 = arith.constant 0 : index
    %7 = vector.load %arg6[%c0_6, %c0_7, %c0_8] : memref<1x256x128xf32, #tpu.memory_space<vmem>>, vector<1x256x128xf32>
    %8 = vector.shape_cast %7 : vector<1x256x128xf32> to vector<256x128xf32>
    %cst = arith.constant dense<0.000000e+00> : vector<128x256xf32>
    %9 = tpu.matmul %4, %6, %cst {dimension_numbers = #tpu.dot_dimension_numbers<[1], [1], [0], [0], [0, 0, 1, 0], [], []>} : vector<128x16xf32>, vector<256x16xf32>, vector<128x256xf32> -> vector<128x256xf32>
    %c0_9 = arith.constant 0 : index
    %c0_10 = arith.constant 0 : index
    %10 = vector.load %arg8[%c0_9, %c0_10] : memref<128x1xf32, #tpu.memory_space<vmem>>, vector<128x1xf32>
    %cst_11 = arith.constant dense<0xFF800000> : vector<128xf32>
    %11 = vector.multi_reduction <maximumf>, %9, %cst_11 [1] : vector<128x256xf32> to vector<128xf32>
    %12 = vector.shape_cast %11 : vector<128xf32> to vector<128x1xf32>
    %13 = arith.maximumf %10, %12 : vector<128x1xf32>
    %14 = arith.subf %10, %13 : vector<128x1xf32>
    %15 = math.exp %14 : vector<128x1xf32>
    %16 = vector.broadcast %13 : vector<128x1xf32> to vector<128x256xf32>
    %17 = arith.subf %9, %16 : vector<128x256xf32>
    %18 = math.exp %17 : vector<128x256xf32>
    %c0_12 = arith.constant 0 : index
    %c0_13 = arith.constant 0 : index
    %19 = vector.load %arg9[%c0_12, %c0_13] : memref<128x1xf32, #tpu.memory_space<vmem>>, vector<128x1xf32>
    %20 = arith.mulf %15, %19 : vector<128x1xf32>
    %cst_14 = arith.constant dense<0.000000e+00> : vector<128xf32>
    %21 = vector.multi_reduction <add>, %18, %cst_14 [1] : vector<128x256xf32> to vector<128xf32>
    %22 = vector.shape_cast %21 : vector<128xf32> to vector<128x1xf32>
    %23 = arith.addf %20, %22 : vector<128x1xf32>
    %c0_15 = arith.constant 0 : index
    %c0_16 = arith.constant 0 : index
    %24 = vector.load %arg9[%c0_15, %c0_16] : memref<128x1xf32, #tpu.memory_space<vmem>>, vector<128x1xf32>
    tpu.vector_store %arg9[%c0_15, %c0_16], %23 {strides = array<i32>} : memref<128x1xf32, #tpu.memory_space<vmem>>, vector<128x1xf32>,
    %c0_17 = arith.constant 0 : index
    %c0_18 = arith.constant 0 : index
    %25 = vector.load %arg10[%c0_17, %c0_18] : memref<128x128xf32, #tpu.memory_space<vmem>>, vector<128x128xf32>
    %26 = vector.broadcast %15 : vector<128x1xf32> to vector<128x128xf32>
    %27 = arith.mulf %26, %25 : vector<128x128xf32>
    %cst_19 = arith.constant dense<0.000000e+00> : vector<128x128xf32>
    %28 = tpu.matmul %18, %8, %cst_19 {dimension_numbers = #tpu.dot_dimension_numbers<[1], [0], [0], [1], [0, 0, 1, 1], [], []>} : vector<128x256xf32>, vector<256x128xf32>, vector<128x128xf32> -> vector<128x128xf32>
    %29 = arith.addf %27, %28 : vector<128x128xf32>
    %c0_20 = arith.constant 0 : index
    %c0_21 = arith.constant 0 : index
    %30 = vector.load %arg10[%c0_20, %c0_21] : memref<128x128xf32, #tpu.memory_space<vmem>>, vector<128x128xf32>
    tpu.vector_store %arg10[%c0_20, %c0_21], %29 {strides = array<i32>} : memref<128x128xf32, #tpu.memory_space<vmem>>, vector<128x128xf32>,
    %c0_22 = arith.constant 0 : index
    %c0_23 = arith.constant 0 : index
    %31 = vector.load %arg8[%c0_22, %c0_23] : memref<128x1xf32, #tpu.memory_space<vmem>>, vector<128x1xf32>
    tpu.vector_store %arg8[%c0_22, %c0_23], %13 {strides = array<i32>} : memref<128x1xf32, #tpu.memory_space<vmem>>, vector<128x1xf32>,
    %c0_i32_24 = arith.constant 0 : i32
    %32 = arith.cmpi eq, %arg2, %c0_i32_24 : i32
    %33 = arith.extui %32 : i1 to i32
    %c0_i32_25 = arith.constant 0 : i32
    %34 = arith.cmpi ne, %33, %c0_i32_25 : i32
    scf.if %34 {
      %c0_26 = arith.constant 0 : index
      %c0_27 = arith.constant 0 : index
      %35 = vector.load %arg9[%c0_26, %c0_27] : memref<128x1xf32, #tpu.memory_space<vmem>>, vector<128x1xf32>
      %36 = tpu.reciprocal %35 {approx = true} : vector<128x1xf32> -> vector<128x1xf32>
      %c0_28 = arith.constant 0 : index
      %c0_29 = arith.constant 0 : index
      %37 = vector.load %arg10[%c0_28, %c0_29] : memref<128x128xf32, #tpu.memory_space<vmem>>, vector<128x128xf32>
      %38 = vector.broadcast %36 : vector<128x1xf32> to vector<128x128xf32>
      %39 = arith.mulf %37, %38 : vector<128x128xf32>
      %c0_30 = arith.constant 0 : index
      %c0_31 = arith.constant 0 : index
      %c0_32 = arith.constant 0 : index
      %40 = vector.load %arg3[%c0_30, %c0_31, %c0_32] : memref<1x128x128xf32, #tpu.memory_space<vmem>>, vector<1x128x128xf32>
      %41 = vector.shape_cast %40 : vector<1x128x128xf32> to vector<128x128xf32>
      %42 = arith.addf %39, %41 : vector<128x128xf32>
      %c0_33 = arith.constant 0 : index
      %c0_34 = arith.constant 0 : index
      %c0_35 = arith.constant 0 : index
      %43 = vector.load %arg7[%c0_33, %c0_34, %c0_35] : memref<1x128x128xf32, #tpu.memory_space<vmem>>, vector<1x128x128xf32>
      %44 = vector.shape_cast %43 : vector<1x128x128xf32> to vector<128x128xf32>
      %45 = vector.shape_cast %42 : vector<128x128xf32> to vector<1x128x128xf32>
      tpu.vector_store %arg7[%c0_33, %c0_34, %c0_35], %45 {strides = array<i32>} : memref<1x128x128xf32, #tpu.memory_space<vmem>>, vector<1x128x128xf32>,
    } else {
    }
    return
  }
  func.func @transform_0(%arg0: i32, %arg1: i32, %arg2: i32) -> (i32, i32, i32) {
    %c0_i32 = arith.constant 0 : i32
    %c0_i32_0 = arith.constant 0 : i32
    return %arg0, %arg1, %c0_i32 : i32, i32, i32
  }
  func.func @transform_1(%arg0: i32, %arg1: i32, %arg2: i32) -> (i32, i32, i32) {
    %c0_i32 = arith.constant 0 : i32
    %c0_i32_0 = arith.constant 0 : i32
    return %arg0, %arg1, %c0_i32 : i32, i32, i32
  }
  func.func @transform_2(%arg0: i32, %arg1: i32, %arg2: i32) -> (i32, i32, i32) {
    %c0_i32 = arith.constant 0 : i32
    %c0_i32_0 = arith.constant 0 : i32
    return %arg0, %arg2, %c0_i32 : i32, i32, i32
  }
  func.func @transform_3(%arg0: i32, %arg1: i32, %arg2: i32) -> (i32, i32, i32) {
    %c0_i32 = arith.constant 0 : i32
    %c0_i32_0 = arith.constant 0 : i32
    return %arg0, %arg2, %c0_i32 : i32, i32, i32
  }
  func.func @transform_4(%arg0: i32, %arg1: i32, %arg2: i32) -> (i32, i32, i32) {
    %c0_i32 = arith.constant 0 : i32
    %c0_i32_0 = arith.constant 0 : i32
    return %arg0, %arg1, %c0_i32 : i32, i32, i32
  }
}

</mosaic_0001>

<llo_original>
// kernel: attention_module_forward.2
$region0: #{attention_module_forward.2}
  #allocation0 [shape = 'u32[]', space=smem, size = 0x4, offset = 0x4, fixed_abs, tag = 'smem constant byte address 0x4 - core index']
  #allocation1 [shape = 'u32[144,128]{1,0:T(1,128)}', space=vmem, size = 0x12000, scoped, tag = 'internal scratch']
  %s0 = inlined_call_operand.hbm [shape: f32[2,256,128], index: 0, kind: input, shape index: {}]
  %s1 = inlined_call_operand.vmem [shape: f32[128,32], index: 1, kind: input, shape index: {}]
  %s2 = inlined_call_operand.vmem [shape: f32[128,128], index: 2, kind: input, shape index: {}]
  %s3 = inlined_call_operand.vmem [shape: f32[1,32], index: 3, kind: input, shape index: {}]
  %s4 = inlined_call_operand.vmem [shape: f32[1,128], index: 4, kind: input, shape index: {}]
  %s5 = inlined_call_operand.vmem [shape: f32[2,256,16], index: 5, kind: output, shape index: {0}]
  %s6 = inlined_call_operand.vmem [shape: f32[2,256,16], index: 6, kind: output, shape index: {1}]
  %s7 = inlined_call_operand.vmem [shape: f32[2,256,128], index: 7, kind: output, shape index: {2}]
  %8 = xla_tuple %s5, %s6, %s7
  %s9 = sld [smem:[#allocation0]]
  $region73: #{attention_module_forward.2} parent=0
    _
  %s11 = ssub.s32 1, %s9
  %s12 = scalar_select 0, %s11, %s9
  $region1: #{attention_module_forward.2} parent=0
    #allocation2 [shape = 'u8[262144]{0}', space=vmem, size = 0x40000, scoped, tag = 'input window, operand 0']
    #allocation3 [shape = 's32[2]{0}', space=sflag, size = 0x8, scoped, tag = 'scoped memory for attention_module_forward.2']
    %13 = vsyncpa [#allocation3], 0
    %s14 = scalar_lea.sflag [#allocation3], 1
    %15 = vsyncpa %s14, 0
    loop: start=0, step=1, limit=4
    $region2: #{attention_module_forward.2} parent=1 // loop_pre_header
      _
    $region3: #{attention_module_forward.2} parent=1 // loop_header
      %s17 = sphi 0, %s21
      %p18 = scmp.ge.s32.totalorder %s17, 4
      %s24 = sphi 0, %s36
      %s25 = sphi 0, %s32
      %s26 = sphi 0, %s24
      %s27 = sphi 0, %s25
      %s28 = sphi 0, %s26
      %s29 = sphi 0, %s27
      %s41 = sphi 0, %s43
      %s44 = sphi 0, %s41
      %s45 = sphi 0, %s44
      %s61 = sphi 0, %s45
      %s65 = sphi 0, %s65
      %s67 = sphi 0, %s65
      %s68 = sphi 0, %s67
      %s82 = sphi 0, %s68
      %s86 = sphi 0, %s86
      %s88 = sphi 0, %s86
      %s89 = sphi 0, %s88
      %s103 = sphi 0, %s89
      %s107 = sphi 0, %s107
      %s109 = sphi 0, %s107
      %s110 = sphi 0, %s109
      %s124 = sphi 0, %s110
      %s128 = sphi 0, %s128
      %s130 = sphi 0, %s128
      %s131 = sphi 0, %s130
      %s145 = sphi 0, %s131
      %s153 = sphi 0, %s155
      %s156 = sphi 0, %s153
      %s157 = sphi 0, %s156
      %s173 = sphi 0, %s157
      %s181 = sphi 0, %s183
      %s184 = sphi 0, %s181
      %s185 = sphi 0, %s184
      %s201 = sphi 0, %s185
      %s209 = sphi 0, %s211
      %s212 = sphi 0, %s209
      %s213 = sphi 0, %s212
      %s229 = sphi 0, %s213
    $region4: #{attention_module_forward.2} parent=1 // loop_header_branch
      %20 = sbr.rel (%p18) target = $region8
    $region5: #{attention_module_forward.2} parent=1 // loop_body
      %s22 = ssub.s32 %s17, 1
      %s23 = ssub.s32 %s17, 2
      %s30 = sadd.s32 1, %s25
      %p31 = scmp.ge.s32.totalorder %s30, 1
      %s32 = scalar_select %p31, 0, %s30
      %s33 = sadd.s32 1, %s24
      %s34 = scalar_select %p31, %s33, %s24
      %p35 = scmp.ge.s32.totalorder %s34, 2
      %s36 = scalar_select %p35, 0, %s34
      %s37 = ssub.s32 %s24, %s36
      %s38 = ssub.s32 %s25, %s32
      %s39 = sor.u32 %s37, %s38
      %p40 = scmp.eq.s32.totalorder %s39, 0
      %s42 = sadd.s32 %s41, 1
      %s43 = scalar_select %p40, %s41, %s42
      %p46 = pneg %p40
      %p47 = scmp.eq.s32.totalorder %s17, 1
      %p48 = por %p46, %p47
      %p49 = scmp.ne.s32.totalorder %s41, %s44
      %p50 = scmp.eq.s32.totalorder %s17, 0
      %p51 = por %p49, %p50
      %p52 = scmp.ne.s32.totalorder %s41, %s44
      %p53 = scmp.eq.s32.totalorder %s22, 1
      %p54 = por %p52, %p53
      %p55 = scmp.ne.s32.totalorder %s44, %s45
      %p56 = scmp.eq.s32.totalorder %s22, 0
      %p57 = por %p55, %p56
      %p58 = scmp.ne.s32.totalorder %s44, %s45
      %p59 = scmp.eq.s32.totalorder %s23, 1
      %p60 = por %p58, %p59
      %p62 = scmp.ne.s32.totalorder %s45, %s61
      %p63 = scmp.eq.s32.totalorder %s23, 0
      %p64 = por %p62, %p63
      %s66 = sadd.s32 %s65, 1
      %p69 = scmp.eq.s32.totalorder %s17, 1
      %p70 = scmp.ne.s32.totalorder %s65, %s67
      %p71 = scmp.eq.s32.totalorder %s17, 0
      %p72 = por %p70, %p71
      %p73 = scmp.ne.s32.totalorder %s65, %s67
      %p74 = scmp.eq.s32.totalorder %s22, 1
      %p75 = por %p73, %p74
      %p76 = scmp.ne.s32.totalorder %s67, %s68
      %p77 = scmp.eq.s32.totalorder %s22, 0
      %p78 = por %p76, %p77
      %p79 = scmp.ne.s32.totalorder %s67, %s68
      %p80 = scmp.eq.s32.totalorder %s23, 1
      %p81 = por %p79, %p80
      %p83 = scmp.ne.s32.totalorder %s68, %s82
      %p84 = scmp.eq.s32.totalorder %s23, 0
      %p85 = por %p83, %p84
      %s87 = sadd.s32 %s86, 1
      %p90 = scmp.eq.s32.totalorder %s17, 1
      %p91 = scmp.ne.s32.totalorder %s86, %s88
      %p92 = scmp.eq.s32.totalorder %s17, 0
      %p93 = por %p91, %p92
      %p94 = scmp.ne.s32.totalorder %s86, %s88
      %p95 = scmp.eq.s32.totalorder %s22, 1
      %p96 = por %p94, %p95
      %p97 = scmp.ne.s32.totalorder %s88, %s89
      %p98 = scmp.eq.s32.totalorder %s22, 0
      %p99 = por %p97, %p98
      %p100 = scmp.ne.s32.totalorder %s88, %s89
      %p101 = scmp.eq.s32.totalorder %s23, 1
      %p102 = por %p100, %p101
      %p104 = scmp.ne.s32.totalorder %s89, %s103
      %p105 = scmp.eq.s32.totalorder %s23, 0
      %p106 = por %p104, %p105
      %s108 = sadd.s32 %s107, 1
      %p111 = scmp.eq.s32.totalorder %s17, 1
      %p112 = scmp.ne.s32.totalorder %s107, %s109
      %p113 = scmp.eq.s32.totalorder %s17, 0
      %p114 = por %p112, %p113
      %p115 = scmp.ne.s32.totalorder %s107, %s109
      %p116 = scmp.eq.s32.totalorder %s22, 1
      %p117 = por %p115, %p116
      %p118 = scmp.ne.s32.totalorder %s109, %s110
      %p119 = scmp.eq.s32.totalorder %s22, 0
      %p120 = por %p118, %p119
      %p121 = scmp.ne.s32.totalorder %s109, %s110
      %p122 = scmp.eq.s32.totalorder %s23, 1
      %p123 = por %p121, %p122
      %p125 = scmp.ne.s32.totalorder %s110, %s124
      %p126 = scmp.eq.s32.totalorder %s23, 0
      %p127 = por %p125, %p126
      %s129 = sadd.s32 %s128, 1
      %p132 = scmp.eq.s32.totalorder %s17, 1
      %p133 = scmp.ne.s32.totalorder %s128, %s130
      %p134 = scmp.eq.s32.totalorder %s17, 0
      %p135 = por %p133, %p134
      %p136 = scmp.ne.s32.totalorder %s128, %s130
      %p137 = scmp.eq.s32.totalorder %s22, 1
      %p138 = por %p136, %p137
      %p139 = scmp.ne.s32.totalorder %s130, %s131
      %p140 = scmp.eq.s32.totalorder %s22, 0
      %p141 = por %p139, %p140
      %p142 = scmp.ne.s32.totalorder %s130, %s131
      %p143 = scmp.eq.s32.totalorder %s23, 1
      %p144 = por %p142, %p143
      %p146 = scmp.ne.s32.totalorder %s131, %s145
      %p147 = scmp.eq.s32.totalorder %s23, 0
      %p148 = por %p146, %p147
      %s149 = ssub.s32 %s24, %s36
      %s150 = ssub.s32 %s25, %s32
      %s151 = sor.u32 %s149, %s150
      %p152 = scmp.eq.s32.totalorder %s151, 0
      %s154 = sadd.s32 %s153, 1
      %s155 = scalar_select %p152, %s153, %s154
      %p158 = pneg %p152
      %p159 = scmp.eq.s32.totalorder %s17, 1
      %p160 = por %p158, %p159
      %p161 = scmp.ne.s32.totalorder %s153, %s156
      %p162 = scmp.eq.s32.totalorder %s17, 0
      %p163 = por %p161, %p162
      %p164 = scmp.ne.s32.totalorder %s153, %s156
      %p165 = scmp.eq.s32.totalorder %s22, 1
      %p166 = por %p164, %p165
      %p167 = scmp.ne.s32.totalorder %s156, %s157
      %p168 = scmp.eq.s32.totalorder %s22, 0
      %p169 = por %p167, %p168
      %p170 = scmp.ne.s32.totalorder %s156, %s157
      %p171 = scmp.eq.s32.totalorder %s23, 1
      %p172 = por %p170, %p171
      %p174 = scmp.ne.s32.totalorder %s157, %s173
      %p175 = scmp.eq.s32.totalorder %s23, 0
      %p176 = por %p174, %p175
      %s177 = ssub.s32 %s24, %s36
      %s178 = ssub.s32 %s25, %s32
      %s179 = sor.u32 %s177, %s178
      %p180 = scmp.eq.s32.totalorder %s179, 0
      %s182 = sadd.s32 %s181, 1
      %s183 = scalar_select %p180, %s181, %s182
      %p186 = pneg %p180
      %p187 = scmp.eq.s32.totalorder %s17, 1
      %p188 = por %p186, %p187
      %p189 = scmp.ne.s32.totalorder %s181, %s184
      %p190 = scmp.eq.s32.totalorder %s17, 0
      %p191 = por %p189, %p190
      %p192 = scmp.ne.s32.totalorder %s181, %s184
      %p193 = scmp.eq.s32.totalorder %s22, 1
      %p194 = por %p192, %p193
      %p195 = scmp.ne.s32.totalorder %s184, %s185
      %p196 = scmp.eq.s32.totalorder %s22, 0
      %p197 = por %p195, %p196
      %p198 = scmp.ne.s32.totalorder %s184, %s185
      %p199 = scmp.eq.s32.totalorder %s23, 1
      %p200 = por %p198, %p199
      %p202 = scmp.ne.s32.totalorder %s185, %s201
      %p203 = scmp.eq.s32.totalorder %s23, 0
      %p204 = por %p202, %p203
      %s205 = ssub.s32 %s24, %s36
      %s206 = ssub.s32 %s25, %s32
      %s207 = sor.u32 %s205, %s206
      %p208 = scmp.eq.s32.totalorder %s207, 0
      %s210 = sadd.s32 %s209, 1
      %s211 = scalar_select %p208, %s209, %s210
      %p214 = pneg %p208
      %p215 = scmp.eq.s32.totalorder %s17, 1
      %p216 = por %p214, %p215
      %p217 = scmp.ne.s32.totalorder %s209, %s212
      %p218 = scmp.eq.s32.totalorder %s17, 0
      %p219 = por %p217, %p218
      %p220 = scmp.ne.s32.totalorder %s209, %s212
      %p221 = scmp.eq.s32.totalorder %s22, 1
      %p222 = por %p220, %p221
      %p223 = scmp.ne.s32.totalorder %s212, %s213
      %p224 = scmp.eq.s32.totalorder %s22, 0
      %p225 = por %p223, %p224
      %p226 = scmp.ne.s32.totalorder %s212, %s213
      %p227 = scmp.eq.s32.totalorder %s23, 1
      %p228 = por %p226, %p227
      %p230 = scmp.ne.s32.totalorder %s213, %s229
      %p231 = scmp.eq.s32.totalorder %s23, 0
      %p232 = por %p230, %p231
      %p233 = scmp.le.s32.totalorder 1, %s17
      %p234 = scmp.lt.s32.totalorder %s17, 3
      %p235 = pnand %p233, %p234
      %p236 = pneg %p235
      // Predicated region
      $region9: #{attention_module_forward.2} parent=5 // pred_check
        _
      $region10: #{attention_module_forward.2} parent=5 // pred_check_branch
        %238 = sbr.rel (%p235) target = $region12
      $region11: #{attention_module_forward.2} parent=5 // pred_region
        %s239 = ssub.s32 %s17, 1
        // Predicated region
        $region13: #{attention_module_forward.2} parent=11 // pred_check
          %p240 = pneg %p78
        $region14: #{attention_module_forward.2} parent=11 // pred_check_branch
          %242 = sbr.rel (%p240) target = $region16
        $region15: #{attention_module_forward.2} parent=11 // pred_region
          _
        $region16: #{attention_module_forward.2} parent=11 // pred_fallthru
          _
        // Predicated region
        $region17: #{attention_module_forward.2} parent=11 // pred_check
          %p243 = pneg %p99
        $region18: #{attention_module_forward.2} parent=11 // pred_check_branch
          %245 = sbr.rel (%p243) target = $region20
        $region19: #{attention_module_forward.2} parent=11 // pred_region
          _
        $region20: #{attention_module_forward.2} parent=11 // pred_fallthru
          _
        // Predicated region
        $region21: #{attention_module_forward.2} parent=11 // pred_check
          %p246 = pneg %p120
        $region22: #{attention_module_forward.2} parent=11 // pred_check_branch
          %248 = sbr.rel (%p246) target = $region24
        $region23: #{attention_module_forward.2} parent=11 // pred_region
          _
        $region24: #{attention_module_forward.2} parent=11 // pred_fallthru
          _
        // Predicated region
        $region25: #{attention_module_forward.2} parent=11 // pred_check
          %p249 = pneg %p141
        $region26: #{attention_module_forward.2} parent=11 // pred_check_branch
          %251 = sbr.rel (%p249) target = $region28
        $region27: #{attention_module_forward.2} parent=11 // pred_region
          _
        $region28: #{attention_module_forward.2} parent=11 // pred_fallthru
          _
      $region12: #{attention_module_forward.2} parent=5 // pred_fallthru
        _
      %p252 = scmp.lt.s32.totalorder %s17, 2
      // Predicated region
      $region29: #{attention_module_forward.2} parent=5 // pred_check
        %p253 = pneg %p252
      $region30: #{attention_module_forward.2} parent=5 // pred_check_branch
        %255 = sbr.rel (%p253) target = $region32
      $region31: #{attention_module_forward.2} parent=5 // pred_region
        // Predicated region
        $region33: #{attention_module_forward.2} parent=31 // pred_check
          %p256 = pneg %p51
        $region34: #{attention_module_forward.2} parent=31 // pred_check_branch
          %258 = sbr.rel (%p256) target = $region36
        $region35: #{attention_module_forward.2} parent=31 // pred_region
          %s259 = sand.u32 %s41, 1
          %s260 = scalar_lea.sflag [#allocation3], %s259
          %s261 = sand.u32 %s41, 1
          %s262 = smul.addr %s261, 256
          %s263 = scalar_lea.vmem [#allocation2], %s262
          %s264 = smul.u32 32, %s25
          %s266 = ssub.s32 4096, 4096
          %267 = vsyncadd %s260, %s266
          %s268 = smul.addr %s24, 32
          %s269 = sadd.s32 %s264, %s268
          %s270 = smul.addr %s269, 128
          %s271 = scalar_lea.hbm %s0, %s270
          %s272 = sshll.u32 %s263, 4
          %s273 = int_to_ptr.vmem [resolvable:$true] %s272
          %278 = dma.hbm_to_vmem [thread:$0]  %s271, 4096, %s273, %s260, 128, 128, 8
        $region36: #{attention_module_forward.2} parent=31 // pred_fallthru
          _
      $region32: #{attention_module_forward.2} parent=5 // pred_fallthru
        _
      %p279 = scmp.le.s32.totalorder 1, %s17
      %p280 = scmp.lt.s32.totalorder %s17, 3
      %p281 = pnand %p279, %p280
      %p282 = pneg %p281
      // Predicated region
      $region37: #{attention_module_forward.2} parent=5 // pred_check
        _
      $region38: #{attention_module_forward.2} parent=5 // pred_check_branch
        %284 = sbr.rel (%p281) target = $region40
      $region39: #{attention_module_forward.2} parent=5 // pred_region
        %s285 = ssub.s32 %s17, 1
        %s286 = sand.u32 %s44, 1
        %s287 = scalar_lea.sflag [#allocation3], %s286
        %s288 = sand.u32 %s44, 1
        %s289 = smul.addr %s288, 256
        %s290 = scalar_lea.vmem [#allocation2], %s289
        // Predicated region
        $region41: #{attention_module_forward.2} parent=39 // pred_check
          %p291 = pneg %p57
        $region42: #{attention_module_forward.2} parent=39 // pred_check_branch
          %293 = sbr.rel (%p291) target = $region44
        $region43: #{attention_module_forward.2} parent=39 // pred_region
          %294 = dma.done %s287, 4096
        $region44: #{attention_module_forward.2} parent=39 // pred_fallthru
          _
        %s295 = sand.u32 %s44, 1
        %s296 = scalar_lea.sflag [#allocation3], %s295
        %s297 = sand.u32 %s44, 1
        %s298 = smul.addr %s297, 256
        %s299 = scalar_lea.vmem [#allocation2], %s298
        %p300 = pneg %p57
        %p301 = pneg %p54
        %p302 = pneg %p78
        %p303 = pneg %p75
        %p304 = pneg %p99
        %p305 = pneg %p96
        %p306 = pneg %p120
        %p307 = pneg %p117
        %p308 = pneg %p141
        %p309 = pneg %p138
        %p310 = pneg %p169
        %p311 = pneg %p166
        %s312 = smul.u32 32, %s27
        %p313 = scmp.lt.s32.totalorder %s26, 1
        %s314 = scalar_select %p313, %s26, 1
        %p315 = scmp.lt.s32.totalorder %s312, 31
        %s316 = scalar_select %p315, %s312, 31
        %s317 = smul.addr %s314, 32
        %s318 = sadd.s32 %s316, %s317
        %s319 = smul.addr %s318, 8
        %s320 = scalar_lea.vmem %s5, %s319
        %p321 = pneg %p197
        %p322 = pneg %p194
        %s323 = smul.u32 32, %s27
        %p324 = scmp.lt.s32.totalorder %s26, 1
        %s325 = scalar_select %p324, %s26, 1
        %p326 = scmp.lt.s32.totalorder %s323, 31
        %s327 = scalar_select %p326, %s323, 31
        %s328 = smul.addr %s325, 32
        %s329 = sadd.s32 %s327, %s328
        %s330 = smul.addr %s329, 8
        %s331 = scalar_lea.vmem %s6, %s330
        %p332 = pneg %p225
        %p333 = pneg %p222
        %s334 = smul.u32 32, %s27
        %p335 = scmp.lt.s32.totalorder %s26, 1
        %s336 = scalar_select %p335, %s26, 1
        %p337 = scmp.lt.s32.totalorder %s334, 31
        %s338 = scalar_select %p337, %s334, 31
        %s339 = smul.addr %s336, 32
        %s340 = sadd.s32 %s338, %s339
        %s341 = smul.addr %s340, 8
        %s342 = scalar_lea.vmem %s7, %s341
        %s343 = smul.u32 32, %s27
        %s344 = smul.u32 32, %s27
        %p345 = scmp.lt.s32.totalorder %s26, 1
        %s346 = scalar_select %p345, %s26, 1
        %p347 = scmp.lt.s32.totalorder %s344, 31
        %s348 = scalar_select %p347, %s344, 31
        %s349 = smul.addr %s346, 32
        %s350 = sadd.s32 %s348, %s349
        %s351 = smul.addr %s350, 8
        %s352 = scalar_lea.vmem %s5, %s351
        %s353 = smul.u32 32, %s27
        %s354 = smul.u32 32, %s27
        %p355 = scmp.lt.s32.totalorder %s26, 1
        %s356 = scalar_select %p355, %s26, 1
        %p357 = scmp.lt.s32.totalorder %s354, 31
        %s358 = scalar_select %p357, %s354, 31
        %s359 = smul.addr %s356, 32
        %s360 = sadd.s32 %s358, %s359
        %s361 = smul.addr %s360, 8
        %s362 = scalar_lea.vmem %s6, %s361
        %s363 = smul.u32 32, %s27
        %s364 = smul.u32 32, %s27
        %p365 = scmp.lt.s32.totalorder %s26, 1
        %s366 = scalar_select %p365, %s26, 1
        %p367 = scmp.lt.s32.totalorder %s364, 31
        %s368 = scalar_select %p367, %s364, 31
        %s369 = smul.addr %s366, 32
        %s370 = sadd.s32 %s368, %s369
        %s371 = smul.addr %s370, 8
        %s372 = scalar_lea.vmem %s7, %s371
        %s373 = smul.u32 32, %s27
        %v374 = vld [vmem:[%s290] sm:$0xff]
        %v375 = vld [vmem:[%s290 + $0x8] sm:$0xff]
        %v376 = vld [vmem:[%s290 + $0x10] sm:$0xff]
        %v377 = vld [vmem:[%s290 + $0x18] sm:$0xff]
        %v378 = vld [vmem:[%s290 + $0x20] sm:$0xff]
        %v379 = vld [vmem:[%s290 + $0x28] sm:$0xff]
        %v380 = vld [vmem:[%s290 + $0x30] sm:$0xff]
        %v381 = vld [vmem:[%s290 + $0x38] sm:$0xff]
        %v382 = vld [vmem:[%s290 + $0x40] sm:$0xff]
        %v383 = vld [vmem:[%s290 + $0x48] sm:$0xff]
        %v384 = vld [vmem:[%s290 + $0x50] sm:$0xff]
        %v385 = vld [vmem:[%s290 + $0x58] sm:$0xff]
        %v386 = vld [vmem:[%s290 + $0x60] sm:$0xff]
        %v387 = vld [vmem:[%s290 + $0x68] sm:$0xff]
        %v388 = vld [vmem:[%s290 + $0x70] sm:$0xff]
        %v389 = vld [vmem:[%s290 + $0x78] sm:$0xff]
        %v390 = vld [vmem:[%s290 + $0x80] sm:$0xff]
        %v391 = vld [vmem:[%s290 + $0x88] sm:$0xff]
        %v392 = vld [vmem:[%s290 + $0x90] sm:$0xff]
        %v393 = vld [vmem:[%s290 + $0x98] sm:$0xff]
        %v394 = vld [vmem:[%s290 + $0xa0] sm:$0xff]
        %v395 = vld [vmem:[%s290 + $0xa8] sm:$0xff]
        %v396 = vld [vmem:[%s290 + $0xb0] sm:$0xff]
        %v397 = vld [vmem:[%s290 + $0xb8] sm:$0xff]
        %v398 = vld [vmem:[%s290 + $0xc0] sm:$0xff]
        %v399 = vld [vmem:[%s290 + $0xc8] sm:$0xff]
        %v400 = vld [vmem:[%s290 + $0xd0] sm:$0xff]
        %v401 = vld [vmem:[%s290 + $0xd8] sm:$0xff]
        %v402 = vld [vmem:[%s290 + $0xe0] sm:$0xff]
        %v403 = vld [vmem:[%s290 + $0xe8] sm:$0xff]
        %v404 = vld [vmem:[%s290 + $0xf0] sm:$0xff]
        %v405 = vld [vmem:[%s290 + $0xf8] sm:$0xff]
        %v406 = vld [vmem:[%s1] sm:$0xff]
        %v407 = vld [vmem:[%s1 + $0x8] sm:$0xff]
        %v408 = vld [vmem:[%s1 + $0x10] sm:$0xff]
        %v409 = vld [vmem:[%s1 + $0x18] sm:$0xff]
        %v410 = vld [vmem:[%s1 + $0x20] sm:$0xff]
        %v411 = vld [vmem:[%s1 + $0x28] sm:$0xff]
        %v412 = vld [vmem:[%s1 + $0x30] sm:$0xff]
        %v413 = vld [vmem:[%s1 + $0x38] sm:$0xff]
        %v414 = vld [vmem:[%s1 + $0x40] sm:$0xff]
        %v415 = vld [vmem:[%s1 + $0x48] sm:$0xff]
        %v416 = vld [vmem:[%s1 + $0x50] sm:$0xff]
        %v417 = vld [vmem:[%s1 + $0x58] sm:$0xff]
        %v418 = vld [vmem:[%s1 + $0x60] sm:$0xff]
        %v419 = vld [vmem:[%s1 + $0x68] sm:$0xff]
        %v420 = vld [vmem:[%s1 + $0x70] sm:$0xff]
        %v421 = vld [vmem:[%s1 + $0x78] sm:$0xff]
        %v422 = vld [vmem:[%s3] sm:$0x1]
        %v424 = vlaneseq
        %v425 = vshrl.u32 %v424, 7
        %v426 = vsub.s32 0, %v425
        %v427 = vrot.slane %v422, %v426
        %429 = vmatprep.subr.mxu0 0.0
        %430 = vmatpush1.msra.mxu0 %v406
        %431 = vmatprep.subr.mxu0 0.0
        %432 = vmatpush1.msra.mxu0 %v407
        %433 = vmatprep.subr.mxu0 0.0
        %434 = vmatpush1.msra.mxu0 %v408
        %435 = vmatprep.subr.mxu0 0.0
        %436 = vmatpush1.msra.mxu0 %v409
        %437 = vmatprep.subr.mxu0 0.0
        %438 = vmatpush1.msra.mxu0 %v410
        %439 = vmatprep.subr.mxu0 0.0
        %440 = vmatpush1.msra.mxu0 %v411
        %441 = vmatprep.subr.mxu0 0.0
        %442 = vmatpush1.msra.mxu0 %v412
        %443 = vmatprep.subr.mxu0 0.0
        %444 = vmatpush1.msra.mxu0 %v413
        %445 = vmatprep.subr.mxu0 0.0
        %446 = vmatpush1.msra.mxu0 %v414
        %447 = vmatprep.subr.mxu0 0.0
        %448 = vmatpush1.msra.mxu0 %v415
        %449 = vmatprep.subr.mxu0 0.0
        %450 = vmatpush1.msra.mxu0 %v416
        %451 = vmatprep.subr.mxu0 0.0
        %452 = vmatpush1.msra.mxu0 %v417
        %453 = vmatprep.subr.mxu0 0.0
        %454 = vmatpush1.msra.mxu0 %v418
        %455 = vmatprep.subr.mxu0 0.0
        %456 = vmatpush1.msra.mxu0 %v419
        %457 = vmatprep.subr.mxu0 0.0
        %458 = vmatpush1.msra.mxu0 %v420
        %459 = vmatprep.subr.mxu0 0.0
        %460 = vmatpush1.msra.mxu0 %v421
        %461 = vmatprep.subr.mxu0 0.0
        %462 = vmatpush1.msra.mxu0 0.0
        %463 = vmatprep.subr.mxu0 0.0
        %464 = vmatpush1.msra.mxu0 0.0
        %465 = vmatprep.subr.mxu0 0.0
        %466 = vmatpush1.msra.mxu0 0.0
        %467 = vmatprep.subr.mxu0 0.0
        %468 = vmatpush1.msra.mxu0 0.0
        %469 = vmatprep.subr.mxu0 0.0
        %470 = vmatpush1.msra.mxu0 0.0
        %471 = vmatprep.subr.mxu0 0.0
        %472 = vmatpush1.msra.mxu0 0.0
        %473 = vmatprep.subr.mxu0 0.0
        %474 = vmatpush1.msra.mxu0 0.0
        %475 = vmatprep.subr.mxu0 0.0
        %476 = vmatpush1.msra.mxu0 0.0
        %477 = vmatprep.subr.mxu0 0.0
        %478 = vmatpush1.msra.mxu0 0.0
        %479 = vmatprep.subr.mxu0 0.0
        %480 = vmatpush1.msra.mxu0 0.0
        %481 = vmatprep.subr.mxu0 0.0
        %482 = vmatpush1.msra.mxu0 0.0
        %483 = vmatprep.subr.mxu0 0.0
        %484 = vmatpush1.msra.mxu0 0.0
        %485 = vmatprep.subr.mxu0 0.0
        %486 = vmatpush1.msra.mxu0 0.0
        %487 = vmatprep.subr.mxu0 0.0
        %488 = vmatpush1.msra.mxu0 0.0
        %489 = vmatprep.subr.mxu0 0.0
        %490 = vmatpush1.msra.mxu0 0.0
        %491 = vmatprep.subr.mxu0 0.0
        %492 = vmatpush1.msra.mxu0 0.0
        %493 = vmatprep.mubr.f32.mxu0 0.0
        %494 = vmatmul.mubr.f32.gmra.mrb[0].mxu0 %v374
        %v495 = vpop.f32.mrb[0].mxu0
        %v496 = vadd.f32 %v427, %v495
        %v497 = vpop.f32.mrb[0].mxu0
        %498 = vmatprep.mubr.f32.mxu0 0.0
        %499 = vmatmul.mubr.f32.gmra.mrb[0].mxu0 %v375
        %v500 = vpop.f32.mrb[0].mxu0
        %v501 = vadd.f32 %v427, %v500
        %v502 = vpop.f32.mrb[0].mxu0
        %503 = vmatprep.mubr.f32.mxu0 0.0
        %504 = vmatmul.mubr.f32.gmra.mrb[0].mxu0 %v376
        %v505 = vpop.f32.mrb[0].mxu0
        %v506 = vadd.f32 %v427, %v505
        %v507 = vpop.f32.mrb[0].mxu0
        %508 = vmatprep.mubr.f32.mxu0 0.0
        %509 = vmatmul.mubr.f32.gmra.mrb[0].mxu0 %v377
        %v510 = vpop.f32.mrb[0].mxu0
        %v511 = vadd.f32 %v427, %v510
        %v512 = vpop.f32.mrb[0].mxu0
        %513 = vmatprep.mubr.f32.mxu0 0.0
        %514 = vmatmul.mubr.f32.gmra.mrb[0].mxu0 %v378
        %v515 = vpop.f32.mrb[0].mxu0
        %v516 = vadd.f32 %v427, %v515
        %v517 = vpop.f32.mrb[0].mxu0
        %518 = vmatprep.mubr.f32.mxu0 0.0
        %519 = vmatmul.mubr.f32.gmra.mrb[0].mxu0 %v379
        %v520 = vpop.f32.mrb[0].mxu0
        %v521 = vadd.f32 %v427, %v520
        %v522 = vpop.f32.mrb[0].mxu0
        %523 = vmatprep.mubr.f32.mxu0 0.0
        %524 = vmatmul.mubr.f32.gmra.mrb[0].mxu0 %v380
        %v525 = vpop.f32.mrb[0].mxu0
        %v526 = vadd.f32 %v427, %v525
        %v527 = vpop.f32.mrb[0].mxu0
        %528 = vmatprep.mubr.f32.mxu0 0.0
        %529 = vmatmul.mubr.f32.gmra.mrb[0].mxu0 %v381
        %v530 = vpop.f32.mrb[0].mxu0
        %v531 = vadd.f32 %v427, %v530
        %v532 = vpop.f32.mrb[0].mxu0
        %533 = vmatprep.mubr.f32.mxu0 0.0
        %534 = vmatmul.mubr.f32.gmra.mrb[0].mxu0 %v382
        %v535 = vpop.f32.mrb[0].mxu0
        %v536 = vadd.f32 %v427, %v535
        %v537 = vpop.f32.mrb[0].mxu0
        %538 = vmatprep.mubr.f32.mxu0 0.0
        %539 = vmatmul.mubr.f32.gmra.mrb[0].mxu0 %v383
        %v540 = vpop.f32.mrb[0].mxu0
        %v541 = vadd.f32 %v427, %v540
        %v542 = vpop.f32.mrb[0].mxu0
        %543 = vmatprep.mubr.f32.mxu0 0.0
        %544 = vmatmul.mubr.f32.gmra.mrb[0].mxu0 %v384
        %v545 = vpop.f32.mrb[0].mxu0
        %v546 = vadd.f32 %v427, %v545
        %v547 = vpop.f32.mrb[0].mxu0
        %548 = vmatprep.mubr.f32.mxu0 0.0
        %549 = vmatmul.mubr.f32.gmra.mrb[0].mxu0 %v385
        %v550 = vpop.f32.mrb[0].mxu0
        %v551 = vadd.f32 %v427, %v550
        %v552 = vpop.f32.mrb[0].mxu0
        %553 = vmatprep.mubr.f32.mxu0 0.0
        %554 = vmatmul.mubr.f32.gmra.mrb[0].mxu0 %v386
        %v555 = vpop.f32.mrb[0].mxu0
        %v556 = vadd.f32 %v427, %v555
        %v557 = vpop.f32.mrb[0].mxu0
        %558 = vmatprep.mubr.f32.mxu0 0.0
        %559 = vmatmul.mubr.f32.gmra.mrb[0].mxu0 %v387
        %v560 = vpop.f32.mrb[0].mxu0
        %v561 = vadd.f32 %v427, %v560
        %v562 = vpop.f32.mrb[0].mxu0
        %563 = vmatprep.mubr.f32.mxu0 0.0
        %564 = vmatmul.mubr.f32.gmra.mrb[0].mxu0 %v388
        %v565 = vpop.f32.mrb[0].mxu0
        %v566 = vadd.f32 %v427, %v565
        %v567 = vpop.f32.mrb[0].mxu0
        %568 = vmatprep.mubr.f32.mxu0 0.0
        %569 = vmatmul.mubr.f32.gmra.mrb[0].mxu0 %v389
        %v570 = vpop.f32.mrb[0].mxu0
        %v571 = vadd.f32 %v427, %v570
        %v572 = vpop.f32.mrb[0].mxu0
        %573 = vmatprep.mubr.f32.mxu0 0.0
        %574 = vmatmul.mubr.f32.gmra.mrb[0].mxu0 %v390
        %v575 = vpop.f32.mrb[0].mxu0
        %v576 = vadd.f32 %v427, %v575
        %v577 = vpop.f32.mrb[0].mxu0
        %578 = vmatprep.mubr.f32.mxu0 0.0
        %579 = vmatmul.mubr.f32.gmra.mrb[0].mxu0 %v391
        %v580 = vpop.f32.mrb[0].mxu0
        %v581 = vadd.f32 %v427, %v580
        %v582 = vpop.f32.mrb[0].mxu0
        %583 = vmatprep.mubr.f32.mxu0 0.0
        %584 = vmatmul.mubr.f32.gmra.mrb[0].mxu0 %v392
        %v585 = vpop.f32.mrb[0].mxu0
        %v586 = vadd.f32 %v427, %v585
        %v587 = vpop.f32.mrb[0].mxu0
        %588 = vmatprep.mubr.f32.mxu0 0.0
        %589 = vmatmul.mubr.f32.gmra.mrb[0].mxu0 %v393
        %v590 = vpop.f32.mrb[0].mxu0
        %v591 = vadd.f32 %v427, %v590
        %v592 = vpop.f32.mrb[0].mxu0
        %593 = vmatprep.mubr.f32.mxu0 0.0
        %594 = vmatmul.mubr.f32.gmra.mrb[0].mxu0 %v394
        %v595 = vpop.f32.mrb[0].mxu0
        %v596 = vadd.f32 %v427, %v595
        %v597 = vpop.f32.mrb[0].mxu0
        %598 = vmatprep.mubr.f32.mxu0 0.0
        %599 = vmatmul.mubr.f32.gmra.mrb[0].mxu0 %v395
        %v600 = vpop.f32.mrb[0].mxu0
        %v601 = vadd.f32 %v427, %v600
        %v602 = vpop.f32.mrb[0].mxu0
        %603 = vmatprep.mubr.f32.mxu0 0.0
        %604 = vmatmul.mubr.f32.gmra.mrb[0].mxu0 %v396
        %v605 = vpop.f32.mrb[0].mxu0
        %v606 = vadd.f32 %v427, %v605
        %v607 = vpop.f32.mrb[0].mxu0
        %608 = vmatprep.mubr.f32.mxu0 0.0
        %609 = vmatmul.mubr.f32.gmra.mrb[0].mxu0 %v397
        %v610 = vpop.f32.mrb[0].mxu0
        %v611 = vadd.f32 %v427, %v610
        %v612 = vpop.f32.mrb[0].mxu0
        %613 = vmatprep.mubr.f32.mxu0 0.0
        %614 = vmatmul.mubr.f32.gmra.mrb[0].mxu0 %v398
        %v615 = vpop.f32.mrb[0].mxu0
        %v616 = vadd.f32 %v427, %v615
        %v617 = vpop.f32.mrb[0].mxu0
        %618 = vmatprep.mubr.f32.mxu0 0.0
        %619 = vmatmul.mubr.f32.gmra.mrb[0].mxu0 %v399
        %v620 = vpop.f32.mrb[0].mxu0
        %v621 = vadd.f32 %v427, %v620
        %v622 = vpop.f32.mrb[0].mxu0
        %623 = vmatprep.mubr.f32.mxu0 0.0
        %624 = vmatmul.mubr.f32.gmra.mrb[0].mxu0 %v400
        %v625 = vpop.f32.mrb[0].mxu0
        %v626 = vadd.f32 %v427, %v625
        %v627 = vpop.f32.mrb[0].mxu0
        %628 = vmatprep.mubr.f32.mxu0 0.0
        %629 = vmatmul.mubr.f32.gmra.mrb[0].mxu0 %v401
        %v630 = vpop.f32.mrb[0].mxu0
        %v631 = vadd.f32 %v427, %v630
        %v632 = vpop.f32.mrb[0].mxu0
        %633 = vmatprep.mubr.f32.mxu0 0.0
        %634 = vmatmul.mubr.f32.gmra.mrb[0].mxu0 %v402
        %v635 = vpop.f32.mrb[0].mxu0
        %v636 = vadd.f32 %v427, %v635
        %v637 = vpop.f32.mrb[0].mxu0
        %638 = vmatprep.mubr.f32.mxu0 0.0
        %639 = vmatmul.mubr.f32.gmra.mrb[0].mxu0 %v403
        %v640 = vpop.f32.mrb[0].mxu0
        %v641 = vadd.f32 %v427, %v640
        %v642 = vpop.f32.mrb[0].mxu0
        %643 = vmatprep.mubr.f32.mxu0 0.0
        %644 = vmatmul.mubr.f32.gmra.mrb[0].mxu0 %v404
        %v645 = vpop.f32.mrb[0].mxu0
        %v646 = vadd.f32 %v427, %v645
        %v647 = vpop.f32.mrb[0].mxu0
        %648 = vmatprep.mubr.f32.mxu0 0.0
        %649 = vmatmul.mubr.f32.gmra.mrb[0].mxu0 %v405
        %v650 = vpop.f32.mrb[0].mxu0
        %v651 = vadd.f32 %v427, %v650
        %v652 = vpop.f32.mrb[0].mxu0
        %653 = vdwg.mxu0
        %vm654 = vcmask 130048
        %655 = vst.msk [vmem:[%s352] sm:$0xff] %vm654, %v496
        %656 = vst.msk [vmem:[%s352 + $0x8] sm:$0xff] %vm654, %v501
        %657 = vst.msk [vmem:[%s352 + $0x10] sm:$0xff] %vm654, %v506
        %658 = vst.msk [vmem:[%s352 + $0x18] sm:$0xff] %vm654, %v511
        %659 = vst.msk [vmem:[%s352 + $0x20] sm:$0xff] %vm654, %v516
        %660 = vst.msk [vmem:[%s352 + $0x28] sm:$0xff] %vm654, %v521
        %661 = vst.msk [vmem:[%s352 + $0x30] sm:$0xff] %vm654, %v526
        %662 = vst.msk [vmem:[%s352 + $0x38] sm:$0xff] %vm654, %v531
        %663 = vst.msk [vmem:[%s352 + $0x40] sm:$0xff] %vm654, %v536
        %664 = vst.msk [vmem:[%s352 + $0x48] sm:$0xff] %vm654, %v541
        %665 = vst.msk [vmem:[%s352 + $0x50] sm:$0xff] %vm654, %v546
        %666 = vst.msk [vmem:[%s352 + $0x58] sm:$0xff] %vm654, %v551
        %667 = vst.msk [vmem:[%s352 + $0x60] sm:$0xff] %vm654, %v556
        %668 = vst.msk [vmem:[%s352 + $0x68] sm:$0xff] %vm654, %v561
        %669 = vst.msk [vmem:[%s352 + $0x70] sm:$0xff] %vm654, %v566
        %670 = vst.msk [vmem:[%s352 + $0x78] sm:$0xff] %vm654, %v571
        %671 = vst.msk [vmem:[%s352 + $0x80] sm:$0xff] %vm654, %v576
        %672 = vst.msk [vmem:[%s352 + $0x88] sm:$0xff] %vm654, %v581
        %673 = vst.msk [vmem:[%s352 + $0x90] sm:$0xff] %vm654, %v586
        %674 = vst.msk [vmem:[%s352 + $0x98] sm:$0xff] %vm654, %v591
        %675 = vst.msk [vmem:[%s352 + $0xa0] sm:$0xff] %vm654, %v596
        %676 = vst.msk [vmem:[%s352 + $0xa8] sm:$0xff] %vm654, %v601
        %677 = vst.msk [vmem:[%s352 + $0xb0] sm:$0xff] %vm654, %v606
        %678 = vst.msk [vmem:[%s352 + $0xb8] sm:$0xff] %vm654, %v611
        %679 = vst.msk [vmem:[%s352 + $0xc0] sm:$0xff] %vm654, %v616
        %680 = vst.msk [vmem:[%s352 + $0xc8] sm:$0xff] %vm654, %v621
        %681 = vst.msk [vmem:[%s352 + $0xd0] sm:$0xff] %vm654, %v626
        %682 = vst.msk [vmem:[%s352 + $0xd8] sm:$0xff] %vm654, %v631
        %683 = vst.msk [vmem:[%s352 + $0xe0] sm:$0xff] %vm654, %v636
        %684 = vst.msk [vmem:[%s352 + $0xe8] sm:$0xff] %vm654, %v641
        %685 = vst.msk [vmem:[%s352 + $0xf0] sm:$0xff] %vm654, %v646
        %686 = vst.msk [vmem:[%s352 + $0xf8] sm:$0xff] %vm654, %v651
        %719 = vrot.lane.b32.xlu0 %v496, 112
        %v720 = vpop.permute.xlu0 %719
        %721 = vrot.lane.b32.xlu0 %v501, 112
        %v722 = vpop.permute.xlu0 %721
        %723 = vrot.lane.b32.xlu0 %v506, 112
        %v724 = vpop.permute.xlu0 %723
        %725 = vrot.lane.b32.xlu0 %v511, 112
        %v726 = vpop.permute.xlu0 %725
        %727 = vrot.lane.b32.xlu0 %v516, 112
        %v728 = vpop.permute.xlu0 %727
        %729 = vrot.lane.b32.xlu0 %v521, 112
        %v730 = vpop.permute.xlu0 %729
        %731 = vrot.lane.b32.xlu0 %v526, 112
        %v732 = vpop.permute.xlu0 %731
        %733 = vrot.lane.b32.xlu0 %v531, 112
        %v734 = vpop.permute.xlu0 %733
        %735 = vrot.lane.b32.xlu0 %v536, 112
        %v736 = vpop.permute.xlu0 %735
        %737 = vrot.lane.b32.xlu0 %v541, 112
        %v738 = vpop.permute.xlu0 %737
        %739 = vrot.lane.b32.xlu0 %v546, 112
        %v740 = vpop.permute.xlu0 %739
        %741 = vrot.lane.b32.xlu0 %v551, 112
        %v742 = vpop.permute.xlu0 %741
        %743 = vrot.lane.b32.xlu0 %v556, 112
        %v744 = vpop.permute.xlu0 %743
        %745 = vrot.lane.b32.xlu0 %v561, 112
        %v746 = vpop.permute.xlu0 %745
        %747 = vrot.lane.b32.xlu0 %v566, 112
        %v748 = vpop.permute.xlu0 %747
        %749 = vrot.lane.b32.xlu0 %v571, 112
        %v750 = vpop.permute.xlu0 %749
        %751 = vrot.lane.b32.xlu0 %v576, 112
        %v752 = vpop.permute.xlu0 %751
        %753 = vrot.lane.b32.xlu0 %v581, 112
        %v754 = vpop.permute.xlu0 %753
        %755 = vrot.lane.b32.xlu0 %v586, 112
        %v756 = vpop.permute.xlu0 %755
        %757 = vrot.lane.b32.xlu0 %v591, 112
        %v758 = vpop.permute.xlu0 %757
        %759 = vrot.lane.b32.xlu0 %v596, 112
        %v760 = vpop.permute.xlu0 %759
        %761 = vrot.lane.b32.xlu0 %v601, 112
        %v762 = vpop.permute.xlu0 %761
        %763 = vrot.lane.b32.xlu0 %v606, 112
        %v764 = vpop.permute.xlu0 %763
        %765 = vrot.lane.b32.xlu0 %v611, 112
        %v766 = vpop.permute.xlu0 %765
        %767 = vrot.lane.b32.xlu0 %v616, 112
        %v768 = vpop.permute.xlu0 %767
        %769 = vrot.lane.b32.xlu0 %v621, 112
        %v770 = vpop.permute.xlu0 %769
        %771 = vrot.lane.b32.xlu0 %v626, 112
        %v772 = vpop.permute.xlu0 %771
        %773 = vrot.lane.b32.xlu0 %v631, 112
        %v774 = vpop.permute.xlu0 %773
        %775 = vrot.lane.b32.xlu0 %v636, 112
        %v776 = vpop.permute.xlu0 %775
        %777 = vrot.lane.b32.xlu0 %v641, 112
        %v778 = vpop.permute.xlu0 %777
        %779 = vrot.lane.b32.xlu0 %v646, 112
        %v780 = vpop.permute.xlu0 %779
        %781 = vrot.lane.b32.xlu0 %v651, 112
        %v782 = vpop.permute.xlu0 %781
        %815 = vst.msk [vmem:[%s362] sm:$0xff] %vm654, %v720
        %816 = vst.msk [vmem:[%s362 + $0x8] sm:$0xff] %vm654, %v722
        %817 = vst.msk [vmem:[%s362 + $0x10] sm:$0xff] %vm654, %v724
        %818 = vst.msk [vmem:[%s362 + $0x18] sm:$0xff] %vm654, %v726
        %819 = vst.msk [vmem:[%s362 + $0x20] sm:$0xff] %vm654, %v728
        %820 = vst.msk [vmem:[%s362 + $0x28] sm:$0xff] %vm654, %v730
        %821 = vst.msk [vmem:[%s362 + $0x30] sm:$0xff] %vm654, %v732
        %822 = vst.msk [vmem:[%s362 + $0x38] sm:$0xff] %vm654, %v734
        %823 = vst.msk [vmem:[%s362 + $0x40] sm:$0xff] %vm654, %v736
        %824 = vst.msk [vmem:[%s362 + $0x48] sm:$0xff] %vm654, %v738
        %825 = vst.msk [vmem:[%s362 + $0x50] sm:$0xff] %vm654, %v740
        %826 = vst.msk [vmem:[%s362 + $0x58] sm:$0xff] %vm654, %v742
        %827 = vst.msk [vmem:[%s362 + $0x60] sm:$0xff] %vm654, %v744
        %828 = vst.msk [vmem:[%s362 + $0x68] sm:$0xff] %vm654, %v746
        %829 = vst.msk [vmem:[%s362 + $0x70] sm:$0xff] %vm654, %v748
        %830 = vst.msk [vmem:[%s362 + $0x78] sm:$0xff] %vm654, %v750
        %831 = vst.msk [vmem:[%s362 + $0x80] sm:$0xff] %vm654, %v752
        %832 = vst.msk [vmem:[%s362 + $0x88] sm:$0xff] %vm654, %v754
        %833 = vst.msk [vmem:[%s362 + $0x90] sm:$0xff] %vm654, %v756
        %834 = vst.msk [vmem:[%s362 + $0x98] sm:$0xff] %vm654, %v758
        %835 = vst.msk [vmem:[%s362 + $0xa0] sm:$0xff] %vm654, %v760
        %836 = vst.msk [vmem:[%s362 + $0xa8] sm:$0xff] %vm654, %v762
        %837 = vst.msk [vmem:[%s362 + $0xb0] sm:$0xff] %vm654, %v764
        %838 = vst.msk [vmem:[%s362 + $0xb8] sm:$0xff] %vm654, %v766
        %839 = vst.msk [vmem:[%s362 + $0xc0] sm:$0xff] %vm654, %v768
        %840 = vst.msk [vmem:[%s362 + $0xc8] sm:$0xff] %vm654, %v770
        %841 = vst.msk [vmem:[%s362 + $0xd0] sm:$0xff] %vm654, %v772
        %842 = vst.msk [vmem:[%s362 + $0xd8] sm:$0xff] %vm654, %v774
        %843 = vst.msk [vmem:[%s362 + $0xe0] sm:$0xff] %vm654, %v776
        %844 = vst.msk [vmem:[%s362 + $0xe8] sm:$0xff] %vm654, %v778
        %845 = vst.msk [vmem:[%s362 + $0xf0] sm:$0xff] %vm654, %v780
        %846 = vst.msk [vmem:[%s362 + $0xf8] sm:$0xff] %vm654, %v782
        %v847 = vld [vmem:[%s2] sm:$0xff]
        %v848 = vld [vmem:[%s2 + $0x8] sm:$0xff]
        %v849 = vld [vmem:[%s2 + $0x10] sm:$0xff]
        %v850 = vld [vmem:[%s2 + $0x18] sm:$0xff]
        %v851 = vld [vmem:[%s2 + $0x20] sm:$0xff]
        %v852 = vld [vmem:[%s2 + $0x28] sm:$0xff]
        %v853 = vld [vmem:[%s2 + $0x30] sm:$0xff]
        %v854 = vld [vmem:[%s2 + $0x38] sm:$0xff]
        %v855 = vld [vmem:[%s2 + $0x40] sm:$0xff]
        %v856 = vld [vmem:[%s2 + $0x48] sm:$0xff]
        %v857 = vld [vmem:[%s2 + $0x50] sm:$0xff]
        %v858 = vld [vmem:[%s2 + $0x58] sm:$0xff]
        %v859 = vld [vmem:[%s2 + $0x60] sm:$0xff]
        %v860 = vld [vmem:[%s2 + $0x68] sm:$0xff]
        %v861 = vld [vmem:[%s2 + $0x70] sm:$0xff]
        %v862 = vld [vmem:[%s2 + $0x78] sm:$0xff]
        %v863 = vld [vmem:[%s4] sm:$0x1]
        %v865 = vlaneseq
        %v866 = vshrl.u32 %v865, 7
        %v867 = vsub.s32 0, %v866
        %v868 = vrot.slane %v863, %v867
        %870 = vmatprep.subr.mxu0 0.0
        %871 = vmatpush1.msra.mxu0 %v847
        %872 = vmatprep.subr.mxu0 0.0
        %873 = vmatpush1.msra.mxu0 %v848
        %874 = vmatprep.subr.mxu0 0.0
        %875 = vmatpush1.msra.mxu0 %v849
        %876 = vmatprep.subr.mxu0 0.0
        %877 = vmatpush1.msra.mxu0 %v850
        %878 = vmatprep.subr.mxu0 0.0
        %879 = vmatpush1.msra.mxu0 %v851
        %880 = vmatprep.subr.mxu0 0.0
        %881 = vmatpush1.msra.mxu0 %v852
        %882 = vmatprep.subr.mxu0 0.0
        %883 = vmatpush1.msra.mxu0 %v853
        %884 = vmatprep.subr.mxu0 0.0
        %885 = vmatpush1.msra.mxu0 %v854
        %886 = vmatprep.subr.mxu0 0.0
        %887 = vmatpush1.msra.mxu0 %v855
        %888 = vmatprep.subr.mxu0 0.0
        %889 = vmatpush1.msra.mxu0 %v856
        %890 = vmatprep.subr.mxu0 0.0
        %891 = vmatpush1.msra.mxu0 %v857
        %892 = vmatprep.subr.mxu0 0.0
        %893 = vmatpush1.msra.mxu0 %v858
        %894 = vmatprep.subr.mxu0 0.0
        %895 = vmatpush1.msra.mxu0 %v859
        %896 = vmatprep.subr.mxu0 0.0
        %897 = vmatpush1.msra.mxu0 %v860
        %898 = vmatprep.subr.mxu0 0.0
        %899 = vmatpush1.msra.mxu0 %v861
        %900 = vmatprep.subr.mxu0 0.0
        %901 = vmatpush1.msra.mxu0 %v862
        %902 = vmatprep.subr.mxu0 0.0
        %903 = vmatpush1.msra.mxu0 0.0
        %904 = vmatprep.subr.mxu0 0.0
        %905 = vmatpush1.msra.mxu0 0.0
        %906 = vmatprep.subr.mxu0 0.0
        %907 = vmatpush1.msra.mxu0 0.0
        %908 = vmatprep.subr.mxu0 0.0
        %909 = vmatpush1.msra.mxu0 0.0
        %910 = vmatprep.subr.mxu0 0.0
        %911 = vmatpush1.msra.mxu0 0.0
        %912 = vmatprep.subr.mxu0 0.0
        %913 = vmatpush1.msra.mxu0 0.0
        %914 = vmatprep.subr.mxu0 0.0
        %915 = vmatpush1.msra.mxu0 0.0
        %916 = vmatprep.subr.mxu0 0.0
        %917 = vmatpush1.msra.mxu0 0.0
        %918 = vmatprep.subr.mxu0 0.0
        %919 = vmatpush1.msra.mxu0 0.0
        %920 = vmatprep.subr.mxu0 0.0
        %921 = vmatpush1.msra.mxu0 0.0
        %922 = vmatprep.subr.mxu0 0.0
        %923 = vmatpush1.msra.mxu0 0.0
        %924 = vmatprep.subr.mxu0 0.0
        %925 = vmatpush1.msra.mxu0 0.0
        %926 = vmatprep.subr.mxu0 0.0
        %927 = vmatpush1.msra.mxu0 0.0
        %928 = vmatprep.subr.mxu0 0.0
        %929 = vmatpush1.msra.mxu0 0.0
        %930 = vmatprep.subr.mxu0 0.0
        %931 = vmatpush1.msra.mxu0 0.0
        %932 = vmatprep.subr.mxu0 0.0
        %933 = vmatpush1.msra.mxu0 0.0
        %934 = vmatprep.mubr.f32.mxu0 0.0
        %935 = vmatmul.mubr.f32.gmra.mrb[0].mxu0 %v374
        %v936 = vpop.f32.mrb[0].mxu0
        %v937 = vadd.f32 %v868, %v936
        %v938 = vpop.f32.mrb[0].mxu0
        %939 = vmatprep.mubr.f32.mxu0 0.0
        %940 = vmatmul.mubr.f32.gmra.mrb[0].mxu0 %v375
        %v941 = vpop.f32.mrb[0].mxu0
        %v942 = vadd.f32 %v868, %v941
        %v943 = vpop.f32.mrb[0].mxu0
        %944 = vmatprep.mubr.f32.mxu0 0.0
        %945 = vmatmul.mubr.f32.gmra.mrb[0].mxu0 %v376
        %v946 = vpop.f32.mrb[0].mxu0
        %v947 = vadd.f32 %v868, %v946
        %v948 = vpop.f32.mrb[0].mxu0
        %949 = vmatprep.mubr.f32.mxu0 0.0
        %950 = vmatmul.mubr.f32.gmra.mrb[0].mxu0 %v377
        %v951 = vpop.f32.mrb[0].mxu0
        %v952 = vadd.f32 %v868, %v951
        %v953 = vpop.f32.mrb[0].mxu0
        %954 = vmatprep.mubr.f32.mxu0 0.0
        %955 = vmatmul.mubr.f32.gmra.mrb[0].mxu0 %v378
        %v956 = vpop.f32.mrb[0].mxu0
        %v957 = vadd.f32 %v868, %v956
        %v958 = vpop.f32.mrb[0].mxu0
        %959 = vmatprep.mubr.f32.mxu0 0.0
        %960 = vmatmul.mubr.f32.gmra.mrb[0].mxu0 %v379
        %v961 = vpop.f32.mrb[0].mxu0
        %v962 = vadd.f32 %v868, %v961
        %v963 = vpop.f32.mrb[0].mxu0
        %964 = vmatprep.mubr.f32.mxu0 0.0
        %965 = vmatmul.mubr.f32.gmra.mrb[0].mxu0 %v380
        %v966 = vpop.f32.mrb[0].mxu0
        %v967 = vadd.f32 %v868, %v966
        %v968 = vpop.f32.mrb[0].mxu0
        %969 = vmatprep.mubr.f32.mxu0 0.0
        %970 = vmatmul.mubr.f32.gmra.mrb[0].mxu0 %v381
        %v971 = vpop.f32.mrb[0].mxu0
        %v972 = vadd.f32 %v868, %v971
        %v973 = vpop.f32.mrb[0].mxu0
        %974 = vmatprep.mubr.f32.mxu0 0.0
        %975 = vmatmul.mubr.f32.gmra.mrb[0].mxu0 %v382
        %v976 = vpop.f32.mrb[0].mxu0
        %v977 = vadd.f32 %v868, %v976
        %v978 = vpop.f32.mrb[0].mxu0
        %979 = vmatprep.mubr.f32.mxu0 0.0
        %980 = vmatmul.mubr.f32.gmra.mrb[0].mxu0 %v383
        %v981 = vpop.f32.mrb[0].mxu0
        %v982 = vadd.f32 %v868, %v981
        %v983 = vpop.f32.mrb[0].mxu0
        %984 = vmatprep.mubr.f32.mxu0 0.0
        %985 = vmatmul.mubr.f32.gmra.mrb[0].mxu0 %v384
        %v986 = vpop.f32.mrb[0].mxu0
        %v987 = vadd.f32 %v868, %v986
        %v988 = vpop.f32.mrb[0].mxu0
        %989 = vmatprep.mubr.f32.mxu0 0.0
        %990 = vmatmul.mubr.f32.gmra.mrb[0].mxu0 %v385
        %v991 = vpop.f32.mrb[0].mxu0
        %v992 = vadd.f32 %v868, %v991
        %v993 = vpop.f32.mrb[0].mxu0
        %994 = vmatprep.mubr.f32.mxu0 0.0
        %995 = vmatmul.mubr.f32.gmra.mrb[0].mxu0 %v386
        %v996 = vpop.f32.mrb[0].mxu0
        %v997 = vadd.f32 %v868, %v996
        %v998 = vpop.f32.mrb[0].mxu0
        %999 = vmatprep.mubr.f32.mxu0 0.0
        %1000 = vmatmul.mubr.f32.gmra.mrb[0].mxu0 %v387
        %v1001 = vpop.f32.mrb[0].mxu0
        %v1002 = vadd.f32 %v868, %v1001
        %v1003 = vpop.f32.mrb[0].mxu0
        %1004 = vmatprep.mubr.f32.mxu0 0.0
        %1005 = vmatmul.mubr.f32.gmra.mrb[0].mxu0 %v388
        %v1006 = vpop.f32.mrb[0].mxu0
        %v1007 = vadd.f32 %v868, %v1006
        %v1008 = vpop.f32.mrb[0].mxu0
        %1009 = vmatprep.mubr.f32.mxu0 0.0
        %1010 = vmatmul.mubr.f32.gmra.mrb[0].mxu0 %v389
        %v1011 = vpop.f32.mrb[0].mxu0
        %v1012 = vadd.f32 %v868, %v1011
        %v1013 = vpop.f32.mrb[0].mxu0
        %1014 = vmatprep.mubr.f32.mxu0 0.0
        %1015 = vmatmul.mubr.f32.gmra.mrb[0].mxu0 %v390
        %v1016 = vpop.f32.mrb[0].mxu0
        %v1017 = vadd.f32 %v868, %v1016
        %v1018 = vpop.f32.mrb[0].mxu0
        %1019 = vmatprep.mubr.f32.mxu0 0.0
        %1020 = vmatmul.mubr.f32.gmra.mrb[0].mxu0 %v391
        %v1021 = vpop.f32.mrb[0].mxu0
        %v1022 = vadd.f32 %v868, %v1021
        %v1023 = vpop.f32.mrb[0].mxu0
        %1024 = vmatprep.mubr.f32.mxu0 0.0
        %1025 = vmatmul.mubr.f32.gmra.mrb[0].mxu0 %v392
        %v1026 = vpop.f32.mrb[0].mxu0
        %v1027 = vadd.f32 %v868, %v1026
        %v1028 = vpop.f32.mrb[0].mxu0
        %1029 = vmatprep.mubr.f32.mxu0 0.0
        %1030 = vmatmul.mubr.f32.gmra.mrb[0].mxu0 %v393
        %v1031 = vpop.f32.mrb[0].mxu0
        %v1032 = vadd.f32 %v868, %v1031
        %v1033 = vpop.f32.mrb[0].mxu0
        %1034 = vmatprep.mubr.f32.mxu0 0.0
        %1035 = vmatmul.mubr.f32.gmra.mrb[0].mxu0 %v394
        %v1036 = vpop.f32.mrb[0].mxu0
        %v1037 = vadd.f32 %v868, %v1036
        %v1038 = vpop.f32.mrb[0].mxu0
        %1039 = vmatprep.mubr.f32.mxu0 0.0
        %1040 = vmatmul.mubr.f32.gmra.mrb[0].mxu0 %v395
        %v1041 = vpop.f32.mrb[0].mxu0
        %v1042 = vadd.f32 %v868, %v1041
        %v1043 = vpop.f32.mrb[0].mxu0
        %1044 = vmatprep.mubr.f32.mxu0 0.0
        %1045 = vmatmul.mubr.f32.gmra.mrb[0].mxu0 %v396
        %v1046 = vpop.f32.mrb[0].mxu0
        %v1047 = vadd.f32 %v868, %v1046
        %v1048 = vpop.f32.mrb[0].mxu0
        %1049 = vmatprep.mubr.f32.mxu0 0.0
        %1050 = vmatmul.mubr.f32.gmra.mrb[0].mxu0 %v397
        %v1051 = vpop.f32.mrb[0].mxu0
        %v1052 = vadd.f32 %v868, %v1051
        %v1053 = vpop.f32.mrb[0].mxu0
        %1054 = vmatprep.mubr.f32.mxu0 0.0
        %1055 = vmatmul.mubr.f32.gmra.mrb[0].mxu0 %v398
        %v1056 = vpop.f32.mrb[0].mxu0
        %v1057 = vadd.f32 %v868, %v1056
        %v1058 = vpop.f32.mrb[0].mxu0
        %1059 = vmatprep.mubr.f32.mxu0 0.0
        %1060 = vmatmul.mubr.f32.gmra.mrb[0].mxu0 %v399
        %v1061 = vpop.f32.mrb[0].mxu0
        %v1062 = vadd.f32 %v868, %v1061
        %v1063 = vpop.f32.mrb[0].mxu0
        %1064 = vmatprep.mubr.f32.mxu0 0.0
        %1065 = vmatmul.mubr.f32.gmra.mrb[0].mxu0 %v400
        %v1066 = vpop.f32.mrb[0].mxu0
        %v1067 = vadd.f32 %v868, %v1066
        %v1068 = vpop.f32.mrb[0].mxu0
        %1069 = vmatprep.mubr.f32.mxu0 0.0
        %1070 = vmatmul.mubr.f32.gmra.mrb[0].mxu0 %v401
        %v1071 = vpop.f32.mrb[0].mxu0
        %v1072 = vadd.f32 %v868, %v1071
        %v1073 = vpop.f32.mrb[0].mxu0
        %1074 = vmatprep.mubr.f32.mxu0 0.0
        %1075 = vmatmul.mubr.f32.gmra.mrb[0].mxu0 %v402
        %v1076 = vpop.f32.mrb[0].mxu0
        %v1077 = vadd.f32 %v868, %v1076
        %v1078 = vpop.f32.mrb[0].mxu0
        %1079 = vmatprep.mubr.f32.mxu0 0.0
        %1080 = vmatmul.mubr.f32.gmra.mrb[0].mxu0 %v403
        %v1081 = vpop.f32.mrb[0].mxu0
        %v1082 = vadd.f32 %v868, %v1081
        %v1083 = vpop.f32.mrb[0].mxu0
        %1084 = vmatprep.mubr.f32.mxu0 0.0
        %1085 = vmatmul.mubr.f32.gmra.mrb[0].mxu0 %v404
        %v1086 = vpop.f32.mrb[0].mxu0
        %v1087 = vadd.f32 %v868, %v1086
        %v1088 = vpop.f32.mrb[0].mxu0
        %1089 = vmatprep.mubr.f32.mxu0 0.0
        %1090 = vmatmul.mubr.f32.gmra.mrb[0].mxu0 %v405
        %v1091 = vpop.f32.mrb[0].mxu0
        %v1092 = vadd.f32 %v868, %v1091
        %v1093 = vpop.f32.mrb[0].mxu0
        %1094 = vdwg.mxu0
        %1095 = vst [vmem:[%s372] sm:$0xff] %v937
        %1096 = vst [vmem:[%s372 + $0x8] sm:$0xff] %v942
        %1097 = vst [vmem:[%s372 + $0x10] sm:$0xff] %v947
        %1098 = vst [vmem:[%s372 + $0x18] sm:$0xff] %v952
        %1099 = vst [vmem:[%s372 + $0x20] sm:$0xff] %v957
        %1100 = vst [vmem:[%s372 + $0x28] sm:$0xff] %v962
        %1101 = vst [vmem:[%s372 + $0x30] sm:$0xff] %v967
        %1102 = vst [vmem:[%s372 + $0x38] sm:$0xff] %v972
        %1103 = vst [vmem:[%s372 + $0x40] sm:$0xff] %v977
        %1104 = vst [vmem:[%s372 + $0x48] sm:$0xff] %v982
        %1105 = vst [vmem:[%s372 + $0x50] sm:$0xff] %v987
        %1106 = vst [vmem:[%s372 + $0x58] sm:$0xff] %v992
        %1107 = vst [vmem:[%s372 + $0x60] sm:$0xff] %v997
        %1108 = vst [vmem:[%s372 + $0x68] sm:$0xff] %v1002
        %1109 = vst [vmem:[%s372 + $0x70] sm:$0xff] %v1007
        %1110 = vst [vmem:[%s372 + $0x78] sm:$0xff] %v1012
        %1111 = vst [vmem:[%s372 + $0x80] sm:$0xff] %v1017
        %1112 = vst [vmem:[%s372 + $0x88] sm:$0xff] %v1022
        %1113 = vst [vmem:[%s372 + $0x90] sm:$0xff] %v1027
        %1114 = vst [vmem:[%s372 + $0x98] sm:$0xff] %v1032
        %1115 = vst [vmem:[%s372 + $0xa0] sm:$0xff] %v1037
        %1116 = vst [vmem:[%s372 + $0xa8] sm:$0xff] %v1042
        %1117 = vst [vmem:[%s372 + $0xb0] sm:$0xff] %v1047
        %1118 = vst [vmem:[%s372 + $0xb8] sm:$0xff] %v1052
        %1119 = vst [vmem:[%s372 + $0xc0] sm:$0xff] %v1057
        %1120 = vst [vmem:[%s372 + $0xc8] sm:$0xff] %v1062
        %1121 = vst [vmem:[%s372 + $0xd0] sm:$0xff] %v1067
        %1122 = vst [vmem:[%s372 + $0xd8] sm:$0xff] %v1072
        %1123 = vst [vmem:[%s372 + $0xe0] sm:$0xff] %v1077
        %1124 = vst [vmem:[%s372 + $0xe8] sm:$0xff] %v1082
        %1125 = vst [vmem:[%s372 + $0xf0] sm:$0xff] %v1087
        %1126 = vst [vmem:[%s372 + $0xf8] sm:$0xff] %v1092
        %s1127 = smul.u32 32, %s27
        %p1128 = scmp.lt.s32.totalorder %s26, 1
        %s1129 = scalar_select %p1128, %s26, 1
        %p1130 = scmp.lt.s32.totalorder %s1127, 31
        %s1131 = scalar_select %p1130, %s1127, 31
        %s1132 = smul.addr %s1129, 32
        %s1133 = sadd.s32 %s1131, %s1132
        %s1134 = smul.addr %s1133, 8
        %s1135 = scalar_lea.vmem %s5, %s1134
        %s1136 = smul.u32 32, %s27
        %p1137 = scmp.lt.s32.totalorder %s26, 1
        %s1138 = scalar_select %p1137, %s26, 1
        %p1139 = scmp.lt.s32.totalorder %s1136, 31
        %s1140 = scalar_select %p1139, %s1136, 31
        %s1141 = smul.addr %s1138, 32
        %s1142 = sadd.s32 %s1140, %s1141
        %s1143 = smul.addr %s1142, 8
        %s1144 = scalar_lea.vmem %s6, %s1143
        %s1145 = smul.u32 32, %s27
        %p1146 = scmp.lt.s32.totalorder %s26, 1
        %s1147 = scalar_select %p1146, %s26, 1
        %p1148 = scmp.lt.s32.totalorder %s1145, 31
        %s1149 = scalar_select %p1148, %s1145, 31
        %s1150 = smul.addr %s1147, 32
        %s1151 = sadd.s32 %s1149, %s1150
        %s1152 = smul.addr %s1151, 8
        %s1153 = scalar_lea.vmem %s7, %s1152
        // Predicated region
        $region45: #{attention_module_forward.2} parent=39 // pred_check
          %p1154 = pneg %p166
        $region46: #{attention_module_forward.2} parent=39 // pred_check_branch
          %1156 = sbr.rel (%p1154) target = $region48
        $region47: #{attention_module_forward.2} parent=39 // pred_region
          %s1157 = smul.u32 32, %s27
        $region48: #{attention_module_forward.2} parent=39 // pred_fallthru
          _
        // Predicated region
        $region49: #{attention_module_forward.2} parent=39 // pred_check
          %p1158 = pneg %p194
        $region50: #{attention_module_forward.2} parent=39 // pred_check_branch
          %1160 = sbr.rel (%p1158) target = $region52
        $region51: #{attention_module_forward.2} parent=39 // pred_region
          %s1161 = smul.u32 32, %s27
        $region52: #{attention_module_forward.2} parent=39 // pred_fallthru
          _
        // Predicated region
        $region53: #{attention_module_forward.2} parent=39 // pred_check
          %p1162 = pneg %p222
        $region54: #{attention_module_forward.2} parent=39 // pred_check_branch
          %1164 = sbr.rel (%p1162) target = $region56
        $region55: #{attention_module_forward.2} parent=39 // pred_region
          %s1165 = smul.u32 32, %s27
        $region56: #{attention_module_forward.2} parent=39 // pred_fallthru
          _
      $region40: #{attention_module_forward.2} parent=5 // pred_fallthru
        _
      %p1166 = scmp.le.s32.totalorder 2, %s17
      // Predicated region
      $region57: #{attention_module_forward.2} parent=5 // pred_check
        %p1167 = pneg %p1166
      $region58: #{attention_module_forward.2} parent=5 // pred_check_branch
        %1169 = sbr.rel (%p1167) target = $region60
      $region59: #{attention_module_forward.2} parent=5 // pred_region
        %s1170 = ssub.s32 %s17, 2
        // Predicated region
        $region61: #{attention_module_forward.2} parent=59 // pred_check
          %p1171 = pneg %p172
        $region62: #{attention_module_forward.2} parent=59 // pred_check_branch
          %1173 = sbr.rel (%p1171) target = $region64
        $region63: #{attention_module_forward.2} parent=59 // pred_region
          %s1174 = smul.u32 32, %s29
          %p1175 = scmp.lt.s32.totalorder %s28, 1
          %s1176 = scalar_select %p1175, %s28, 1
          %p1177 = scmp.lt.s32.totalorder %s1174, 31
          %s1178 = scalar_select %p1177, %s1174, 31
          %s1179 = smul.addr %s1176, 32
          %s1180 = sadd.s32 %s1178, %s1179
          %s1181 = smul.addr %s1180, 8
          %s1182 = scalar_lea.vmem %s5, %s1181
        $region64: #{attention_module_forward.2} parent=59 // pred_fallthru
          _
        // Predicated region
        $region65: #{attention_module_forward.2} parent=59 // pred_check
          %p1183 = pneg %p200
        $region66: #{attention_module_forward.2} parent=59 // pred_check_branch
          %1185 = sbr.rel (%p1183) target = $region68
        $region67: #{attention_module_forward.2} parent=59 // pred_region
          %s1186 = smul.u32 32, %s29
          %p1187 = scmp.lt.s32.totalorder %s28, 1
          %s1188 = scalar_select %p1187, %s28, 1
          %p1189 = scmp.lt.s32.totalorder %s1186, 31
          %s1190 = scalar_select %p1189, %s1186, 31
          %s1191 = smul.addr %s1188, 32
          %s1192 = sadd.s32 %s1190, %s1191
          %s1193 = smul.addr %s1192, 8
          %s1194 = scalar_lea.vmem %s6, %s1193
        $region68: #{attention_module_forward.2} parent=59 // pred_fallthru
          _
        // Predicated region
        $region69: #{attention_module_forward.2} parent=59 // pred_check
          %p1195 = pneg %p228
        $region70: #{attention_module_forward.2} parent=59 // pred_check_branch
          %1197 = sbr.rel (%p1195) target = $region72
        $region71: #{attention_module_forward.2} parent=59 // pred_region
          %s1198 = smul.u32 32, %s29
          %p1199 = scmp.lt.s32.totalorder %s28, 1
          %s1200 = scalar_select %p1199, %s28, 1
          %p1201 = scmp.lt.s32.totalorder %s1198, 31
          %s1202 = scalar_select %p1201, %s1198, 31
          %s1203 = smul.addr %s1200, 32
          %s1204 = sadd.s32 %s1202, %s1203
          %s1205 = smul.addr %s1204, 8
          %s1206 = scalar_lea.vmem %s7, %s1205
        $region72: #{attention_module_forward.2} parent=59 // pred_fallthru
          _
      $region60: #{attention_module_forward.2} parent=5 // pred_fallthru
        _
    $region6: #{attention_module_forward.2} parent=1 // loop_footer
      %s21 = sadd.s32 1, %s17
    $region7: #{attention_module_forward.2} parent=1 // loop_footer_branch
      %16 = sbr.rel target = $region3
    $region8: #{attention_module_forward.2} parent=1 // loop_exit
      _
    %1207 = vsyncpa [#allocation3], 1
    %s1208 = scalar_lea.sflag [#allocation3], 1
    %1209 = vsyncpa %s1208, 1

// kernel: attention_module_forward.3
$region0: #{attention_module_forward.3}
  #allocation0 [shape = 'u32[]', space=smem, size = 0x4, offset = 0x4, fixed_abs, tag = 'smem constant byte address 0x4 - core index']
  #allocation1 [shape = 'u32[144,128]{1,0:T(1,128)}', space=vmem, size = 0x12000, scoped, tag = 'internal scratch']
  #allocation2 [shape = 'f32[128,1]{1,0:T(8,128)}', space=vmem, size = 0x10000, scoped, tag = 'scratch operand']
  #allocation3 [shape = 'f32[128,1]{1,0:T(8,128)}', space=vmem, size = 0x10000, scoped, tag = 'scratch operand']
  #allocation4 [shape = 'f32[128,128]{1,0:T(8,128)}', space=vmem, size = 0x10000, scoped, tag = 'scratch operand']
  %s0 = inlined_call_operand.vmem [shape: f32[2,256,128], index: 0, kind: input, shape index: {}]
  %s1 = inlined_call_operand.vmem [shape: f32[2,256,16], index: 1, kind: input, shape index: {}]
  %s2 = inlined_call_operand.vmem [shape: f32[2,256,16], index: 2, kind: input, shape index: {}]
  %s3 = inlined_call_operand.vmem [shape: f32[2,256,128], index: 3, kind: input, shape index: {}]
  %s4 = inlined_call_operand.hbm [shape: f32[2,256,128], index: 4, kind: output, shape index: {}]
  %s5 = sld [smem:[#allocation0]]
  $region57: #{attention_module_forward.3} parent=0
    _
  %s7 = ssub.s32 1, %s5
  %s8 = scalar_select 0, %s7, %s5
  $region1: #{attention_module_forward.3} parent=0
    #allocation5 [shape = 'u8[131072]{0}', space=vmem, size = 0x20000, scoped, tag = 'output window, operand 0']
    #allocation6 [shape = 's32[2]{0}', space=sflag, size = 0x8, scoped, tag = 'scoped memory for attention_module_forward.3']
    %9 = vsyncpa [#allocation6], 0
    %s10 = scalar_lea.sflag [#allocation6], 1
    %11 = vsyncpa %s10, 0
    loop: start=0, step=1, limit=6
    $region2: #{attention_module_forward.3} parent=1 // loop_pre_header
      _
    $region3: #{attention_module_forward.3} parent=1 // loop_header
      %s13 = sphi 0, %s17
      %p14 = scmp.ge.s32.totalorder %s13, 6
      %s20 = sphi 0, %s39
      %s21 = sphi 0, %s35
      %s22 = sphi 0, %s31
      %s23 = sphi 0, %s20
      %s24 = sphi 0, %s21
      %s25 = sphi 0, %s22
      %s26 = sphi 0, %s23
      %s27 = sphi 0, %s24
      %s28 = sphi 0, %s25
      %s44 = sphi 0, %s46
      %s47 = sphi 0, %s44
      %s48 = sphi 0, %s47
      %s64 = sphi 0, %s48
      %s72 = sphi 0, %s74
      %s75 = sphi 0, %s72
      %s76 = sphi 0, %s75
      %s92 = sphi 0, %s76
      %s100 = sphi 0, %s102
      %s103 = sphi 0, %s100
      %s104 = sphi 0, %s103
      %s120 = sphi 0, %s104
      %s128 = sphi 0, %s130
      %s131 = sphi 0, %s128
      %s132 = sphi 0, %s131
      %s148 = sphi 0, %s132
      %s156 = sphi 0, %s158
      %s159 = sphi 0, %s156
      %s160 = sphi 0, %s159
      %s176 = sphi 0, %s160
    $region4: #{attention_module_forward.3} parent=1 // loop_header_branch
      %16 = sbr.rel (%p14) target = $region8
    $region5: #{attention_module_forward.3} parent=1 // loop_body
      %s18 = ssub.s32 %s13, 1
      %s19 = ssub.s32 %s13, 2
      %s29 = sadd.s32 1, %s22
      %p30 = scmp.ge.s32.totalorder %s29, 1
      %s31 = scalar_select %p30, 0, %s29
      %s32 = sadd.s32 1, %s21
      %s33 = scalar_select %p30, %s32, %s21
      %p34 = scmp.ge.s32.totalorder %s33, 2
      %s35 = scalar_select %p34, 0, %s33
      %s36 = sadd.s32 1, %s20
      %s37 = scalar_select %p34, %s36, %s20
      %p38 = scmp.ge.s32.totalorder %s37, 2
      %s39 = scalar_select %p38, 0, %s37
      %s40 = ssub.s32 %s20, %s39
      %s41 = ssub.s32 %s21, %s35
      %s42 = sor.u32 %s40, %s41
      %p43 = scmp.eq.s32.totalorder %s42, 0
      %s45 = sadd.s32 %s44, 1
      %s46 = scalar_select %p43, %s44, %s45
      %p49 = pneg %p43
      %p50 = scmp.eq.s32.totalorder %s13, 3
      %p51 = por %p49, %p50
      %p52 = scmp.ne.s32.totalorder %s44, %s47
      %p53 = scmp.eq.s32.totalorder %s13, 0
      %p54 = por %p52, %p53
      %p55 = scmp.ne.s32.totalorder %s44, %s47
      %p56 = scmp.eq.s32.totalorder %s18, 3
      %p57 = por %p55, %p56
      %p58 = scmp.ne.s32.totalorder %s47, %s48
      %p59 = scmp.eq.s32.totalorder %s18, 0
      %p60 = por %p58, %p59
      %p61 = scmp.ne.s32.totalorder %s47, %s48
      %p62 = scmp.eq.s32.totalorder %s19, 3
      %p63 = por %p61, %p62
      %p65 = scmp.ne.s32.totalorder %s48, %s64
      %p66 = scmp.eq.s32.totalorder %s19, 0
      %p67 = por %p65, %p66
      %s68 = ssub.s32 %s20, %s39
      %s69 = ssub.s32 %s21, %s35
      %s70 = sor.u32 %s68, %s69
      %p71 = scmp.eq.s32.totalorder %s70, 0
      %s73 = sadd.s32 %s72, 1
      %s74 = scalar_select %p71, %s72, %s73
      %p77 = pneg %p71
      %p78 = scmp.eq.s32.totalorder %s13, 3
      %p79 = por %p77, %p78
      %p80 = scmp.ne.s32.totalorder %s72, %s75
      %p81 = scmp.eq.s32.totalorder %s13, 0
      %p82 = por %p80, %p81
      %p83 = scmp.ne.s32.totalorder %s72, %s75
      %p84 = scmp.eq.s32.totalorder %s18, 3
      %p85 = por %p83, %p84
      %p86 = scmp.ne.s32.totalorder %s75, %s76
      %p87 = scmp.eq.s32.totalorder %s18, 0
      %p88 = por %p86, %p87
      %p89 = scmp.ne.s32.totalorder %s75, %s76
      %p90 = scmp.eq.s32.totalorder %s19, 3
      %p91 = por %p89, %p90
      %p93 = scmp.ne.s32.totalorder %s76, %s92
      %p94 = scmp.eq.s32.totalorder %s19, 0
      %p95 = por %p93, %p94
      %s96 = ssub.s32 %s20, %s39
      %s97 = ssub.s32 %s22, %s31
      %s98 = sor.u32 %s96, %s97
      %p99 = scmp.eq.s32.totalorder %s98, 0
      %s101 = sadd.s32 %s100, 1
      %s102 = scalar_select %p99, %s100, %s101
      %p105 = pneg %p99
      %p106 = scmp.eq.s32.totalorder %s13, 3
      %p107 = por %p105, %p106
      %p108 = scmp.ne.s32.totalorder %s100, %s103
      %p109 = scmp.eq.s32.totalorder %s13, 0
      %p110 = por %p108, %p109
      %p111 = scmp.ne.s32.totalorder %s100, %s103
      %p112 = scmp.eq.s32.totalorder %s18, 3
      %p113 = por %p111, %p112
      %p114 = scmp.ne.s32.totalorder %s103, %s104
      %p115 = scmp.eq.s32.totalorder %s18, 0
      %p116 = por %p114, %p115
      %p117 = scmp.ne.s32.totalorder %s103, %s104
      %p118 = scmp.eq.s32.totalorder %s19, 3
      %p119 = por %p117, %p118
      %p121 = scmp.ne.s32.totalorder %s104, %s120
      %p122 = scmp.eq.s32.totalorder %s19, 0
      %p123 = por %p121, %p122
      %s124 = ssub.s32 %s20, %s39
      %s125 = ssub.s32 %s22, %s31
      %s126 = sor.u32 %s124, %s125
      %p127 = scmp.eq.s32.totalorder %s126, 0
      %s129 = sadd.s32 %s128, 1
      %s130 = scalar_select %p127, %s128, %s129
      %p133 = pneg %p127
      %p134 = scmp.eq.s32.totalorder %s13, 3
      %p135 = por %p133, %p134
      %p136 = scmp.ne.s32.totalorder %s128, %s131
      %p137 = scmp.eq.s32.totalorder %s13, 0
      %p138 = por %p136, %p137
      %p139 = scmp.ne.s32.totalorder %s128, %s131
      %p140 = scmp.eq.s32.totalorder %s18, 3
      %p141 = por %p139, %p140
      %p142 = scmp.ne.s32.totalorder %s131, %s132
      %p143 = scmp.eq.s32.totalorder %s18, 0
      %p144 = por %p142, %p143
      %p145 = scmp.ne.s32.totalorder %s131, %s132
      %p146 = scmp.eq.s32.totalorder %s19, 3
      %p147 = por %p145, %p146
      %p149 = scmp.ne.s32.totalorder %s132, %s148
      %p150 = scmp.eq.s32.totalorder %s19, 0
      %p151 = por %p149, %p150
      %s152 = ssub.s32 %s20, %s39
      %s153 = ssub.s32 %s21, %s35
      %s154 = sor.u32 %s152, %s153
      %p155 = scmp.eq.s32.totalorder %s154, 0
      %s157 = sadd.s32 %s156, 1
      %s158 = scalar_select %p155, %s156, %s157
      %p161 = pneg %p155
      %p162 = scmp.eq.s32.totalorder %s13, 3
      %p163 = por %p161, %p162
      %p164 = scmp.ne.s32.totalorder %s156, %s159
      %p165 = scmp.eq.s32.totalorder %s13, 0
      %p166 = por %p164, %p165
      %p167 = scmp.ne.s32.totalorder %s156, %s159
      %p168 = scmp.eq.s32.totalorder %s18, 3
      %p169 = por %p167, %p168
      %p170 = scmp.ne.s32.totalorder %s159, %s160
      %p171 = scmp.eq.s32.totalorder %s18, 0
      %p172 = por %p170, %p171
      %p173 = scmp.ne.s32.totalorder %s159, %s160
      %p174 = scmp.eq.s32.totalorder %s19, 3
      %p175 = por %p173, %p174
      %p177 = scmp.ne.s32.totalorder %s160, %s176
      %p178 = scmp.eq.s32.totalorder %s19, 0
      %p179 = por %p177, %p178
      %p180 = scmp.le.s32.totalorder 1, %s13
      %p181 = scmp.lt.s32.totalorder %s13, 5
      %p182 = pnand %p180, %p181
      %p183 = pneg %p182
      // Predicated region
      $region9: #{attention_module_forward.3} parent=5 // pred_check
        _
      $region10: #{attention_module_forward.3} parent=5 // pred_check_branch
        %185 = sbr.rel (%p182) target = $region12
      $region11: #{attention_module_forward.3} parent=5 // pred_region
        %s186 = ssub.s32 %s13, 1
      $region12: #{attention_module_forward.3} parent=5 // pred_fallthru
        _
      %p187 = scmp.lt.s32.totalorder %s13, 4
      // Predicated region
      $region13: #{attention_module_forward.3} parent=5 // pred_check
        %p188 = pneg %p187
      $region14: #{attention_module_forward.3} parent=5 // pred_check_branch
        %190 = sbr.rel (%p188) target = $region16
      $region15: #{attention_module_forward.3} parent=5 // pred_region
        // Predicated region
        $region17: #{attention_module_forward.3} parent=15 // pred_check
          %p191 = pneg %p54
        $region18: #{attention_module_forward.3} parent=15 // pred_check_branch
          %193 = sbr.rel (%p191) target = $region20
        $region19: #{attention_module_forward.3} parent=15 // pred_region
          %s194 = smul.u32 16, %s21
          %p195 = scmp.lt.s32.totalorder %s20, 1
          %s196 = scalar_select %p195, %s20, 1
          %p197 = scmp.lt.s32.totalorder %s194, 31
          %s198 = scalar_select %p197, %s194, 31
          %s199 = smul.addr %s196, 32
          %s200 = sadd.s32 %s198, %s199
          %s201 = smul.addr %s200, 8
          %s202 = scalar_lea.vmem %s0, %s201
          %s203 = smul.u32 16, %s21
        $region20: #{attention_module_forward.3} parent=15 // pred_fallthru
          _
        // Predicated region
        $region21: #{attention_module_forward.3} parent=15 // pred_check
          %p204 = pneg %p82
        $region22: #{attention_module_forward.3} parent=15 // pred_check_branch
          %206 = sbr.rel (%p204) target = $region24
        $region23: #{attention_module_forward.3} parent=15 // pred_region
          %s207 = smul.u32 16, %s21
          %p208 = scmp.lt.s32.totalorder %s20, 1
          %s209 = scalar_select %p208, %s20, 1
          %p210 = scmp.lt.s32.totalorder %s207, 31
          %s211 = scalar_select %p210, %s207, 31
          %s212 = smul.addr %s209, 32
          %s213 = sadd.s32 %s211, %s212
          %s214 = smul.addr %s213, 8
          %s215 = scalar_lea.vmem %s1, %s214
          %s216 = smul.u32 16, %s21
        $region24: #{attention_module_forward.3} parent=15 // pred_fallthru
          _
        // Predicated region
        $region25: #{attention_module_forward.3} parent=15 // pred_check
          %p217 = pneg %p110
        $region26: #{attention_module_forward.3} parent=15 // pred_check_branch
          %219 = sbr.rel (%p217) target = $region28
        $region27: #{attention_module_forward.3} parent=15 // pred_region
          %s220 = smul.u32 32, %s22
          %p221 = scmp.lt.s32.totalorder %s20, 1
          %s222 = scalar_select %p221, %s20, 1
          %p223 = scmp.lt.s32.totalorder %s220, 31
          %s224 = scalar_select %p223, %s220, 31
          %s225 = smul.addr %s222, 32
          %s226 = sadd.s32 %s224, %s225
          %s227 = smul.addr %s226, 8
          %s228 = scalar_lea.vmem %s2, %s227
          %s229 = smul.u32 32, %s22
        $region28: #{attention_module_forward.3} parent=15 // pred_fallthru
          _
        // Predicated region
        $region29: #{attention_module_forward.3} parent=15 // pred_check
          %p230 = pneg %p138
        $region30: #{attention_module_forward.3} parent=15 // pred_check_branch
          %232 = sbr.rel (%p230) target = $region32
        $region31: #{attention_module_forward.3} parent=15 // pred_region
          %s233 = smul.u32 32, %s22
          %p234 = scmp.lt.s32.totalorder %s20, 1
          %s235 = scalar_select %p234, %s20, 1
          %p236 = scmp.lt.s32.totalorder %s233, 31
          %s237 = scalar_select %p236, %s233, 31
          %s238 = smul.addr %s235, 32
          %s239 = sadd.s32 %s237, %s238
          %s240 = smul.addr %s239, 8
          %s241 = scalar_lea.vmem %s3, %s240
          %s242 = smul.u32 32, %s22
        $region32: #{attention_module_forward.3} parent=15 // pred_fallthru
          _
      $region16: #{attention_module_forward.3} parent=5 // pred_fallthru
        _
      %p243 = scmp.le.s32.totalorder 1, %s13
      %p244 = scmp.lt.s32.totalorder %s13, 5
      %p245 = pnand %p243, %p244
      %p246 = pneg %p245
      // Predicated region
      $region33: #{attention_module_forward.3} parent=5 // pred_check
        _
      $region34: #{attention_module_forward.3} parent=5 // pred_check_branch
        %248 = sbr.rel (%p245) target = $region36
      $region35: #{attention_module_forward.3} parent=5 // pred_region
        %s249 = ssub.s32 %s13, 1
        %s250 = smul.u32 16, %s24
        %p251 = scmp.lt.s32.totalorder %s23, 1
        %s252 = scalar_select %p251, %s23, 1
        %p253 = scmp.lt.s32.totalorder %s250, 31
        %s254 = scalar_select %p253, %s250, 31
        %s255 = smul.addr %s252, 32
        %s256 = sadd.s32 %s254, %s255
        %s257 = smul.addr %s256, 8
        %s258 = scalar_lea.vmem %s0, %s257
        %p259 = pneg %p60
        %p260 = pneg %p57
        %s261 = smul.u32 16, %s24
        %p262 = scmp.lt.s32.totalorder %s23, 1
        %s263 = scalar_select %p262, %s23, 1
        %p264 = scmp.lt.s32.totalorder %s261, 31
        %s265 = scalar_select %p264, %s261, 31
        %s266 = smul.addr %s263, 32
        %s267 = sadd.s32 %s265, %s266
        %s268 = smul.addr %s267, 8
        %s269 = scalar_lea.vmem %s1, %s268
        %p270 = pneg %p88
        %p271 = pneg %p85
        %s272 = smul.u32 32, %s25
        %p273 = scmp.lt.s32.totalorder %s23, 1
        %s274 = scalar_select %p273, %s23, 1
        %p275 = scmp.lt.s32.totalorder %s272, 31
        %s276 = scalar_select %p275, %s272, 31
        %s277 = smul.addr %s274, 32
        %s278 = sadd.s32 %s276, %s277
        %s279 = smul.addr %s278, 8
        %s280 = scalar_lea.vmem %s2, %s279
        %p281 = pneg %p116
        %p282 = pneg %p113
        %s283 = smul.u32 32, %s25
        %p284 = scmp.lt.s32.totalorder %s23, 1
        %s285 = scalar_select %p284, %s23, 1
        %p286 = scmp.lt.s32.totalorder %s283, 31
        %s287 = scalar_select %p286, %s283, 31
        %s288 = smul.addr %s285, 32
        %s289 = sadd.s32 %s287, %s288
        %s290 = smul.addr %s289, 8
        %s291 = scalar_lea.vmem %s3, %s290
        %p292 = pneg %p144
        %p293 = pneg %p141
        %p294 = pneg %p172
        %p295 = pneg %p169
        %s296 = sand.u32 %s159, 1
        %s297 = scalar_lea.sflag [#allocation6], %s296
        %s298 = sand.u32 %s159, 1
        %s299 = smul.addr %s298, 128
        %s300 = scalar_lea.vmem [#allocation5], %s299
        %s301 = smul.u32 16, %s24
        %p302 = scmp.lt.s32.totalorder %s23, 1
        %s303 = scalar_select %p302, %s23, 1
        %p304 = scmp.lt.s32.totalorder %s301, 31
        %s305 = scalar_select %p304, %s301, 31
        %s306 = smul.addr %s303, 32
        %s307 = sadd.s32 %s305, %s306
        %s308 = smul.addr %s307, 8
        %s309 = scalar_lea.vmem %s0, %s308
        %s310 = smul.u32 16, %s24
        %s311 = smul.u32 16, %s24
        %p312 = scmp.lt.s32.totalorder %s23, 1
        %s313 = scalar_select %p312, %s23, 1
        %p314 = scmp.lt.s32.totalorder %s311, 31
        %s315 = scalar_select %p314, %s311, 31
        %s316 = smul.addr %s313, 32
        %s317 = sadd.s32 %s315, %s316
        %s318 = smul.addr %s317, 8
        %s319 = scalar_lea.vmem %s1, %s318
        %s320 = smul.u32 16, %s24
        %s321 = smul.u32 32, %s25
        %p322 = scmp.lt.s32.totalorder %s23, 1
        %s323 = scalar_select %p322, %s23, 1
        %p324 = scmp.lt.s32.totalorder %s321, 31
        %s325 = scalar_select %p324, %s321, 31
        %s326 = smul.addr %s323, 32
        %s327 = sadd.s32 %s325, %s326
        %s328 = smul.addr %s327, 8
        %s329 = scalar_lea.vmem %s2, %s328
        %s330 = smul.u32 32, %s25
        %s331 = smul.u32 32, %s25
        %p332 = scmp.lt.s32.totalorder %s23, 1
        %s333 = scalar_select %p332, %s23, 1
        %p334 = scmp.lt.s32.totalorder %s331, 31
        %s335 = scalar_select %p334, %s331, 31
        %s336 = smul.addr %s333, 32
        %s337 = sadd.s32 %s335, %s336
        %s338 = smul.addr %s337, 8
        %s339 = scalar_lea.vmem %s3, %s338
        %s340 = smul.u32 32, %s25
        %s341 = smul.u32 16, %s24
        %p342 = scmp.eq.s32.totalorder %s25, 0
        // Predicated region
        $region37: #{attention_module_forward.3} parent=35 // pred_check
          %p343 = pneg %p342
        $region38: #{attention_module_forward.3} parent=35 // pred_check_branch
          %345 = sbr.rel (%p343) target = $region40
        $region39: #{attention_module_forward.3} parent=35 // pred_region
          %vm346 = vcmask 7168
          %347 = vst.msk [vmem:[#allocation2] sm:$0xff] %vm346, -inf
          %348 = vst.msk [vmem:[#allocation2 + $0x8] sm:$0xff] %vm346, -inf
          %349 = vst.msk [vmem:[#allocation2 + $0x10] sm:$0xff] %vm346, -inf
          %350 = vst.msk [vmem:[#allocation2 + $0x18] sm:$0xff] %vm346, -inf
          %351 = vst.msk [vmem:[#allocation2 + $0x20] sm:$0xff] %vm346, -inf
          %352 = vst.msk [vmem:[#allocation2 + $0x28] sm:$0xff] %vm346, -inf
          %353 = vst.msk [vmem:[#allocation2 + $0x30] sm:$0xff] %vm346, -inf
          %354 = vst.msk [vmem:[#allocation2 + $0x38] sm:$0xff] %vm346, -inf
          %355 = vst.msk [vmem:[#allocation2 + $0x40] sm:$0xff] %vm346, -inf
          %356 = vst.msk [vmem:[#allocation2 + $0x48] sm:$0xff] %vm346, -inf
          %357 = vst.msk [vmem:[#allocation2 + $0x50] sm:$0xff] %vm346, -inf
          %358 = vst.msk [vmem:[#allocation2 + $0x58] sm:$0xff] %vm346, -inf
          %359 = vst.msk [vmem:[#allocation2 + $0x60] sm:$0xff] %vm346, -inf
          %360 = vst.msk [vmem:[#allocation2 + $0x68] sm:$0xff] %vm346, -inf
          %361 = vst.msk [vmem:[#allocation2 + $0x70] sm:$0xff] %vm346, -inf
          %362 = vst.msk [vmem:[#allocation2 + $0x78] sm:$0xff] %vm346, -inf
          %363 = vst.msk [vmem:[#allocation3] sm:$0xff] %vm346, 0.0
          %364 = vst.msk [vmem:[#allocation3 + $0x8] sm:$0xff] %vm346, 0.0
          %365 = vst.msk [vmem:[#allocation3 + $0x10] sm:$0xff] %vm346, 0.0
          %366 = vst.msk [vmem:[#allocation3 + $0x18] sm:$0xff] %vm346, 0.0
          %367 = vst.msk [vmem:[#allocation3 + $0x20] sm:$0xff] %vm346, 0.0
          %368 = vst.msk [vmem:[#allocation3 + $0x28] sm:$0xff] %vm346, 0.0
          %369 = vst.msk [vmem:[#allocation3 + $0x30] sm:$0xff] %vm346, 0.0
          %370 = vst.msk [vmem:[#allocation3 + $0x38] sm:$0xff] %vm346, 0.0
          %371 = vst.msk [vmem:[#allocation3 + $0x40] sm:$0xff] %vm346, 0.0
          %372 = vst.msk [vmem:[#allocation3 + $0x48] sm:$0xff] %vm346, 0.0
          %373 = vst.msk [vmem:[#allocation3 + $0x50] sm:$0xff] %vm346, 0.0
          %374 = vst.msk [vmem:[#allocation3 + $0x58] sm:$0xff] %vm346, 0.0
          %375 = vst.msk [vmem:[#allocation3 + $0x60] sm:$0xff] %vm346, 0.0
          %376 = vst.msk [vmem:[#allocation3 + $0x68] sm:$0xff] %vm346, 0.0
          %377 = vst.msk [vmem:[#allocation3 + $0x70] sm:$0xff] %vm346, 0.0
          %378 = vst.msk [vmem:[#allocation3 + $0x78] sm:$0xff] %vm346, 0.0
          %379 = vst [vmem:[#allocation4] sm:$0xff] 0.0
          %380 = vst [vmem:[#allocation4 + $0x8] sm:$0xff] 0.0
          %381 = vst [vmem:[#allocation4 + $0x10] sm:$0xff] 0.0
          %382 = vst [vmem:[#allocation4 + $0x18] sm:$0xff] 0.0
          %383 = vst [vmem:[#allocation4 + $0x20] sm:$0xff] 0.0
          %384 = vst [vmem:[#allocation4 + $0x28] sm:$0xff] 0.0
          %385 = vst [vmem:[#allocation4 + $0x30] sm:$0xff] 0.0
          %386 = vst [vmem:[#allocation4 + $0x38] sm:$0xff] 0.0
          %387 = vst [vmem:[#allocation4 + $0x40] sm:$0xff] 0.0
          %388 = vst [vmem:[#allocation4 + $0x48] sm:$0xff] 0.0
          %389 = vst [vmem:[#allocation4 + $0x50] sm:$0xff] 0.0
          %390 = vst [vmem:[#allocation4 + $0x58] sm:$0xff] 0.0
          %391 = vst [vmem:[#allocation4 + $0x60] sm:$0xff] 0.0
          %392 = vst [vmem:[#allocation4 + $0x68] sm:$0xff] 0.0
          %393 = vst [vmem:[#allocation4 + $0x70] sm:$0xff] 0.0
          %394 = vst [vmem:[#allocation4 + $0x78] sm:$0xff] 0.0
        $region40: #{attention_module_forward.3} parent=35 // pred_fallthru
          _
        %v395 = vld [vmem:[%s319] sm:$0xff]
        %v396 = vld [vmem:[%s319 + $0x8] sm:$0xff]
        %v397 = vld [vmem:[%s319 + $0x10] sm:$0xff]
        %v398 = vld [vmem:[%s319 + $0x18] sm:$0xff]
        %v399 = vld [vmem:[%s319 + $0x20] sm:$0xff]
        %v400 = vld [vmem:[%s319 + $0x28] sm:$0xff]
        %v401 = vld [vmem:[%s319 + $0x30] sm:$0xff]
        %v402 = vld [vmem:[%s319 + $0x38] sm:$0xff]
        %v403 = vld [vmem:[%s319 + $0x40] sm:$0xff]
        %v404 = vld [vmem:[%s319 + $0x48] sm:$0xff]
        %v405 = vld [vmem:[%s319 + $0x50] sm:$0xff]
        %v406 = vld [vmem:[%s319 + $0x58] sm:$0xff]
        %v407 = vld [vmem:[%s319 + $0x60] sm:$0xff]
        %v408 = vld [vmem:[%s319 + $0x68] sm:$0xff]
        %v409 = vld [vmem:[%s319 + $0x70] sm:$0xff]
        %v410 = vld [vmem:[%s319 + $0x78] sm:$0xff]
        %v411 = vld [vmem:[%s329] sm:$0xff]
        %v412 = vld [vmem:[%s329 + $0x8] sm:$0xff]
        %v413 = vld [vmem:[%s329 + $0x10] sm:$0xff]
        %v414 = vld [vmem:[%s329 + $0x18] sm:$0xff]
        %v415 = vld [vmem:[%s329 + $0x20] sm:$0xff]
        %v416 = vld [vmem:[%s329 + $0x28] sm:$0xff]
        %v417 = vld [vmem:[%s329 + $0x30] sm:$0xff]
        %v418 = vld [vmem:[%s329 + $0x38] sm:$0xff]
        %v419 = vld [vmem:[%s329 + $0x40] sm:$0xff]
        %v420 = vld [vmem:[%s329 + $0x48] sm:$0xff]
        %v421 = vld [vmem:[%s329 + $0x50] sm:$0xff]
        %v422 = vld [vmem:[%s329 + $0x58] sm:$0xff]
        %v423 = vld [vmem:[%s329 + $0x60] sm:$0xff]
        %v424 = vld [vmem:[%s329 + $0x68] sm:$0xff]
        %v425 = vld [vmem:[%s329 + $0x70] sm:$0xff]
        %v426 = vld [vmem:[%s329 + $0x78] sm:$0xff]
        %v427 = vld [vmem:[%s329 + $0x80] sm:$0xff]
        %v428 = vld [vmem:[%s329 + $0x88] sm:$0xff]
        %v429 = vld [vmem:[%s329 + $0x90] sm:$0xff]
        %v430 = vld [vmem:[%s329 + $0x98] sm:$0xff]
        %v431 = vld [vmem:[%s329 + $0xa0] sm:$0xff]
        %v432 = vld [vmem:[%s329 + $0xa8] sm:$0xff]
        %v433 = vld [vmem:[%s329 + $0xb0] sm:$0xff]
        %v434 = vld [vmem:[%s329 + $0xb8] sm:$0xff]
        %v435 = vld [vmem:[%s329 + $0xc0] sm:$0xff]
        %v436 = vld [vmem:[%s329 + $0xc8] sm:$0xff]
        %v437 = vld [vmem:[%s329 + $0xd0] sm:$0xff]
        %v438 = vld [vmem:[%s329 + $0xd8] sm:$0xff]
        %v439 = vld [vmem:[%s329 + $0xe0] sm:$0xff]
        %v440 = vld [vmem:[%s329 + $0xe8] sm:$0xff]
        %v441 = vld [vmem:[%s329 + $0xf0] sm:$0xff]
        %v442 = vld [vmem:[%s329 + $0xf8] sm:$0xff]
        %v443 = vld [vmem:[%s339] sm:$0xff]
        %v444 = vld [vmem:[%s339 + $0x8] sm:$0xff]
        %v445 = vld [vmem:[%s339 + $0x10] sm:$0xff]
        %v446 = vld [vmem:[%s339 + $0x18] sm:$0xff]
        %v447 = vld [vmem:[%s339 + $0x20] sm:$0xff]
        %v448 = vld [vmem:[%s339 + $0x28] sm:$0xff]
        %v449 = vld [vmem:[%s339 + $0x30] sm:$0xff]
        %v450 = vld [vmem:[%s339 + $0x38] sm:$0xff]
        %v451 = vld [vmem:[%s339 + $0x40] sm:$0xff]
        %v452 = vld [vmem:[%s339 + $0x48] sm:$0xff]
        %v453 = vld [vmem:[%s339 + $0x50] sm:$0xff]
        %v454 = vld [vmem:[%s339 + $0x58] sm:$0xff]
        %v455 = vld [vmem:[%s339 + $0x60] sm:$0xff]
        %v456 = vld [vmem:[%s339 + $0x68] sm:$0xff]
        %v457 = vld [vmem:[%s339 + $0x70] sm:$0xff]
        %v458 = vld [vmem:[%s339 + $0x78] sm:$0xff]
        %v459 = vld [vmem:[%s339 + $0x80] sm:$0xff]
        %v460 = vld [vmem:[%s339 + $0x88] sm:$0xff]
        %v461 = vld [vmem:[%s339 + $0x90] sm:$0xff]
        %v462 = vld [vmem:[%s339 + $0x98] sm:$0xff]
        %v463 = vld [vmem:[%s339 + $0xa0] sm:$0xff]
        %v464 = vld [vmem:[%s339 + $0xa8] sm:$0xff]
        %v465 = vld [vmem:[%s339 + $0xb0] sm:$0xff]
        %v466 = vld [vmem:[%s339 + $0xb8] sm:$0xff]
        %v467 = vld [vmem:[%s339 + $0xc0] sm:$0xff]
        %v468 = vld [vmem:[%s339 + $0xc8] sm:$0xff]
        %v469 = vld [vmem:[%s339 + $0xd0] sm:$0xff]
        %v470 = vld [vmem:[%s339 + $0xd8] sm:$0xff]
        %v471 = vld [vmem:[%s339 + $0xe0] sm:$0xff]
        %v472 = vld [vmem:[%s339 + $0xe8] sm:$0xff]
        %v473 = vld [vmem:[%s339 + $0xf0] sm:$0xff]
        %v474 = vld [vmem:[%s339 + $0xf8] sm:$0xff]
        %vm475 = vcmask 130048
        %v477 = vsel %vm475, %v395, 0
        %v480 = vsel %vm475, %v396, 0
        %v483 = vsel %vm475, %v397, 0
        %v486 = vsel %vm475, %v398, 0
        %v489 = vsel %vm475, %v399, 0
        %v492 = vsel %vm475, %v400, 0
        %v495 = vsel %vm475, %v401, 0
        %v498 = vsel %vm475, %v402, 0
        %v501 = vsel %vm475, %v403, 0
        %v504 = vsel %vm475, %v404, 0
        %v507 = vsel %vm475, %v405, 0
        %v510 = vsel %vm475, %v406, 0
        %v513 = vsel %vm475, %v407, 0
        %v516 = vsel %vm475, %v408, 0
        %v519 = vsel %vm475, %v409, 0
        %v522 = vsel %vm475, %v410, 0
        %v525 = vsel %vm475, %v411, 0
        %v528 = vsel %vm475, %v412, 0
        %v531 = vsel %vm475, %v413, 0
        %v534 = vsel %vm475, %v414, 0
        %v537 = vsel %vm475, %v415, 0
        %v540 = vsel %vm475, %v416, 0
        %v543 = vsel %vm475, %v417, 0
        %v546 = vsel %vm475, %v418, 0
        %v549 = vsel %vm475, %v419, 0
        %v552 = vsel %vm475, %v420, 0
        %v555 = vsel %vm475, %v421, 0
        %v558 = vsel %vm475, %v422, 0
        %v561 = vsel %vm475, %v423, 0
        %v564 = vsel %vm475, %v424, 0
        %v567 = vsel %vm475, %v425, 0
        %v570 = vsel %vm475, %v426, 0
        %v573 = vsel %vm475, %v427, 0
        %v576 = vsel %vm475, %v428, 0
        %v579 = vsel %vm475, %v429, 0
        %v582 = vsel %vm475, %v430, 0
        %v585 = vsel %vm475, %v431, 0
        %v588 = vsel %vm475, %v432, 0
        %v591 = vsel %vm475, %v433, 0
        %v594 = vsel %vm475, %v434, 0
        %v597 = vsel %vm475, %v435, 0
        %v600 = vsel %vm475, %v436, 0
        %v603 = vsel %vm475, %v437, 0
        %v606 = vsel %vm475, %v438, 0
        %v609 = vsel %vm475, %v439, 0
        %v612 = vsel %vm475, %v440, 0
        %v615 = vsel %vm475, %v441, 0
        %v618 = vsel %vm475, %v442, 0
        %620 = vmatprep.subr.mxu0 0.0
        %621 = vmatpush1.xpose.msra.mxu0 %v525
        %622 = vmatprep.subr.mxu0 0.0
        %623 = vmatpush1.xpose.msra.mxu0 %v528
        %624 = vmatprep.subr.mxu0 0.0
        %625 = vmatpush1.xpose.msra.mxu0 %v531
        %626 = vmatprep.subr.mxu0 0.0
        %627 = vmatpush1.xpose.msra.mxu0 %v534
        %628 = vmatprep.subr.mxu0 0.0
        %629 = vmatpush1.xpose.msra.mxu0 %v537
        %630 = vmatprep.subr.mxu0 0.0
        %631 = vmatpush1.xpose.msra.mxu0 %v540
        %632 = vmatprep.subr.mxu0 0.0
        %633 = vmatpush1.xpose.msra.mxu0 %v543
        %634 = vmatprep.subr.mxu0 0.0
        %635 = vmatpush1.xpose.msra.mxu0 %v546
        %636 = vmatprep.subr.mxu0 0.0
        %637 = vmatpush1.xpose.msra.mxu0 %v549
        %638 = vmatprep.subr.mxu0 0.0
        %639 = vmatpush1.xpose.msra.mxu0 %v552
        %640 = vmatprep.subr.mxu0 0.0
        %641 = vmatpush1.xpose.msra.mxu0 %v555
        %642 = vmatprep.subr.mxu0 0.0
        %643 = vmatpush1.xpose.msra.mxu0 %v558
        %644 = vmatprep.subr.mxu0 0.0
        %645 = vmatpush1.xpose.msra.mxu0 %v561
        %646 = vmatprep.subr.mxu0 0.0
        %647 = vmatpush1.xpose.msra.mxu0 %v564
        %648 = vmatprep.subr.mxu0 0.0
        %649 = vmatpush1.xpose.msra.mxu0 %v567
        %650 = vmatprep.subr.mxu0 0.0
        %651 = vmatpush1.xpose.msra.mxu0 %v570
        %652 = vmatprep.subr.mxu0 0.0
        %653 = vmatpush1.xpose.msra.mxu0 %v573
        %654 = vmatprep.subr.mxu0 0.0
        %655 = vmatpush1.xpose.msra.mxu0 %v576
        %656 = vmatprep.subr.mxu0 0.0
        %657 = vmatpush1.xpose.msra.mxu0 %v579
        %658 = vmatprep.subr.mxu0 0.0
        %659 = vmatpush1.xpose.msra.mxu0 %v582
        %660 = vmatprep.subr.mxu0 0.0
        %661 = vmatpush1.xpose.msra.mxu0 %v585
        %662 = vmatprep.subr.mxu0 0.0
        %663 = vmatpush1.xpose.msra.mxu0 %v588
        %664 = vmatprep.subr.mxu0 0.0
        %665 = vmatpush1.xpose.msra.mxu0 %v591
        %666 = vmatprep.subr.mxu0 0.0
        %667 = vmatpush1.xpose.msra.mxu0 %v594
        %668 = vmatprep.subr.mxu0 0.0
        %669 = vmatpush1.xpose.msra.mxu0 %v597
        %670 = vmatprep.subr.mxu0 0.0
        %671 = vmatpush1.xpose.msra.mxu0 %v600
        %672 = vmatprep.subr.mxu0 0.0
        %673 = vmatpush1.xpose.msra.mxu0 %v603
        %674 = vmatprep.subr.mxu0 0.0
        %675 = vmatpush1.xpose.msra.mxu0 %v606
        %676 = vmatprep.subr.mxu0 0.0
        %677 = vmatpush1.xpose.msra.mxu0 %v609
        %678 = vmatprep.subr.mxu0 0.0
        %679 = vmatpush1.xpose.msra.mxu0 %v612
        %680 = vmatprep.subr.mxu0 0.0
        %681 = vmatpush1.xpose.msra.mxu0 %v615
        %682 = vmatprep.subr.mxu0 0.0
        %683 = vmatpush1.xpose.msra.mxu0 %v618
        %684 = vmatprep.mubr.f32.mxu0 0.0
        %685 = vmatmul.mubr.f32.gmra.mrb[0].mxu0 %v477
        %v686 = vpop.f32.mrb[0].mxu0
        %v687 = vadd.f32 0.0, %v686
        %v688 = vpop.f32.mrb[0].mxu0
        %v689 = vadd.f32 0.0, %v688
        %690 = vmatprep.mubr.f32.mxu0 0.0
        %691 = vmatmul.mubr.f32.gmra.mrb[0].mxu0 %v480
        %v692 = vpop.f32.mrb[0].mxu0
        %v693 = vadd.f32 0.0, %v692
        %v694 = vpop.f32.mrb[0].mxu0
        %v695 = vadd.f32 0.0, %v694
        %696 = vmatprep.mubr.f32.mxu0 0.0
        %697 = vmatmul.mubr.f32.gmra.mrb[0].mxu0 %v483
        %v698 = vpop.f32.mrb[0].mxu0
        %v699 = vadd.f32 0.0, %v698
        %v700 = vpop.f32.mrb[0].mxu0
        %v701 = vadd.f32 0.0, %v700
        %702 = vmatprep.mubr.f32.mxu0 0.0
        %703 = vmatmul.mubr.f32.gmra.mrb[0].mxu0 %v486
        %v704 = vpop.f32.mrb[0].mxu0
        %v705 = vadd.f32 0.0, %v704
        %v706 = vpop.f32.mrb[0].mxu0
        %v707 = vadd.f32 0.0, %v706
        %708 = vmatprep.mubr.f32.mxu0 0.0
        %709 = vmatmul.mubr.f32.gmra.mrb[0].mxu0 %v489
        %v710 = vpop.f32.mrb[0].mxu0
        %v711 = vadd.f32 0.0, %v710
        %v712 = vpop.f32.mrb[0].mxu0
        %v713 = vadd.f32 0.0, %v712
        %714 = vmatprep.mubr.f32.mxu0 0.0
        %715 = vmatmul.mubr.f32.gmra.mrb[0].mxu0 %v492
        %v716 = vpop.f32.mrb[0].mxu0
        %v717 = vadd.f32 0.0, %v716
        %v718 = vpop.f32.mrb[0].mxu0
        %v719 = vadd.f32 0.0, %v718
        %720 = vmatprep.mubr.f32.mxu0 0.0
        %721 = vmatmul.mubr.f32.gmra.mrb[0].mxu0 %v495
        %v722 = vpop.f32.mrb[0].mxu0
        %v723 = vadd.f32 0.0, %v722
        %v724 = vpop.f32.mrb[0].mxu0
        %v725 = vadd.f32 0.0, %v724
        %726 = vmatprep.mubr.f32.mxu0 0.0
        %727 = vmatmul.mubr.f32.gmra.mrb[0].mxu0 %v498
        %v728 = vpop.f32.mrb[0].mxu0
        %v729 = vadd.f32 0.0, %v728
        %v730 = vpop.f32.mrb[0].mxu0
        %v731 = vadd.f32 0.0, %v730
        %732 = vmatprep.mubr.f32.mxu0 0.0
        %733 = vmatmul.mubr.f32.gmra.mrb[0].mxu0 %v501
        %v734 = vpop.f32.mrb[0].mxu0
        %v735 = vadd.f32 0.0, %v734
        %v736 = vpop.f32.mrb[0].mxu0
        %v737 = vadd.f32 0.0, %v736
        %738 = vmatprep.mubr.f32.mxu0 0.0
        %739 = vmatmul.mubr.f32.gmra.mrb[0].mxu0 %v504
        %v740 = vpop.f32.mrb[0].mxu0
        %v741 = vadd.f32 0.0, %v740
        %v742 = vpop.f32.mrb[0].mxu0
        %v743 = vadd.f32 0.0, %v742
        %744 = vmatprep.mubr.f32.mxu0 0.0
        %745 = vmatmul.mubr.f32.gmra.mrb[0].mxu0 %v507
        %v746 = vpop.f32.mrb[0].mxu0
        %v747 = vadd.f32 0.0, %v746
        %v748 = vpop.f32.mrb[0].mxu0
        %v749 = vadd.f32 0.0, %v748
        %750 = vmatprep.mubr.f32.mxu0 0.0
        %751 = vmatmul.mubr.f32.gmra.mrb[0].mxu0 %v510
        %v752 = vpop.f32.mrb[0].mxu0
        %v753 = vadd.f32 0.0, %v752
        %v754 = vpop.f32.mrb[0].mxu0
        %v755 = vadd.f32 0.0, %v754
        %756 = vmatprep.mubr.f32.mxu0 0.0
        %757 = vmatmul.mubr.f32.gmra.mrb[0].mxu0 %v513
        %v758 = vpop.f32.mrb[0].mxu0
        %v759 = vadd.f32 0.0, %v758
        %v760 = vpop.f32.mrb[0].mxu0
        %v761 = vadd.f32 0.0, %v760
        %762 = vmatprep.mubr.f32.mxu0 0.0
        %763 = vmatmul.mubr.f32.gmra.mrb[0].mxu0 %v516
        %v764 = vpop.f32.mrb[0].mxu0
        %v765 = vadd.f32 0.0, %v764
        %v766 = vpop.f32.mrb[0].mxu0
        %v767 = vadd.f32 0.0, %v766
        %768 = vmatprep.mubr.f32.mxu0 0.0
        %769 = vmatmul.mubr.f32.gmra.mrb[0].mxu0 %v519
        %v770 = vpop.f32.mrb[0].mxu0
        %v771 = vadd.f32 0.0, %v770
        %v772 = vpop.f32.mrb[0].mxu0
        %v773 = vadd.f32 0.0, %v772
        %774 = vmatprep.mubr.f32.mxu0 0.0
        %775 = vmatmul.mubr.f32.gmra.mrb[0].mxu0 %v522
        %v776 = vpop.f32.mrb[0].mxu0
        %v777 = vadd.f32 0.0, %v776
        %v778 = vpop.f32.mrb[0].mxu0
        %v779 = vadd.f32 0.0, %v778
        %780 = vdwg.mxu0
        %v781 = vld [vmem:[#allocation2] sm:$0xff]
        %v782 = vld [vmem:[#allocation2 + $0x8] sm:$0xff]
        %v783 = vld [vmem:[#allocation2 + $0x10] sm:$0xff]
        %v784 = vld [vmem:[#allocation2 + $0x18] sm:$0xff]
        %v785 = vld [vmem:[#allocation2 + $0x20] sm:$0xff]
        %v786 = vld [vmem:[#allocation2 + $0x28] sm:$0xff]
        %v787 = vld [vmem:[#allocation2 + $0x30] sm:$0xff]
        %v788 = vld [vmem:[#allocation2 + $0x38] sm:$0xff]
        %v789 = vld [vmem:[#allocation2 + $0x40] sm:$0xff]
        %v790 = vld [vmem:[#allocation2 + $0x48] sm:$0xff]
        %v791 = vld [vmem:[#allocation2 + $0x50] sm:$0xff]
        %v792 = vld [vmem:[#allocation2 + $0x58] sm:$0xff]
        %v793 = vld [vmem:[#allocation2 + $0x60] sm:$0xff]
        %v794 = vld [vmem:[#allocation2 + $0x68] sm:$0xff]
        %v795 = vld [vmem:[#allocation2 + $0x70] sm:$0xff]
        %v796 = vld [vmem:[#allocation2 + $0x78] sm:$0xff]
        %v797 = vmax.f32 %v687, %v689
        %798 = vmax.xlane.f32.xlu0 %v797
        %v799 = vpop.xlane.xlu0 %798
        %v800 = vmax.f32 %v693, %v695
        %801 = vmax.xlane.f32.xlu0 %v800
        %v802 = vpop.xlane.xlu0 %801
        %v803 = vmax.f32 %v699, %v701
        %804 = vmax.xlane.f32.xlu0 %v803
        %v805 = vpop.xlane.xlu0 %804
        %v806 = vmax.f32 %v705, %v707
        %807 = vmax.xlane.f32.xlu0 %v806
        %v808 = vpop.xlane.xlu0 %807
        %v809 = vmax.f32 %v711, %v713
        %810 = vmax.xlane.f32.xlu0 %v809
        %v811 = vpop.xlane.xlu0 %810
        %v812 = vmax.f32 %v717, %v719
        %813 = vmax.xlane.f32.xlu0 %v812
        %v814 = vpop.xlane.xlu0 %813
        %v815 = vmax.f32 %v723, %v725
        %816 = vmax.xlane.f32.xlu0 %v815
        %v817 = vpop.xlane.xlu0 %816
        %v818 = vmax.f32 %v729, %v731
        %819 = vmax.xlane.f32.xlu0 %v818
        %v820 = vpop.xlane.xlu0 %819
        %v821 = vmax.f32 %v735, %v737
        %822 = vmax.xlane.f32.xlu0 %v821
        %v823 = vpop.xlane.xlu0 %822
        %v824 = vmax.f32 %v741, %v743
        %825 = vmax.xlane.f32.xlu0 %v824
        %v826 = vpop.xlane.xlu0 %825
        %v827 = vmax.f32 %v747, %v749
        %828 = vmax.xlane.f32.xlu0 %v827
        %v829 = vpop.xlane.xlu0 %828
        %v830 = vmax.f32 %v753, %v755
        %831 = vmax.xlane.f32.xlu0 %v830
        %v832 = vpop.xlane.xlu0 %831
        %v833 = vmax.f32 %v759, %v761
        %834 = vmax.xlane.f32.xlu0 %v833
        %v835 = vpop.xlane.xlu0 %834
        %v836 = vmax.f32 %v765, %v767
        %837 = vmax.xlane.f32.xlu0 %v836
        %v838 = vpop.xlane.xlu0 %837
        %v839 = vmax.f32 %v771, %v773
        %840 = vmax.xlane.f32.xlu0 %v839
        %v841 = vpop.xlane.xlu0 %840
        %v842 = vmax.f32 %v777, %v779
        %843 = vmax.xlane.f32.xlu0 %v842
        %v844 = vpop.xlane.xlu0 %843
        %v845 = vmax.f32 %v781, %v799
        %v846 = vmax.f32 %v782, %v802
        %v847 = vmax.f32 %v783, %v805
        %v848 = vmax.f32 %v784, %v808
        %v849 = vmax.f32 %v785, %v811
        %v850 = vmax.f32 %v786, %v814
        %v851 = vmax.f32 %v787, %v817
        %v852 = vmax.f32 %v788, %v820
        %v853 = vmax.f32 %v789, %v823
        %v854 = vmax.f32 %v790, %v826
        %v855 = vmax.f32 %v791, %v829
        %v856 = vmax.f32 %v792, %v832
        %v857 = vmax.f32 %v793, %v835
        %v858 = vmax.f32 %v794, %v838
        %v859 = vmax.f32 %v795, %v841
        %v860 = vmax.f32 %v796, %v844
        %v861 = vsub.f32 %v781, %v845
        %v862 = vsub.f32 %v782, %v846
        %v863 = vsub.f32 %v783, %v847
        %v864 = vsub.f32 %v784, %v848
        %v865 = vsub.f32 %v785, %v849
        %v866 = vsub.f32 %v786, %v850
        %v867 = vsub.f32 %v787, %v851
        %v868 = vsub.f32 %v788, %v852
        %v869 = vsub.f32 %v789, %v853
        %v870 = vsub.f32 %v790, %v854
        %v871 = vsub.f32 %v791, %v855
        %v872 = vsub.f32 %v792, %v856
        %v873 = vsub.f32 %v793, %v857
        %v874 = vsub.f32 %v794, %v858
        %v875 = vsub.f32 %v795, %v859
        %v876 = vsub.f32 %v796, %v860
        %v877 = vmul.f32 %v861, 1.442695
        %v878 = vpow.pop %v877
        %v879 = vmul.f32 %v862, 1.442695
        %v880 = vpow.pop %v879
        %v881 = vmul.f32 %v863, 1.442695
        %v882 = vpow.pop %v881
        %v883 = vmul.f32 %v864, 1.442695
        %v884 = vpow.pop %v883
        %v885 = vmul.f32 %v865, 1.442695
        %v886 = vpow.pop %v885
        %v887 = vmul.f32 %v866, 1.442695
        %v888 = vpow.pop %v887
        %v889 = vmul.f32 %v867, 1.442695
        %v890 = vpow.pop %v889
        %v891 = vmul.f32 %v868, 1.442695
        %v892 = vpow.pop %v891
        %v893 = vmul.f32 %v869, 1.442695
        %v894 = vpow.pop %v893
        %v895 = vmul.f32 %v870, 1.442695
        %v896 = vpow.pop %v895
        %v897 = vmul.f32 %v871, 1.442695
        %v898 = vpow.pop %v897
        %v899 = vmul.f32 %v872, 1.442695
        %v900 = vpow.pop %v899
        %v901 = vmul.f32 %v873, 1.442695
        %v902 = vpow.pop %v901
        %v903 = vmul.f32 %v874, 1.442695
        %v904 = vpow.pop %v903
        %v905 = vmul.f32 %v875, 1.442695
        %v906 = vpow.pop %v905
        %v907 = vmul.f32 %v876, 1.442695
        %v908 = vpow.pop %v907
        %910 = vset.pattern.permute.xlu0 0
        %911 = vperm.xlu0 %910, %v845
        %v912 = vpop.permute.xlu0 %911
        %915 = vset.pattern.permute.xlu0 0
        %916 = vperm.xlu0 %915, %v846
        %v917 = vpop.permute.xlu0 %916
        %920 = vset.pattern.permute.xlu0 0
        %921 = vperm.xlu0 %920, %v847
        %v922 = vpop.permute.xlu0 %921
        %925 = vset.pattern.permute.xlu0 0
        %926 = vperm.xlu0 %925, %v848
        %v927 = vpop.permute.xlu0 %926
        %930 = vset.pattern.permute.xlu0 0
        %931 = vperm.xlu0 %930, %v849
        %v932 = vpop.permute.xlu0 %931
        %935 = vset.pattern.permute.xlu0 0
        %936 = vperm.xlu0 %935, %v850
        %v937 = vpop.permute.xlu0 %936
        %940 = vset.pattern.permute.xlu0 0
        %941 = vperm.xlu0 %940, %v851
        %v942 = vpop.permute.xlu0 %941
        %945 = vset.pattern.permute.xlu0 0
        %946 = vperm.xlu0 %945, %v852
        %v947 = vpop.permute.xlu0 %946
        %950 = vset.pattern.permute.xlu0 0
        %951 = vperm.xlu0 %950, %v853
        %v952 = vpop.permute.xlu0 %951
        %955 = vset.pattern.permute.xlu0 0
        %956 = vperm.xlu0 %955, %v854
        %v957 = vpop.permute.xlu0 %956
        %960 = vset.pattern.permute.xlu0 0
        %961 = vperm.xlu0 %960, %v855
        %v962 = vpop.permute.xlu0 %961
        %965 = vset.pattern.permute.xlu0 0
        %966 = vperm.xlu0 %965, %v856
        %v967 = vpop.permute.xlu0 %966
        %970 = vset.pattern.permute.xlu0 0
        %971 = vperm.xlu0 %970, %v857
        %v972 = vpop.permute.xlu0 %971
        %975 = vset.pattern.permute.xlu0 0
        %976 = vperm.xlu0 %975, %v858
        %v977 = vpop.permute.xlu0 %976
        %980 = vset.pattern.permute.xlu0 0
        %981 = vperm.xlu0 %980, %v859
        %v982 = vpop.permute.xlu0 %981
        %985 = vset.pattern.permute.xlu0 0
        %986 = vperm.xlu0 %985, %v860
        %v987 = vpop.permute.xlu0 %986
        %v989 = vsub.f32 %v687, %v912
        %v990 = vsub.f32 %v689, %v912
        %v991 = vsub.f32 %v693, %v917
        %v992 = vsub.f32 %v695, %v917
        %v993 = vsub.f32 %v699, %v922
        %v994 = vsub.f32 %v701, %v922
        %v995 = vsub.f32 %v705, %v927
        %v996 = vsub.f32 %v707, %v927
        %v997 = vsub.f32 %v711, %v932
        %v998 = vsub.f32 %v713, %v932
        %v999 = vsub.f32 %v717, %v937
        %v1000 = vsub.f32 %v719, %v937
        %v1001 = vsub.f32 %v723, %v942
        %v1002 = vsub.f32 %v725, %v942
        %v1003 = vsub.f32 %v729, %v947
        %v1004 = vsub.f32 %v731, %v947
        %v1005 = vsub.f32 %v735, %v952
        %v1006 = vsub.f32 %v737, %v952
        %v1007 = vsub.f32 %v741, %v957
        %v1008 = vsub.f32 %v743, %v957
        %v1009 = vsub.f32 %v747, %v962
        %v1010 = vsub.f32 %v749, %v962
        %v1011 = vsub.f32 %v753, %v967
        %v1012 = vsub.f32 %v755, %v967
        %v1013 = vsub.f32 %v759, %v972
        %v1014 = vsub.f32 %v761, %v972
        %v1015 = vsub.f32 %v765, %v977
        %v1016 = vsub.f32 %v767, %v977
        %v1017 = vsub.f32 %v771, %v982
        %v1018 = vsub.f32 %v773, %v982
        %v1019 = vsub.f32 %v777, %v987
        %v1020 = vsub.f32 %v779, %v987
        %v1021 = vmul.f32 %v989, 1.442695
        %v1022 = vpow.pop %v1021
        %v1023 = vmul.f32 %v990, 1.442695
        %v1024 = vpow.pop %v1023
        %v1025 = vmul.f32 %v991, 1.442695
        %v1026 = vpow.pop %v1025
        %v1027 = vmul.f32 %v992, 1.442695
        %v1028 = vpow.pop %v1027
        %v1029 = vmul.f32 %v993, 1.442695
        %v1030 = vpow.pop %v1029
        %v1031 = vmul.f32 %v994, 1.442695
        %v1032 = vpow.pop %v1031
        %v1033 = vmul.f32 %v995, 1.442695
        %v1034 = vpow.pop %v1033
        %v1035 = vmul.f32 %v996, 1.442695
        %v1036 = vpow.pop %v1035
        %v1037 = vmul.f32 %v997, 1.442695
        %v1038 = vpow.pop %v1037
        %v1039 = vmul.f32 %v998, 1.442695
        %v1040 = vpow.pop %v1039
        %v1041 = vmul.f32 %v999, 1.442695
        %v1042 = vpow.pop %v1041
        %v1043 = vmul.f32 %v1000, 1.442695
        %v1044 = vpow.pop %v1043
        %v1045 = vmul.f32 %v1001, 1.442695
        %v1046 = vpow.pop %v1045
        %v1047 = vmul.f32 %v1002, 1.442695
        %v1048 = vpow.pop %v1047
        %v1049 = vmul.f32 %v1003, 1.442695
        %v1050 = vpow.pop %v1049
        %v1051 = vmul.f32 %v1004, 1.442695
        %v1052 = vpow.pop %v1051
        %v1053 = vmul.f32 %v1005, 1.442695
        %v1054 = vpow.pop %v1053
        %v1055 = vmul.f32 %v1006, 1.442695
        %v1056 = vpow.pop %v1055
        %v1057 = vmul.f32 %v1007, 1.442695
        %v1058 = vpow.pop %v1057
        %v1059 = vmul.f32 %v1008, 1.442695
        %v1060 = vpow.pop %v1059
        %v1061 = vmul.f32 %v1009, 1.442695
        %v1062 = vpow.pop %v1061
        %v1063 = vmul.f32 %v1010, 1.442695
        %v1064 = vpow.pop %v1063
        %v1065 = vmul.f32 %v1011, 1.442695
        %v1066 = vpow.pop %v1065
        %v1067 = vmul.f32 %v1012, 1.442695
        %v1068 = vpow.pop %v1067
        %v1069 = vmul.f32 %v1013, 1.442695
        %v1070 = vpow.pop %v1069
        %v1071 = vmul.f32 %v1014, 1.442695
        %v1072 = vpow.pop %v1071
        %v1073 = vmul.f32 %v1015, 1.442695
        %v1074 = vpow.pop %v1073
        %v1075 = vmul.f32 %v1016, 1.442695
        %v1076 = vpow.pop %v1075
        %v1077 = vmul.f32 %v1017, 1.442695
        %v1078 = vpow.pop %v1077
        %v1079 = vmul.f32 %v1018, 1.442695
        %v1080 = vpow.pop %v1079
        %v1081 = vmul.f32 %v1019, 1.442695
        %v1082 = vpow.pop %v1081
        %v1083 = vmul.f32 %v1020, 1.442695
        %v1084 = vpow.pop %v1083
        %v1085 = vld [vmem:[#allocation3] sm:$0xff]
        %v1086 = vld [vmem:[#allocation3 + $0x8] sm:$0xff]
        %v1087 = vld [vmem:[#allocation3 + $0x10] sm:$0xff]
        %v1088 = vld [vmem:[#allocation3 + $0x18] sm:$0xff]
        %v1089 = vld [vmem:[#allocation3 + $0x20] sm:$0xff]
        %v1090 = vld [vmem:[#allocation3 + $0x28] sm:$0xff]
        %v1091 = vld [vmem:[#allocation3 + $0x30] sm:$0xff]
        %v1092 = vld [vmem:[#allocation3 + $0x38] sm:$0xff]
        %v1093 = vld [vmem:[#allocation3 + $0x40] sm:$0xff]
        %v1094 = vld [vmem:[#allocation3 + $0x48] sm:$0xff]
        %v1095 = vld [vmem:[#allocation3 + $0x50] sm:$0xff]
        %v1096 = vld [vmem:[#allocation3 + $0x58] sm:$0xff]
        %v1097 = vld [vmem:[#allocation3 + $0x60] sm:$0xff]
        %v1098 = vld [vmem:[#allocation3 + $0x68] sm:$0xff]
        %v1099 = vld [vmem:[#allocation3 + $0x70] sm:$0xff]
        %v1100 = vld [vmem:[#allocation3 + $0x78] sm:$0xff]
        %v1101 = vmul.f32 %v878, %v1085
        %v1102 = vmul.f32 %v880, %v1086
        %v1103 = vmul.f32 %v882, %v1087
        %v1104 = vmul.f32 %v884, %v1088
        %v1105 = vmul.f32 %v886, %v1089
        %v1106 = vmul.f32 %v888, %v1090
        %v1107 = vmul.f32 %v890, %v1091
        %v1108 = vmul.f32 %v892, %v1092
        %v1109 = vmul.f32 %v894, %v1093
        %v1110 = vmul.f32 %v896, %v1094
        %v1111 = vmul.f32 %v898, %v1095
        %v1112 = vmul.f32 %v900, %v1096
        %v1113 = vmul.f32 %v902, %v1097
        %v1114 = vmul.f32 %v904, %v1098
        %v1115 = vmul.f32 %v906, %v1099
        %v1116 = vmul.f32 %v908, %v1100
        %v1117 = vadd.f32 %v1022, %v1024
        %1118 = vadd.xlane.f32.xlu0 %v1117
        %v1119 = vpop.xlane.xlu0 %1118
        %v1120 = vadd.f32 %v1026, %v1028
        %1121 = vadd.xlane.f32.xlu0 %v1120
        %v1122 = vpop.xlane.xlu0 %1121
        %v1123 = vadd.f32 %v1030, %v1032
        %1124 = vadd.xlane.f32.xlu0 %v1123
        %v1125 = vpop.xlane.xlu0 %1124
        %v1126 = vadd.f32 %v1034, %v1036
        %1127 = vadd.xlane.f32.xlu0 %v1126
        %v1128 = vpop.xlane.xlu0 %1127
        %v1129 = vadd.f32 %v1038, %v1040
        %1130 = vadd.xlane.f32.xlu0 %v1129
        %v1131 = vpop.xlane.xlu0 %1130
        %v1132 = vadd.f32 %v1042, %v1044
        %1133 = vadd.xlane.f32.xlu0 %v1132
        %v1134 = vpop.xlane.xlu0 %1133
        %v1135 = vadd.f32 %v1046, %v1048
        %1136 = vadd.xlane.f32.xlu0 %v1135
        %v1137 = vpop.xlane.xlu0 %1136
        %v1138 = vadd.f32 %v1050, %v1052
        %1139 = vadd.xlane.f32.xlu0 %v1138
        %v1140 = vpop.xlane.xlu0 %1139
        %v1141 = vadd.f32 %v1054, %v1056
        %1142 = vadd.xlane.f32.xlu0 %v1141
        %v1143 = vpop.xlane.xlu0 %1142
        %v1144 = vadd.f32 %v1058, %v1060
        %1145 = vadd.xlane.f32.xlu0 %v1144
        %v1146 = vpop.xlane.xlu0 %1145
        %v1147 = vadd.f32 %v1062, %v1064
        %1148 = vadd.xlane.f32.xlu0 %v1147
        %v1149 = vpop.xlane.xlu0 %1148
        %v1150 = vadd.f32 %v1066, %v1068
        %1151 = vadd.xlane.f32.xlu0 %v1150
        %v1152 = vpop.xlane.xlu0 %1151
        %v1153 = vadd.f32 %v1070, %v1072
        %1154 = vadd.xlane.f32.xlu0 %v1153
        %v1155 = vpop.xlane.xlu0 %1154
        %v1156 = vadd.f32 %v1074, %v1076
        %1157 = vadd.xlane.f32.xlu0 %v1156
        %v1158 = vpop.xlane.xlu0 %1157
        %v1159 = vadd.f32 %v1078, %v1080
        %1160 = vadd.xlane.f32.xlu0 %v1159
        %v1161 = vpop.xlane.xlu0 %1160
        %v1162 = vadd.f32 %v1082, %v1084
        %1163 = vadd.xlane.f32.xlu0 %v1162
        %v1164 = vpop.xlane.xlu0 %1163
        %v1165 = vadd.f32 %v1101, %v1119
        %v1166 = vadd.f32 %v1102, %v1122
        %v1167 = vadd.f32 %v1103, %v1125
        %v1168 = vadd.f32 %v1104, %v1128
        %v1169 = vadd.f32 %v1105, %v1131
        %v1170 = vadd.f32 %v1106, %v1134
        %v1171 = vadd.f32 %v1107, %v1137
        %v1172 = vadd.f32 %v1108, %v1140
        %v1173 = vadd.f32 %v1109, %v1143
        %v1174 = vadd.f32 %v1110, %v1146
        %v1175 = vadd.f32 %v1111, %v1149
        %v1176 = vadd.f32 %v1112, %v1152
        %v1177 = vadd.f32 %v1113, %v1155
        %v1178 = vadd.f32 %v1114, %v1158
        %v1179 = vadd.f32 %v1115, %v1161
        %v1180 = vadd.f32 %v1116, %v1164
        %vm1181 = vcmask 7168
        %1182 = vst.msk [vmem:[#allocation3] sm:$0xff] %vm1181, %v1165
        %1183 = vst.msk [vmem:[#allocation3 + $0x8] sm:$0xff] %vm1181, %v1166
        %1184 = vst.msk [vmem:[#allocation3 + $0x10] sm:$0xff] %vm1181, %v1167
        %1185 = vst.msk [vmem:[#allocation3 + $0x18] sm:$0xff] %vm1181, %v1168
        %1186 = vst.msk [vmem:[#allocation3 + $0x20] sm:$0xff] %vm1181, %v1169
        %1187 = vst.msk [vmem:[#allocation3 + $0x28] sm:$0xff] %vm1181, %v1170
        %1188 = vst.msk [vmem:[#allocation3 + $0x30] sm:$0xff] %vm1181, %v1171
        %1189 = vst.msk [vmem:[#allocation3 + $0x38] sm:$0xff] %vm1181, %v1172
        %1190 = vst.msk [vmem:[#allocation3 + $0x40] sm:$0xff] %vm1181, %v1173
        %1191 = vst.msk [vmem:[#allocation3 + $0x48] sm:$0xff] %vm1181, %v1174
        %1192 = vst.msk [vmem:[#allocation3 + $0x50] sm:$0xff] %vm1181, %v1175
        %1193 = vst.msk [vmem:[#allocation3 + $0x58] sm:$0xff] %vm1181, %v1176
        %1194 = vst.msk [vmem:[#allocation3 + $0x60] sm:$0xff] %vm1181, %v1177
        %1195 = vst.msk [vmem:[#allocation3 + $0x68] sm:$0xff] %vm1181, %v1178
        %1196 = vst.msk [vmem:[#allocation3 + $0x70] sm:$0xff] %vm1181, %v1179
        %1197 = vst.msk [vmem:[#allocation3 + $0x78] sm:$0xff] %vm1181, %v1180
        %v1198 = vld [vmem:[#allocation4] sm:$0xff]
        %v1199 = vld [vmem:[#allocation4 + $0x8] sm:$0xff]
        %v1200 = vld [vmem:[#allocation4 + $0x10] sm:$0xff]
        %v1201 = vld [vmem:[#allocation4 + $0x18] sm:$0xff]
        %v1202 = vld [vmem:[#allocation4 + $0x20] sm:$0xff]
        %v1203 = vld [vmem:[#allocation4 + $0x28] sm:$0xff]
        %v1204 = vld [vmem:[#allocation4 + $0x30] sm:$0xff]
        %v1205 = vld [vmem:[#allocation4 + $0x38] sm:$0xff]
        %v1206 = vld [vmem:[#allocation4 + $0x40] sm:$0xff]
        %v1207 = vld [vmem:[#allocation4 + $0x48] sm:$0xff]
        %v1208 = vld [vmem:[#allocation4 + $0x50] sm:$0xff]
        %v1209 = vld [vmem:[#allocation4 + $0x58] sm:$0xff]
        %v1210 = vld [vmem:[#allocation4 + $0x60] sm:$0xff]
        %v1211 = vld [vmem:[#allocation4 + $0x68] sm:$0xff]
        %v1212 = vld [vmem:[#allocation4 + $0x70] sm:$0xff]
        %v1213 = vld [vmem:[#allocation4 + $0x78] sm:$0xff]
        %1215 = vset.pattern.permute.xlu0 0
        %1216 = vperm.xlu0 %1215, %v878
        %v1217 = vpop.permute.xlu0 %1216
        %1220 = vset.pattern.permute.xlu0 0
        %1221 = vperm.xlu0 %1220, %v880
        %v1222 = vpop.permute.xlu0 %1221
        %1225 = vset.pattern.permute.xlu0 0
        %1226 = vperm.xlu0 %1225, %v882
        %v1227 = vpop.permute.xlu0 %1226
        %1230 = vset.pattern.permute.xlu0 0
        %1231 = vperm.xlu0 %1230, %v884
        %v1232 = vpop.permute.xlu0 %1231
        %1235 = vset.pattern.permute.xlu0 0
        %1236 = vperm.xlu0 %1235, %v886
        %v1237 = vpop.permute.xlu0 %1236
        %1240 = vset.pattern.permute.xlu0 0
        %1241 = vperm.xlu0 %1240, %v888
        %v1242 = vpop.permute.xlu0 %1241
        %1245 = vset.pattern.permute.xlu0 0
        %1246 = vperm.xlu0 %1245, %v890
        %v1247 = vpop.permute.xlu0 %1246
        %1250 = vset.pattern.permute.xlu0 0
        %1251 = vperm.xlu0 %1250, %v892
        %v1252 = vpop.permute.xlu0 %1251
        %1255 = vset.pattern.permute.xlu0 0
        %1256 = vperm.xlu0 %1255, %v894
        %v1257 = vpop.permute.xlu0 %1256
        %1260 = vset.pattern.permute.xlu0 0
        %1261 = vperm.xlu0 %1260, %v896
        %v1262 = vpop.permute.xlu0 %1261
        %1265 = vset.pattern.permute.xlu0 0
        %1266 = vperm.xlu0 %1265, %v898
        %v1267 = vpop.permute.xlu0 %1266
        %1270 = vset.pattern.permute.xlu0 0
        %1271 = vperm.xlu0 %1270, %v900
        %v1272 = vpop.permute.xlu0 %1271
        %1275 = vset.pattern.permute.xlu0 0
        %1276 = vperm.xlu0 %1275, %v902
        %v1277 = vpop.permute.xlu0 %1276
        %1280 = vset.pattern.permute.xlu0 0
        %1281 = vperm.xlu0 %1280, %v904
        %v1282 = vpop.permute.xlu0 %1281
        %1285 = vset.pattern.permute.xlu0 0
        %1286 = vperm.xlu0 %1285, %v906
        %v1287 = vpop.permute.xlu0 %1286
        %1290 = vset.pattern.permute.xlu0 0
        %1291 = vperm.xlu0 %1290, %v908
        %v1292 = vpop.permute.xlu0 %1291
        %v1294 = vmul.f32 %v1217, %v1198
        %v1295 = vmul.f32 %v1222, %v1199
        %v1296 = vmul.f32 %v1227, %v1200
        %v1297 = vmul.f32 %v1232, %v1201
        %v1298 = vmul.f32 %v1237, %v1202
        %v1299 = vmul.f32 %v1242, %v1203
        %v1300 = vmul.f32 %v1247, %v1204
        %v1301 = vmul.f32 %v1252, %v1205
        %v1302 = vmul.f32 %v1257, %v1206
        %v1303 = vmul.f32 %v1262, %v1207
        %v1304 = vmul.f32 %v1267, %v1208
        %v1305 = vmul.f32 %v1272, %v1209
        %v1306 = vmul.f32 %v1277, %v1210
        %v1307 = vmul.f32 %v1282, %v1211
        %v1308 = vmul.f32 %v1287, %v1212
        %v1309 = vmul.f32 %v1292, %v1213
        %1310 = vmatprep.subr.mxu0 0.0
        %1311 = vmatpush1.msra.mxu0 %v443
        %1312 = vmatprep.subr.mxu0 0.0
        %1313 = vmatpush1.msra.mxu0 %v444
        %1314 = vmatprep.subr.mxu0 0.0
        %1315 = vmatpush1.msra.mxu0 %v445
        %1316 = vmatprep.subr.mxu0 0.0
        %1317 = vmatpush1.msra.mxu0 %v446
        %1318 = vmatprep.subr.mxu0 0.0
        %1319 = vmatpush1.msra.mxu0 %v447
        %1320 = vmatprep.subr.mxu0 0.0
        %1321 = vmatpush1.msra.mxu0 %v448
        %1322 = vmatprep.subr.mxu0 0.0
        %1323 = vmatpush1.msra.mxu0 %v449
        %1324 = vmatprep.subr.mxu0 0.0
        %1325 = vmatpush1.msra.mxu0 %v450
        %1326 = vmatprep.subr.mxu0 0.0
        %1327 = vmatpush1.msra.mxu0 %v451
        %1328 = vmatprep.subr.mxu0 0.0
        %1329 = vmatpush1.msra.mxu0 %v452
        %1330 = vmatprep.subr.mxu0 0.0
        %1331 = vmatpush1.msra.mxu0 %v453
        %1332 = vmatprep.subr.mxu0 0.0
        %1333 = vmatpush1.msra.mxu0 %v454
        %1334 = vmatprep.subr.mxu0 0.0
        %1335 = vmatpush1.msra.mxu0 %v455
        %1336 = vmatprep.subr.mxu0 0.0
        %1337 = vmatpush1.msra.mxu0 %v456
        %1338 = vmatprep.subr.mxu0 0.0
        %1339 = vmatpush1.msra.mxu0 %v457
        %1340 = vmatprep.subr.mxu0 0.0
        %1341 = vmatpush1.msra.mxu0 %v458
        %1342 = vmatprep.subr.mxu0 0.0
        %1343 = vmatpush1.msra.mxu0 %v459
        %1344 = vmatprep.subr.mxu0 0.0
        %1345 = vmatpush1.msra.mxu0 %v460
        %1346 = vmatprep.subr.mxu0 0.0
        %1347 = vmatpush1.msra.mxu0 %v461
        %1348 = vmatprep.subr.mxu0 0.0
        %1349 = vmatpush1.msra.mxu0 %v462
        %1350 = vmatprep.subr.mxu0 0.0
        %1351 = vmatpush1.msra.mxu0 %v463
        %1352 = vmatprep.subr.mxu0 0.0
        %1353 = vmatpush1.msra.mxu0 %v464
        %1354 = vmatprep.subr.mxu0 0.0
        %1355 = vmatpush1.msra.mxu0 %v465
        %1356 = vmatprep.subr.mxu0 0.0
        %1357 = vmatpush1.msra.mxu0 %v466
        %1358 = vmatprep.subr.mxu0 0.0
        %1359 = vmatpush1.msra.mxu0 %v467
        %1360 = vmatprep.subr.mxu0 0.0
        %1361 = vmatpush1.msra.mxu0 %v468
        %1362 = vmatprep.subr.mxu0 0.0
        %1363 = vmatpush1.msra.mxu0 %v469
        %1364 = vmatprep.subr.mxu0 0.0
        %1365 = vmatpush1.msra.mxu0 %v470
        %1366 = vmatprep.subr.mxu0 0.0
        %1367 = vmatpush1.msra.mxu0 %v471
        %1368 = vmatprep.subr.mxu0 0.0
        %1369 = vmatpush1.msra.mxu0 %v472
        %1370 = vmatprep.subr.mxu0 0.0
        %1371 = vmatpush1.msra.mxu0 %v473
        %1372 = vmatprep.subr.mxu0 0.0
        %1373 = vmatpush1.msra.mxu0 %v474
        %1374 = vmatprep.mubr.f32.mxu0 %v1024
        %1375 = vmatmul.mubr.f32.gmra.mrb[0].mxu0 %v1022
        %v1376 = vpop.f32.mrb[0].mxu0
        %v1377 = vadd.f32 0.0, %v1376
        %v1378 = vpop.f32.mrb[0].mxu0
        %1379 = vmatprep.mubr.f32.mxu0 %v1028
        %1380 = vmatmul.mubr.f32.gmra.mrb[0].mxu0 %v1026
        %v1381 = vpop.f32.mrb[0].mxu0
        %v1382 = vadd.f32 0.0, %v1381
        %v1383 = vpop.f32.mrb[0].mxu0
        %1384 = vmatprep.mubr.f32.mxu0 %v1032
        %1385 = vmatmul.mubr.f32.gmra.mrb[0].mxu0 %v1030
        %v1386 = vpop.f32.mrb[0].mxu0
        %v1387 = vadd.f32 0.0, %v1386
        %v1388 = vpop.f32.mrb[0].mxu0
        %1389 = vmatprep.mubr.f32.mxu0 %v1036
        %1390 = vmatmul.mubr.f32.gmra.mrb[0].mxu0 %v1034
        %v1391 = vpop.f32.mrb[0].mxu0
        %v1392 = vadd.f32 0.0, %v1391
        %v1393 = vpop.f32.mrb[0].mxu0
        %1394 = vmatprep.mubr.f32.mxu0 %v1040
        %1395 = vmatmul.mubr.f32.gmra.mrb[0].mxu0 %v1038
        %v1396 = vpop.f32.mrb[0].mxu0
        %v1397 = vadd.f32 0.0, %v1396
        %v1398 = vpop.f32.mrb[0].mxu0
        %1399 = vmatprep.mubr.f32.mxu0 %v1044
        %1400 = vmatmul.mubr.f32.gmra.mrb[0].mxu0 %v1042
        %v1401 = vpop.f32.mrb[0].mxu0
        %v1402 = vadd.f32 0.0, %v1401
        %v1403 = vpop.f32.mrb[0].mxu0
        %1404 = vmatprep.mubr.f32.mxu0 %v1048
        %1405 = vmatmul.mubr.f32.gmra.mrb[0].mxu0 %v1046
        %v1406 = vpop.f32.mrb[0].mxu0
        %v1407 = vadd.f32 0.0, %v1406
        %v1408 = vpop.f32.mrb[0].mxu0
        %1409 = vmatprep.mubr.f32.mxu0 %v1052
        %1410 = vmatmul.mubr.f32.gmra.mrb[0].mxu0 %v1050
        %v1411 = vpop.f32.mrb[0].mxu0
        %v1412 = vadd.f32 0.0, %v1411
        %v1413 = vpop.f32.mrb[0].mxu0
        %1414 = vmatprep.mubr.f32.mxu0 %v1056
        %1415 = vmatmul.mubr.f32.gmra.mrb[0].mxu0 %v1054
        %v1416 = vpop.f32.mrb[0].mxu0
        %v1417 = vadd.f32 0.0, %v1416
        %v1418 = vpop.f32.mrb[0].mxu0
        %1419 = vmatprep.mubr.f32.mxu0 %v1060
        %1420 = vmatmul.mubr.f32.gmra.mrb[0].mxu0 %v1058
        %v1421 = vpop.f32.mrb[0].mxu0
        %v1422 = vadd.f32 0.0, %v1421
        %v1423 = vpop.f32.mrb[0].mxu0
        %1424 = vmatprep.mubr.f32.mxu0 %v1064
        %1425 = vmatmul.mubr.f32.gmra.mrb[0].mxu0 %v1062
        %v1426 = vpop.f32.mrb[0].mxu0
        %v1427 = vadd.f32 0.0, %v1426
        %v1428 = vpop.f32.mrb[0].mxu0
        %1429 = vmatprep.mubr.f32.mxu0 %v1068
        %1430 = vmatmul.mubr.f32.gmra.mrb[0].mxu0 %v1066
        %v1431 = vpop.f32.mrb[0].mxu0
        %v1432 = vadd.f32 0.0, %v1431
        %v1433 = vpop.f32.mrb[0].mxu0
        %1434 = vmatprep.mubr.f32.mxu0 %v1072
        %1435 = vmatmul.mubr.f32.gmra.mrb[0].mxu0 %v1070
        %v1436 = vpop.f32.mrb[0].mxu0
        %v1437 = vadd.f32 0.0, %v1436
        %v1438 = vpop.f32.mrb[0].mxu0
        %1439 = vmatprep.mubr.f32.mxu0 %v1076
        %1440 = vmatmul.mubr.f32.gmra.mrb[0].mxu0 %v1074
        %v1441 = vpop.f32.mrb[0].mxu0
        %v1442 = vadd.f32 0.0, %v1441
        %v1443 = vpop.f32.mrb[0].mxu0
        %1444 = vmatprep.mubr.f32.mxu0 %v1080
        %1445 = vmatmul.mubr.f32.gmra.mrb[0].mxu0 %v1078
        %v1446 = vpop.f32.mrb[0].mxu0
        %v1447 = vadd.f32 0.0, %v1446
        %v1448 = vpop.f32.mrb[0].mxu0
        %1449 = vmatprep.mubr.f32.mxu0 %v1084
        %1450 = vmatmul.mubr.f32.gmra.mrb[0].mxu0 %v1082
        %v1451 = vpop.f32.mrb[0].mxu0
        %v1452 = vadd.f32 0.0, %v1451
        %v1453 = vpop.f32.mrb[0].mxu0
        %1454 = vdwg.mxu0
        %v1455 = vadd.f32 %v1294, %v1377
        %v1456 = vadd.f32 %v1295, %v1382
        %v1457 = vadd.f32 %v1296, %v1387
        %v1458 = vadd.f32 %v1297, %v1392
        %v1459 = vadd.f32 %v1298, %v1397
        %v1460 = vadd.f32 %v1299, %v1402
        %v1461 = vadd.f32 %v1300, %v1407
        %v1462 = vadd.f32 %v1301, %v1412
        %v1463 = vadd.f32 %v1302, %v1417
        %v1464 = vadd.f32 %v1303, %v1422
        %v1465 = vadd.f32 %v1304, %v1427
        %v1466 = vadd.f32 %v1305, %v1432
        %v1467 = vadd.f32 %v1306, %v1437
        %v1468 = vadd.f32 %v1307, %v1442
        %v1469 = vadd.f32 %v1308, %v1447
        %v1470 = vadd.f32 %v1309, %v1452
        %1471 = vst [vmem:[#allocation4] sm:$0xff] %v1455
        %1472 = vst [vmem:[#allocation4 + $0x8] sm:$0xff] %v1456
        %1473 = vst [vmem:[#allocation4 + $0x10] sm:$0xff] %v1457
        %1474 = vst [vmem:[#allocation4 + $0x18] sm:$0xff] %v1458
        %1475 = vst [vmem:[#allocation4 + $0x20] sm:$0xff] %v1459
        %1476 = vst [vmem:[#allocation4 + $0x28] sm:$0xff] %v1460
        %1477 = vst [vmem:[#allocation4 + $0x30] sm:$0xff] %v1461
        %1478 = vst [vmem:[#allocation4 + $0x38] sm:$0xff] %v1462
        %1479 = vst [vmem:[#allocation4 + $0x40] sm:$0xff] %v1463
        %1480 = vst [vmem:[#allocation4 + $0x48] sm:$0xff] %v1464
        %1481 = vst [vmem:[#allocation4 + $0x50] sm:$0xff] %v1465
        %1482 = vst [vmem:[#allocation4 + $0x58] sm:$0xff] %v1466
        %1483 = vst [vmem:[#allocation4 + $0x60] sm:$0xff] %v1467
        %1484 = vst [vmem:[#allocation4 + $0x68] sm:$0xff] %v1468
        %1485 = vst [vmem:[#allocation4 + $0x70] sm:$0xff] %v1469
        %1486 = vst [vmem:[#allocation4 + $0x78] sm:$0xff] %v1470
        %1487 = vst.msk [vmem:[#allocation2] sm:$0xff] %vm1181, %v845
        %1488 = vst.msk [vmem:[#allocation2 + $0x8] sm:$0xff] %vm1181, %v846
        %1489 = vst.msk [vmem:[#allocation2 + $0x10] sm:$0xff] %vm1181, %v847
        %1490 = vst.msk [vmem:[#allocation2 + $0x18] sm:$0xff] %vm1181, %v848
        %1491 = vst.msk [vmem:[#allocation2 + $0x20] sm:$0xff] %vm1181, %v849
        %1492 = vst.msk [vmem:[#allocation2 + $0x28] sm:$0xff] %vm1181, %v850
        %1493 = vst.msk [vmem:[#allocation2 + $0x30] sm:$0xff] %vm1181, %v851
        %1494 = vst.msk [vmem:[#allocation2 + $0x38] sm:$0xff] %vm1181, %v852
        %1495 = vst.msk [vmem:[#allocation2 + $0x40] sm:$0xff] %vm1181, %v853
        %1496 = vst.msk [vmem:[#allocation2 + $0x48] sm:$0xff] %vm1181, %v854
        %1497 = vst.msk [vmem:[#allocation2 + $0x50] sm:$0xff] %vm1181, %v855
        %1498 = vst.msk [vmem:[#allocation2 + $0x58] sm:$0xff] %vm1181, %v856
        %1499 = vst.msk [vmem:[#allocation2 + $0x60] sm:$0xff] %vm1181, %v857
        %1500 = vst.msk [vmem:[#allocation2 + $0x68] sm:$0xff] %vm1181, %v858
        %1501 = vst.msk [vmem:[#allocation2 + $0x70] sm:$0xff] %vm1181, %v859
        %1502 = vst.msk [vmem:[#allocation2 + $0x78] sm:$0xff] %vm1181, %v860
        // Predicated region
        $region41: #{attention_module_forward.3} parent=35 // pred_check
          %p1503 = pneg %p342
        $region42: #{attention_module_forward.3} parent=35 // pred_check_branch
          %1505 = sbr.rel (%p1503) target = $region44
        $region43: #{attention_module_forward.3} parent=35 // pred_region
          %v1506 = vld [vmem:[#allocation3] sm:$0xff]
          %v1507 = vld [vmem:[#allocation3 + $0x8] sm:$0xff]
          %v1508 = vld [vmem:[#allocation3 + $0x10] sm:$0xff]
          %v1509 = vld [vmem:[#allocation3 + $0x18] sm:$0xff]
          %v1510 = vld [vmem:[#allocation3 + $0x20] sm:$0xff]
          %v1511 = vld [vmem:[#allocation3 + $0x28] sm:$0xff]
          %v1512 = vld [vmem:[#allocation3 + $0x30] sm:$0xff]
          %v1513 = vld [vmem:[#allocation3 + $0x38] sm:$0xff]
          %v1514 = vld [vmem:[#allocation3 + $0x40] sm:$0xff]
          %v1515 = vld [vmem:[#allocation3 + $0x48] sm:$0xff]
          %v1516 = vld [vmem:[#allocation3 + $0x50] sm:$0xff]
          %v1517 = vld [vmem:[#allocation3 + $0x58] sm:$0xff]
          %v1518 = vld [vmem:[#allocation3 + $0x60] sm:$0xff]
          %v1519 = vld [vmem:[#allocation3 + $0x68] sm:$0xff]
          %v1520 = vld [vmem:[#allocation3 + $0x70] sm:$0xff]
          %v1521 = vld [vmem:[#allocation3 + $0x78] sm:$0xff]
          %v1522 = vrcp.pop %v1506
          %v1523 = vrcp.pop %v1507
          %v1524 = vrcp.pop %v1508
          %v1525 = vrcp.pop %v1509
          %v1526 = vrcp.pop %v1510
          %v1527 = vrcp.pop %v1511
          %v1528 = vrcp.pop %v1512
          %v1529 = vrcp.pop %v1513
          %v1530 = vrcp.pop %v1514
          %v1531 = vrcp.pop %v1515
          %v1532 = vrcp.pop %v1516
          %v1533 = vrcp.pop %v1517
          %v1534 = vrcp.pop %v1518
          %v1535 = vrcp.pop %v1519
          %v1536 = vrcp.pop %v1520
          %v1537 = vrcp.pop %v1521
          %v1538 = vld [vmem:[#allocation4] sm:$0xff]
          %v1539 = vld [vmem:[#allocation4 + $0x8] sm:$0xff]
          %v1540 = vld [vmem:[#allocation4 + $0x10] sm:$0xff]
          %v1541 = vld [vmem:[#allocation4 + $0x18] sm:$0xff]
          %v1542 = vld [vmem:[#allocation4 + $0x20] sm:$0xff]
          %v1543 = vld [vmem:[#allocation4 + $0x28] sm:$0xff]
          %v1544 = vld [vmem:[#allocation4 + $0x30] sm:$0xff]
          %v1545 = vld [vmem:[#allocation4 + $0x38] sm:$0xff]
          %v1546 = vld [vmem:[#allocation4 + $0x40] sm:$0xff]
          %v1547 = vld [vmem:[#allocation4 + $0x48] sm:$0xff]
          %v1548 = vld [vmem:[#allocation4 + $0x50] sm:$0xff]
          %v1549 = vld [vmem:[#allocation4 + $0x58] sm:$0xff]
          %v1550 = vld [vmem:[#allocation4 + $0x60] sm:$0xff]
          %v1551 = vld [vmem:[#allocation4 + $0x68] sm:$0xff]
          %v1552 = vld [vmem:[#allocation4 + $0x70] sm:$0xff]
          %v1553 = vld [vmem:[#allocation4 + $0x78] sm:$0xff]
          %1555 = vset.pattern.permute.xlu0 0
          %1556 = vperm.xlu0 %1555, %v1522
          %v1557 = vpop.permute.xlu0 %1556
          %1560 = vset.pattern.permute.xlu0 0
          %1561 = vperm.xlu0 %1560, %v1523
          %v1562 = vpop.permute.xlu0 %1561
          %1565 = vset.pattern.permute.xlu0 0
          %1566 = vperm.xlu0 %1565, %v1524
          %v1567 = vpop.permute.xlu0 %1566
          %1570 = vset.pattern.permute.xlu0 0
          %1571 = vperm.xlu0 %1570, %v1525
          %v1572 = vpop.permute.xlu0 %1571
          %1575 = vset.pattern.permute.xlu0 0
          %1576 = vperm.xlu0 %1575, %v1526
          %v1577 = vpop.permute.xlu0 %1576
          %1580 = vset.pattern.permute.xlu0 0
          %1581 = vperm.xlu0 %1580, %v1527
          %v1582 = vpop.permute.xlu0 %1581
          %1585 = vset.pattern.permute.xlu0 0
          %1586 = vperm.xlu0 %1585, %v1528
          %v1587 = vpop.permute.xlu0 %1586
          %1590 = vset.pattern.permute.xlu0 0
          %1591 = vperm.xlu0 %1590, %v1529
          %v1592 = vpop.permute.xlu0 %1591
          %1595 = vset.pattern.permute.xlu0 0
          %1596 = vperm.xlu0 %1595, %v1530
          %v1597 = vpop.permute.xlu0 %1596
          %1600 = vset.pattern.permute.xlu0 0
          %1601 = vperm.xlu0 %1600, %v1531
          %v1602 = vpop.permute.xlu0 %1601
          %1605 = vset.pattern.permute.xlu0 0
          %1606 = vperm.xlu0 %1605, %v1532
          %v1607 = vpop.permute.xlu0 %1606
          %1610 = vset.pattern.permute.xlu0 0
          %1611 = vperm.xlu0 %1610, %v1533
          %v1612 = vpop.permute.xlu0 %1611
          %1615 = vset.pattern.permute.xlu0 0
          %1616 = vperm.xlu0 %1615, %v1534
          %v1617 = vpop.permute.xlu0 %1616
          %1620 = vset.pattern.permute.xlu0 0
          %1621 = vperm.xlu0 %1620, %v1535
          %v1622 = vpop.permute.xlu0 %1621
          %1625 = vset.pattern.permute.xlu0 0
          %1626 = vperm.xlu0 %1625, %v1536
          %v1627 = vpop.permute.xlu0 %1626
          %1630 = vset.pattern.permute.xlu0 0
          %1631 = vperm.xlu0 %1630, %v1537
          %v1632 = vpop.permute.xlu0 %1631
          %v1634 = vmul.f32 %v1538, %v1557
          %v1635 = vmul.f32 %v1539, %v1562
          %v1636 = vmul.f32 %v1540, %v1567
          %v1637 = vmul.f32 %v1541, %v1572
          %v1638 = vmul.f32 %v1542, %v1577
          %v1639 = vmul.f32 %v1543, %v1582
          %v1640 = vmul.f32 %v1544, %v1587
          %v1641 = vmul.f32 %v1545, %v1592
          %v1642 = vmul.f32 %v1546, %v1597
          %v1643 = vmul.f32 %v1547, %v1602
          %v1644 = vmul.f32 %v1548, %v1607
          %v1645 = vmul.f32 %v1549, %v1612
          %v1646 = vmul.f32 %v1550, %v1617
          %v1647 = vmul.f32 %v1551, %v1622
          %v1648 = vmul.f32 %v1552, %v1627
          %v1649 = vmul.f32 %v1553, %v1632
          %v1650 = vld [vmem:[%s309] sm:$0xff]
          %v1651 = vld [vmem:[%s309 + $0x8] sm:$0xff]
          %v1652 = vld [vmem:[%s309 + $0x10] sm:$0xff]
          %v1653 = vld [vmem:[%s309 + $0x18] sm:$0xff]
          %v1654 = vld [vmem:[%s309 + $0x20] sm:$0xff]
          %v1655 = vld [vmem:[%s309 + $0x28] sm:$0xff]
          %v1656 = vld [vmem:[%s309 + $0x30] sm:$0xff]
          %v1657 = vld [vmem:[%s309 + $0x38] sm:$0xff]
          %v1658 = vld [vmem:[%s309 + $0x40] sm:$0xff]
          %v1659 = vld [vmem:[%s309 + $0x48] sm:$0xff]
          %v1660 = vld [vmem:[%s309 + $0x50] sm:$0xff]
          %v1661 = vld [vmem:[%s309 + $0x58] sm:$0xff]
          %v1662 = vld [vmem:[%s309 + $0x60] sm:$0xff]
          %v1663 = vld [vmem:[%s309 + $0x68] sm:$0xff]
          %v1664 = vld [vmem:[%s309 + $0x70] sm:$0xff]
          %v1665 = vld [vmem:[%s309 + $0x78] sm:$0xff]
          %v1666 = vadd.f32 %v1634, %v1650
          %v1667 = vadd.f32 %v1635, %v1651
          %v1668 = vadd.f32 %v1636, %v1652
          %v1669 = vadd.f32 %v1637, %v1653
          %v1670 = vadd.f32 %v1638, %v1654
          %v1671 = vadd.f32 %v1639, %v1655
          %v1672 = vadd.f32 %v1640, %v1656
          %v1673 = vadd.f32 %v1641, %v1657
          %v1674 = vadd.f32 %v1642, %v1658
          %v1675 = vadd.f32 %v1643, %v1659
          %v1676 = vadd.f32 %v1644, %v1660
          %v1677 = vadd.f32 %v1645, %v1661
          %v1678 = vadd.f32 %v1646, %v1662
          %v1679 = vadd.f32 %v1647, %v1663
          %v1680 = vadd.f32 %v1648, %v1664
          %v1681 = vadd.f32 %v1649, %v1665
          %1682 = vst [vmem:[%s300] sm:$0xff] %v1666
          %1683 = vst [vmem:[%s300 + $0x8] sm:$0xff] %v1667
          %1684 = vst [vmem:[%s300 + $0x10] sm:$0xff] %v1668
          %1685 = vst [vmem:[%s300 + $0x18] sm:$0xff] %v1669
          %1686 = vst [vmem:[%s300 + $0x20] sm:$0xff] %v1670
          %1687 = vst [vmem:[%s300 + $0x28] sm:$0xff] %v1671
          %1688 = vst [vmem:[%s300 + $0x30] sm:$0xff] %v1672
          %1689 = vst [vmem:[%s300 + $0x38] sm:$0xff] %v1673
          %1690 = vst [vmem:[%s300 + $0x40] sm:$0xff] %v1674
          %1691 = vst [vmem:[%s300 + $0x48] sm:$0xff] %v1675
          %1692 = vst [vmem:[%s300 + $0x50] sm:$0xff] %v1676
          %1693 = vst [vmem:[%s300 + $0x58] sm:$0xff] %v1677
          %1694 = vst [vmem:[%s300 + $0x60] sm:$0xff] %v1678
          %1695 = vst [vmem:[%s300 + $0x68] sm:$0xff] %v1679
          %1696 = vst [vmem:[%s300 + $0x70] sm:$0xff] %v1680
          %1697 = vst [vmem:[%s300 + $0x78] sm:$0xff] %v1681
        $region44: #{attention_module_forward.3} parent=35 // pred_fallthru
          _
        %s1698 = sand.u32 %s159, 1
        %s1699 = scalar_lea.sflag [#allocation6], %s1698
        %s1700 = sand.u32 %s159, 1
        %s1701 = smul.addr %s1700, 128
        %s1702 = scalar_lea.vmem [#allocation5], %s1701
        // Predicated region
        $region45: #{attention_module_forward.3} parent=35 // pred_check
          %p1703 = pneg %p169
        $region46: #{attention_module_forward.3} parent=35 // pred_check_branch
          %1705 = sbr.rel (%p1703) target = $region48
        $region47: #{attention_module_forward.3} parent=35 // pred_region
          %s1706 = smul.u32 16, %s24
          %s1708 = ssub.s32 2048, 2048
          %1709 = vsyncadd %s1699, %s1708
          %s1710 = smul.addr %s23, 32
          %s1711 = sadd.s32 %s1706, %s1710
          %s1712 = smul.addr %s1711, 128
          %s1713 = scalar_lea.hbm %s4, %s1712
          %s1714 = sshll.u32 %s1702, 4
          %s1715 = int_to_ptr.vmem [resolvable:$true] %s1714
          %1720 = dma.vmem_to_hbm [thread:$0]  %s1715, 2048, %s1713, %s1699, 128, 128, 8
        $region48: #{attention_module_forward.3} parent=35 // pred_fallthru
          _
      $region36: #{attention_module_forward.3} parent=5 // pred_fallthru
        _
      %p1721 = scmp.le.s32.totalorder 2, %s13
      // Predicated region
      $region49: #{attention_module_forward.3} parent=5 // pred_check
        %p1722 = pneg %p1721
      $region50: #{attention_module_forward.3} parent=5 // pred_check_branch
        %1724 = sbr.rel (%p1722) target = $region52
      $region51: #{attention_module_forward.3} parent=5 // pred_region
        %s1725 = ssub.s32 %s13, 2
        // Predicated region
        $region53: #{attention_module_forward.3} parent=51 // pred_check
          %p1726 = pneg %p175
        $region54: #{attention_module_forward.3} parent=51 // pred_check_branch
          %1728 = sbr.rel (%p1726) target = $region56
        $region55: #{attention_module_forward.3} parent=51 // pred_region
          %s1729 = sand.u32 %s160, 1
          %s1730 = scalar_lea.sflag [#allocation6], %s1729
          %s1731 = sand.u32 %s160, 1
          %s1732 = smul.addr %s1731, 128
          %s1733 = scalar_lea.vmem [#allocation5], %s1732
          %1734 = dma.done %s1730, 2048
        $region56: #{attention_module_forward.3} parent=51 // pred_fallthru
          _
      $region52: #{attention_module_forward.3} parent=5 // pred_fallthru
        _
    $region6: #{attention_module_forward.3} parent=1 // loop_footer
      %s17 = sadd.s32 1, %s13
    $region7: #{attention_module_forward.3} parent=1 // loop_footer_branch
      %12 = sbr.rel target = $region3
    $region8: #{attention_module_forward.3} parent=1 // loop_exit
      _
    %1735 = vsyncpa [#allocation6], 1
    %s1736 = scalar_lea.sflag [#allocation6], 1
    %1737 = vsyncpa %s1736, 1

</llo_original>
